<compile_context>
chip_gen: v5e
topology: v5e:2x2
jax: 0.10.0
libtpu: 0.0.40
codegen_flags: <defaults>
</compile_context>

<pallas_src>
import numpy as np
import jax
import jax.numpy as jnp
from jax.experimental import pallas as pl
from jax.experimental.pallas import tpu as pltpu


# --------------------------- kernel construction ----------------------------

def _make_kernel(cin, gw, cout, H, W, r):
    HW = H * W
    Hp, Wp = H // r, W // r
    P = Hp * Wp
    PAD = W + 1                                   # flat left/right zero pad
    offsets = [dy * W + dx for dy in (-1, 0, 1) for dx in (-1, 0, 1)]

    def kernel(x_ref, masks_ref, msT_ref, uT_ref,
               w1a, b1a, w1b, b1b, wk1, bk1, wk2, bk2, wk3, bk3, wk4, bk4,
               w3a, w3b, b3, o_ref, pad_ref, col_ref):
        # Only the pad borders must be zero; interiors are fully rewritten per
        # conv call.  Cheap (2 x (gw, W+1) stores), safe under "parallel".
        pad_ref[:, 0:PAD] = jnp.zeros((gw, PAD), jnp.float32)
        pad_ref[:, PAD + HW:] = jnp.zeros((gw, PAD), jnp.float32)

        x = x_ref[0].astype(jnp.float32)          # (cin, HW) lane-dense slab

        def relu(z):
            return jnp.maximum(z, 0.0)

        def conv1x1(inp, w_ref, b_ref):
            # (cout, cin) @ (cin, HW) on the MXU
            return jnp.dot(w_ref[...], inp,
                           preferred_element_type=jnp.float32) + b_ref[...]

        def conv3x3(inp, w9_ref, b_ref):
            # inp: (gw, HW).  Build im2col (9*gw, HW) then one K=9*gw matmul.
            pad_ref[:, PAD:PAD + HW] = inp
            for t, off in enumerate(offsets):
                tap = pad_ref[:, PAD + off:PAD + off + HW] * masks_ref[t]
                col_ref[t * gw:(t + 1) * gw, :] = tap
            return jnp.dot(w9_ref[...], col_ref[...],
                           preferred_element_type=jnp.float32) + b_ref[...]

        # ---------------- branch a: conv1_a+bn -> relu -> k1 -> relu --------
        a = relu(conv1x1(x, w1a, b1a))
        a = relu(conv3x3(a, wk1, bk1))

        # ---------------- branch b: conv1_b+bn -> relu -> SCConv -> relu ----
        bpl = relu(conv1x1(x, w1b, b1b))          # SCConv identity

        # k2: AvgPool(r) + tap shift folded into msT[t] (HW, P); conv weights
        # wk2[t] (gw, gw); then nearest upsample via uT (P, HW).
        acc = jnp.zeros((gw, P), jnp.float32) + bk2[...]
        for t in range(9):
            tap_s = jnp.dot(bpl, msT_ref[t],
                            preferred_element_type=jnp.float32)     # (gw, P)
            acc = acc + jnp.dot(wk2[t], tap_s,
                                preferred_element_type=jnp.float32)
        up = jnp.dot(acc, uT_ref[...], preferred_element_type=jnp.float32)

        z = bpl + up + 1e-8
        gate = pl.reciprocal(1.0 + jnp.exp(-z), approx=True)        # sigmoid
        k3 = conv3x3(bpl, wk3, bk3)
        bout = relu(conv3x3(k3 * gate, wk4, bk4))

        # ---------------- conv3 on cat([a, b]) + bn3 + residual + relu ------
        out = (jnp.dot(w3a[...], a, preferred_element_type=jnp.float32)
               + jnp.dot(w3b[...], bout, preferred_element_type=jnp.float32)
               + b3[...])
        out = relu(out + x)                       # residual (cout == cin)
        o_ref[0] = out.astype(o_ref.dtype)

    return kernel


# ------------------------- host-side constant tables ------------------------

def _build_constants(H, W, r):
    HW = H * W
    Hp, Wp = H // r, W // r
    P = Hp * Wp
    taps = [(dy, dx) for dy in (-1, 0, 1) for dx in (-1, 0, 1)]

    # zero-padding masks for the 9 full-resolution taps
    masks = np.zeros((9, 1, HW), np.float32)
    for t, (dy, dx) in enumerate(taps):
        for h in range(H):
            for w in range(W):
                if 0 <= h + dy < H and 0 <= w + dx < W:
                    masks[t, 0, h * W + w] = 1.0

    # AvgPool(r) as a (P, HW) matrix
    Ppool = np.zeros((P, HW), np.float32)
    for h in range(H):
        for w in range(W):
            Ppool[(h // r) * Wp + (w // r), h * W + w] = 1.0 / (r * r)

    # pooled-resolution shift-with-zero-border matrices (P, P)
    S = np.zeros((9, P, P), np.float32)
    for t, (dy, dx) in enumerate(taps):
        for ph in range(Hp):
            for pw in range(Wp):
                sh, sw = ph + dy, pw + dx
                if 0 <= sh < Hp and 0 <= sw < Wp:
                    S[t, ph * Wp + pw, sh * Wp + sw] = 1.0

    # MsT[t] = (S[t] @ Ppool)^T : (HW, P);  bpl @ MsT[t] == shift_t(avgpool(bpl))
    MsT = np.einsum('tik,kj->tji', S, Ppool).astype(np.float32)

    # nearest-neighbor upsample (P, HW):  up = k2 @ U_T
    U_T = np.zeros((P, HW), np.float32)
    for h in range(H):
        for w in range(W):
            U_T[(h // r) * Wp + (w // r), h * W + w] = 1.0

    return [jnp.asarray(masks), jnp.asarray(MsT), jnp.asarray(U_T)]


def _prepare_params(p, gw, cout):
    def w9(w):      # (O, I, 3, 3) -> (O, 9*I), column index = tap*I + c
        O, I = w.shape[0], w.shape[1]
        return jnp.transpose(w, (0, 2, 3, 1)).reshape(O, 9 * I)

    def wtaps(w):   # (O, I, 3, 3) -> (9, O, I)
        O, I = w.shape[0], w.shape[1]
        return jnp.transpose(w, (2, 3, 0, 1)).reshape(9, O, I)

    def col(b):
        return b.reshape(-1, 1)

    w3 = p["w3"].reshape(cout, 2 * gw)
    return [
        p["w1a"].reshape(gw, -1), col(p["b1a"]),
        p["w1b"].reshape(gw, -1), col(p["b1b"]),
        w9(p["wk1"]), col(p["bk1"]),
        wtaps(p["wk2"]), col(p["bk2"]),
        w9(p["wk3"]), col(p["bk3"]),
        w9(p["wk4"]), col(p["bk4"]),
        w3[:, :gw], w3[:, gw:], col(p["b3"]),
    ]


def _const_spec(arr):
    zeros = (0,) * arr.ndim
    return pl.BlockSpec(arr.shape, lambda b, _z=zeros: _z)


# --------------------------------- wrapper -----------------------------------

def scbottleneck_forward(x, params, *, gw, cout, r):
    N, cin, H, W = x.shape
    assert cin == cout, "residual add requires input_channels == output_channels"
    assert H % r == 0 and W % r == 0
    HW = H * W

    consts = _build_constants(H, W, r)          # masks, MsT, U_T
    kparams = _prepare_params(params, gw, cout)
    kernel = _make_kernel(cin, gw, cout, H, W, r)

    x_flat = x.reshape(N, cin, HW)
    operands = [x_flat] + consts + kparams

    in_specs = [pl.BlockSpec((1, cin, HW), lambda b: (b, 0, 0))]
    in_specs += [_const_spec(a) for a in consts + kparams]
    out_specs = pl.BlockSpec((1, cout, HW), lambda b: (b, 0, 0))

    out_flat = pl.pallas_call(
        kernel,
        grid=(N,),
        in_specs=in_specs,
        out_specs=out_specs,
        out_shape=jax.ShapeDtypeStruct((N, cout, HW), x.dtype),
        scratch_shapes=[
            pltpu.VMEM((gw, HW + 2 * (W + 1)), jnp.float32),   # flat pad buffer
            pltpu.VMEM((9 * gw, HW), jnp.float32),             # im2col buffer
        ],
        compiler_params=pltpu.CompilerParams(
            dimension_semantics=("parallel",)),
    )(*operands)
    return out_flat.reshape(N, cout, H, W)


# ------------------------- parameter setup (glue) ---------------------------

def _fold_conv_bn(w, b, gamma, beta, mean, var, eps=1e-5):
    scale = gamma / jnp.sqrt(var + eps)
    wf = w * scale[:, None, None, None]
    bf = (b - mean) * scale + beta
    return wf, bf


def init_params(key, cin, cout, gw):
    keys = iter(jax.random.split(key, 64))

    def conv_w(co, ci, k):
        fan = ci * k * k
        return jax.random.normal(next(keys), (co, ci, k, k), jnp.float32) / np.sqrt(fan)

    def conv_b(c):
        return 0.1 * jax.random.normal(next(keys), (c,), jnp.float32)

    def bn(c):
        gamma = 1.0 + 0.1 * jax.random.normal(next(keys), (c,), jnp.float32)
        beta = 0.1 * jax.random.normal(next(keys), (c,), jnp.float32)
        mean = 0.1 * jax.random.normal(next(keys), (c,), jnp.float32)
        var = 1.0 + 0.5 * jax.random.uniform(next(keys), (c,), jnp.float32)
        return gamma, beta, mean, var

    zgw = jnp.zeros((gw,), jnp.float32)
    p = {}
    p["w1a"], p["b1a"] = _fold_conv_bn(conv_w(gw, cin, 1), zgw, *bn(gw))
    p["w1b"], p["b1b"] = _fold_conv_bn(conv_w(gw, cin, 1), zgw, *bn(gw))
    p["wk1"], p["bk1"] = _fold_conv_bn(conv_w(gw, gw, 3), conv_b(gw), *bn(gw))
    p["wk2"], p["bk2"] = _fold_conv_bn(conv_w(gw, gw, 3), conv_b(gw), *bn(gw))
    p["wk3"], p["bk3"] = _fold_conv_bn(conv_w(gw, gw, 3), conv_b(gw), *bn(gw))
    p["wk4"], p["bk4"] = _fold_conv_bn(conv_w(gw, gw, 3), conv_b(gw), *bn(gw))
    p["w3"], p["b3"] = _fold_conv_bn(conv_w(cout, 2 * gw, 1),
                                     jnp.zeros((cout,), jnp.float32), *bn(cout))
    return p


# ------------------------- pure-JAX reference -------------------------------

def ref_forward(x, p, r):
    dn = ("NCHW", "OIHW", "NCHW")
    hp = jax.lax.Precision.HIGHEST

    def conv(x_, w, b, pad):
        y = jax.lax.conv_general_dilated(x_, w, (1, 1), pad,
                                         dimension_numbers=dn, precision=hp)
        return y + b[None, :, None, None]

    relu = jax.nn.relu
    a = relu(conv(x, p["w1a"], p["b1a"], "VALID"))
    a = relu(conv(a, p["wk1"], p["bk1"], ((1, 1), (1, 1))))

    bb = relu(conv(x, p["w1b"], p["b1b"], "VALID"))
    pooled = jax.lax.reduce_window(bb, 0.0, jax.lax.add,
                                   (1, 1, r, r), (1, 1, r, r), "VALID") / (r * r)
    k2 = conv(pooled, p["wk2"], p["bk2"], ((1, 1), (1, 1)))
    up = jnp.repeat(jnp.repeat(k2, r, axis=2), r, axis=3)
    gate = jax.nn.sigmoid(bb + up + 1e-8)
    k3 = conv(bb, p["wk3"], p["bk3"], ((1, 1), (1, 1)))
    out_b = relu(conv(k3 * gate, p["wk4"], p["bk4"], ((1, 1), (1, 1))))

    cat = jnp.concatenate([a, out_b], axis=1)
    out = conv(cat, p["w3"], p["b3"], "VALID") + x
    return relu(out)


if __name__ == "__main__":
    key = jax.random.PRNGKey(0)
    kp, kx = jax.random.split(key)

    N, C, H, W = 2, 4, 16, 16
    gw = C // 2
    r = 4

    params = init_params(kp, C, C, gw)
    x = jax.random.normal(kx, (N, C, H, W), jnp.float32)

    out = scbottleneck_forward(x, params, gw=gw, cout=C, r=r)
    out = jax.block_until_ready(out)

    ref = ref_forward(x, params, r)
    err = float(jnp.max(jnp.abs(out - ref)))
    assert np.isfinite(err) and err < 3e-2, f"mismatch vs reference: max abs err = {err}"
    print("KERNEL_OK")
</pallas_src>

<mosaic_0001>
module attributes {stable_mosaic.version = 11 : i64} {
  func.func @kernel(%arg0: i32, %arg1: memref<1x4x256xf32, #tpu.memory_space<vmem>>, %arg2: memref<9x1x256xf32, #tpu.memory_space<vmem>>, %arg3: memref<9x256x16xf32, #tpu.memory_space<vmem>>, %arg4: memref<16x256xf32, #tpu.memory_space<vmem>>, %arg5: memref<2x4xf32, #tpu.memory_space<vmem>>, %arg6: memref<2x1xf32, #tpu.memory_space<vmem>>, %arg7: memref<2x4xf32, #tpu.memory_space<vmem>>, %arg8: memref<2x1xf32, #tpu.memory_space<vmem>>, %arg9: memref<2x18xf32, #tpu.memory_space<vmem>>, %arg10: memref<2x1xf32, #tpu.memory_space<vmem>>, %arg11: memref<9x2x2xf32, #tpu.memory_space<vmem>>, %arg12: memref<2x1xf32, #tpu.memory_space<vmem>>, %arg13: memref<2x18xf32, #tpu.memory_space<vmem>>, %arg14: memref<2x1xf32, #tpu.memory_space<vmem>>, %arg15: memref<2x18xf32, #tpu.memory_space<vmem>>, %arg16: memref<2x1xf32, #tpu.memory_space<vmem>>, %arg17: memref<4x2xf32, #tpu.memory_space<vmem>>, %arg18: memref<4x2xf32, #tpu.memory_space<vmem>>, %arg19: memref<4x1xf32, #tpu.memory_space<vmem>>, %arg20: memref<1x4x256xf32, #tpu.memory_space<vmem>>, %arg21: memref<2x290xf32, #tpu.memory_space<vmem>>, %arg22: memref<18x256xf32, #tpu.memory_space<vmem>>) attributes {dimension_semantics = [#tpu.dimension_semantics<parallel>], iteration_bounds = array<i64: 2>, scalar_prefetch = 0 : i64, scratch_operands = 2 : i64, tpu.core_type = #tpu.core_type<tc>, window_params = [{transform_indices = @transform_0, window_bounds = array<i64: 1, 4, 256>}, {pipeline_mode = #tpu.pipeline_mode<synchronous>, transform_indices = @transform_1, window_bounds = array<i64: 9, 1, 256>}, {pipeline_mode = #tpu.pipeline_mode<synchronous>, transform_indices = @transform_2, window_bounds = array<i64: 9, 256, 16>}, {pipeline_mode = #tpu.pipeline_mode<synchronous>, transform_indices = @transform_3, window_bounds = array<i64: 16, 256>}, {pipeline_mode = #tpu.pipeline_mode<synchronous>, transform_indices = @transform_4, window_bounds = array<i64: 2, 4>}, {pipeline_mode = #tpu.pipeline_mode<synchronous>, transform_indices = @transform_5, window_bounds = array<i64: 2, 1>}, {pipeline_mode = #tpu.pipeline_mode<synchronous>, transform_indices = @transform_6, window_bounds = array<i64: 2, 4>}, {pipeline_mode = #tpu.pipeline_mode<synchronous>, transform_indices = @transform_7, window_bounds = array<i64: 2, 1>}, {pipeline_mode = #tpu.pipeline_mode<synchronous>, transform_indices = @transform_8, window_bounds = array<i64: 2, 18>}, {pipeline_mode = #tpu.pipeline_mode<synchronous>, transform_indices = @transform_9, window_bounds = array<i64: 2, 1>}, {pipeline_mode = #tpu.pipeline_mode<synchronous>, transform_indices = @transform_10, window_bounds = array<i64: 9, 2, 2>}, {pipeline_mode = #tpu.pipeline_mode<synchronous>, transform_indices = @transform_11, window_bounds = array<i64: 2, 1>}, {pipeline_mode = #tpu.pipeline_mode<synchronous>, transform_indices = @transform_12, window_bounds = array<i64: 2, 18>}, {pipeline_mode = #tpu.pipeline_mode<synchronous>, transform_indices = @transform_13, window_bounds = array<i64: 2, 1>}, {pipeline_mode = #tpu.pipeline_mode<synchronous>, transform_indices = @transform_14, window_bounds = array<i64: 2, 18>}, {pipeline_mode = #tpu.pipeline_mode<synchronous>, transform_indices = @transform_15, window_bounds = array<i64: 2, 1>}, {pipeline_mode = #tpu.pipeline_mode<synchronous>, transform_indices = @transform_16, window_bounds = array<i64: 4, 2>}, {pipeline_mode = #tpu.pipeline_mode<synchronous>, transform_indices = @transform_17, window_bounds = array<i64: 4, 2>}, {pipeline_mode = #tpu.pipeline_mode<synchronous>, transform_indices = @transform_18, window_bounds = array<i64: 4, 1>}, {transform_indices = @transform_19, window_bounds = array<i64: 1, 4, 256>}]} {
    %cst = arith.constant 0.000000e+00 : f32
    %0 = vector.broadcast %cst : f32 to vector<2x17xf32>
    %c0 = arith.constant 0 : index
    %c0_0 = arith.constant 0 : index
    %1 = vector.load %arg21[%c0, %c0_0] : memref<2x290xf32, #tpu.memory_space<vmem>>, vector<2x17xf32>
    tpu.vector_store %arg21[%c0, %c0_0], %0 {strides = array<i32>} : memref<2x290xf32, #tpu.memory_space<vmem>>, vector<2x17xf32>,
    %cst_1 = arith.constant 0.000000e+00 : f32
    %2 = vector.broadcast %cst_1 : f32 to vector<2x17xf32>
    %c0_2 = arith.constant 0 : index
    %c273 = arith.constant 273 : index
    %3 = vector.load %arg21[%c0_2, %c273] : memref<2x290xf32, #tpu.memory_space<vmem>>, vector<2x17xf32>
    tpu.vector_store %arg21[%c0_2, %c273], %2 {strides = array<i32>} : memref<2x290xf32, #tpu.memory_space<vmem>>, vector<2x17xf32>,
    %c0_3 = arith.constant 0 : index
    %c0_4 = arith.constant 0 : index
    %c0_5 = arith.constant 0 : index
    %4 = vector.load %arg1[%c0_3, %c0_4, %c0_5] : memref<1x4x256xf32, #tpu.memory_space<vmem>>, vector<1x4x256xf32>
    %5 = vector.shape_cast %4 : vector<1x4x256xf32> to vector<4x256xf32>
    %c0_6 = arith.constant 0 : index
    %c0_7 = arith.constant 0 : index
    %6 = vector.load %arg5[%c0_6, %c0_7] : memref<2x4xf32, #tpu.memory_space<vmem>>, vector<2x4xf32>
    %cst_8 = arith.constant dense<0.000000e+00> : vector<2x256xf32>
    %7 = tpu.matmul %6, %5, %cst_8 {dimension_numbers = #tpu.dot_dimension_numbers<[1], [0], [0], [1], [0, 0, 1, 1], [], []>} : vector<2x4xf32>, vector<4x256xf32>, vector<2x256xf32> -> vector<2x256xf32>
    %c0_9 = arith.constant 0 : index
    %c0_10 = arith.constant 0 : index
    %8 = vector.load %arg6[%c0_9, %c0_10] : memref<2x1xf32, #tpu.memory_space<vmem>>, vector<2x1xf32>
    %9 = vector.broadcast %8 : vector<2x1xf32> to vector<2x256xf32>
    %10 = arith.addf %7, %9 : vector<2x256xf32>
    %cst_11 = arith.constant 0.000000e+00 : f32
    %11 = vector.broadcast %cst_11 : f32 to vector<2x256xf32>
    %12 = arith.maximumf %10, %11 : vector<2x256xf32>
    %c0_12 = arith.constant 0 : index
    %c17 = arith.constant 17 : index
    %13 = vector.load %arg21[%c0_12, %c17] : memref<2x290xf32, #tpu.memory_space<vmem>>, vector<2x256xf32>
    tpu.vector_store %arg21[%c0_12, %c17], %12 {strides = array<i32>} : memref<2x290xf32, #tpu.memory_space<vmem>>, vector<2x256xf32>,
    %c0_13 = arith.constant 0 : index
    %c0_14 = arith.constant 0 : index
    %14 = vector.load %arg21[%c0_13, %c0_14] : memref<2x290xf32, #tpu.memory_space<vmem>>, vector<2x256xf32>
    %c0_15 = arith.constant 0 : index
    %c0_16 = arith.constant 0 : index
    %c0_17 = arith.constant 0 : index
    %15 = vector.load %arg2[%c0_15, %c0_16, %c0_17] : memref<9x1x256xf32, #tpu.memory_space<vmem>>, vector<1x1x256xf32>
    %16 = vector.shape_cast %15 : vector<1x1x256xf32> to vector<1x256xf32>
    %17 = vector.broadcast %16 : vector<1x256xf32> to vector<2x256xf32>
    %18 = arith.mulf %14, %17 : vector<2x256xf32>
    %c0_18 = arith.constant 0 : index
    %c0_19 = arith.constant 0 : index
    %19 = vector.load %arg22[%c0_18, %c0_19] : memref<18x256xf32, #tpu.memory_space<vmem>>, vector<2x256xf32>
    tpu.vector_store %arg22[%c0_18, %c0_19], %18 {strides = array<i32>} : memref<18x256xf32, #tpu.memory_space<vmem>>, vector<2x256xf32>,
    %c0_20 = arith.constant 0 : index
    %c1 = arith.constant 1 : index
    %20 = vector.load %arg21[%c0_20, %c1] : memref<2x290xf32, #tpu.memory_space<vmem>>, vector<2x256xf32>
    %c1_21 = arith.constant 1 : index
    %c0_22 = arith.constant 0 : index
    %c0_23 = arith.constant 0 : index
    %21 = vector.load %arg2[%c1_21, %c0_22, %c0_23] : memref<9x1x256xf32, #tpu.memory_space<vmem>>, vector<1x1x256xf32>
    %22 = vector.shape_cast %21 : vector<1x1x256xf32> to vector<1x256xf32>
    %23 = vector.broadcast %22 : vector<1x256xf32> to vector<2x256xf32>
    %24 = arith.mulf %20, %23 : vector<2x256xf32>
    %c2 = arith.constant 2 : index
    %c0_24 = arith.constant 0 : index
    %25 = vector.load %arg22[%c2, %c0_24] : memref<18x256xf32, #tpu.memory_space<vmem>>, vector<2x256xf32>
    tpu.vector_store %arg22[%c2, %c0_24], %24 {strides = array<i32>} : memref<18x256xf32, #tpu.memory_space<vmem>>, vector<2x256xf32>,
    %c0_25 = arith.constant 0 : index
    %c2_26 = arith.constant 2 : index
    %26 = vector.load %arg21[%c0_25, %c2_26] : memref<2x290xf32, #tpu.memory_space<vmem>>, vector<2x256xf32>
    %c2_27 = arith.constant 2 : index
    %c0_28 = arith.constant 0 : index
    %c0_29 = arith.constant 0 : index
    %27 = vector.load %arg2[%c2_27, %c0_28, %c0_29] : memref<9x1x256xf32, #tpu.memory_space<vmem>>, vector<1x1x256xf32>
    %28 = vector.shape_cast %27 : vector<1x1x256xf32> to vector<1x256xf32>
    %29 = vector.broadcast %28 : vector<1x256xf32> to vector<2x256xf32>
    %30 = arith.mulf %26, %29 : vector<2x256xf32>
    %c4 = arith.constant 4 : index
    %c0_30 = arith.constant 0 : index
    %31 = vector.load %arg22[%c4, %c0_30] : memref<18x256xf32, #tpu.memory_space<vmem>>, vector<2x256xf32>
    tpu.vector_store %arg22[%c4, %c0_30], %30 {strides = array<i32>} : memref<18x256xf32, #tpu.memory_space<vmem>>, vector<2x256xf32>,
    %c0_31 = arith.constant 0 : index
    %c16 = arith.constant 16 : index
    %32 = vector.load %arg21[%c0_31, %c16] : memref<2x290xf32, #tpu.memory_space<vmem>>, vector<2x256xf32>
    %c3 = arith.constant 3 : index
    %c0_32 = arith.constant 0 : index
    %c0_33 = arith.constant 0 : index
    %33 = vector.load %arg2[%c3, %c0_32, %c0_33] : memref<9x1x256xf32, #tpu.memory_space<vmem>>, vector<1x1x256xf32>
    %34 = vector.shape_cast %33 : vector<1x1x256xf32> to vector<1x256xf32>
    %35 = vector.broadcast %34 : vector<1x256xf32> to vector<2x256xf32>
    %36 = arith.mulf %32, %35 : vector<2x256xf32>
    %c6 = arith.constant 6 : index
    %c0_34 = arith.constant 0 : index
    %37 = vector.load %arg22[%c6, %c0_34] : memref<18x256xf32, #tpu.memory_space<vmem>>, vector<2x256xf32>
    tpu.vector_store %arg22[%c6, %c0_34], %36 {strides = array<i32>} : memref<18x256xf32, #tpu.memory_space<vmem>>, vector<2x256xf32>,
    %c0_35 = arith.constant 0 : index
    %c17_36 = arith.constant 17 : index
    %38 = vector.load %arg21[%c0_35, %c17_36] : memref<2x290xf32, #tpu.memory_space<vmem>>, vector<2x256xf32>
    %c4_37 = arith.constant 4 : index
    %c0_38 = arith.constant 0 : index
    %c0_39 = arith.constant 0 : index
    %39 = vector.load %arg2[%c4_37, %c0_38, %c0_39] : memref<9x1x256xf32, #tpu.memory_space<vmem>>, vector<1x1x256xf32>
    %40 = vector.shape_cast %39 : vector<1x1x256xf32> to vector<1x256xf32>
    %41 = vector.broadcast %40 : vector<1x256xf32> to vector<2x256xf32>
    %42 = arith.mulf %38, %41 : vector<2x256xf32>
    %c8 = arith.constant 8 : index
    %c0_40 = arith.constant 0 : index
    %43 = vector.load %arg22[%c8, %c0_40] : memref<18x256xf32, #tpu.memory_space<vmem>>, vector<2x256xf32>
    tpu.vector_store %arg22[%c8, %c0_40], %42 {strides = array<i32>} : memref<18x256xf32, #tpu.memory_space<vmem>>, vector<2x256xf32>,
    %c0_41 = arith.constant 0 : index
    %c18 = arith.constant 18 : index
    %44 = vector.load %arg21[%c0_41, %c18] : memref<2x290xf32, #tpu.memory_space<vmem>>, vector<2x256xf32>
    %c5 = arith.constant 5 : index
    %c0_42 = arith.constant 0 : index
    %c0_43 = arith.constant 0 : index
    %45 = vector.load %arg2[%c5, %c0_42, %c0_43] : memref<9x1x256xf32, #tpu.memory_space<vmem>>, vector<1x1x256xf32>
    %46 = vector.shape_cast %45 : vector<1x1x256xf32> to vector<1x256xf32>
    %47 = vector.broadcast %46 : vector<1x256xf32> to vector<2x256xf32>
    %48 = arith.mulf %44, %47 : vector<2x256xf32>
    %c10 = arith.constant 10 : index
    %c0_44 = arith.constant 0 : index
    %49 = vector.load %arg22[%c10, %c0_44] : memref<18x256xf32, #tpu.memory_space<vmem>>, vector<2x256xf32>
    tpu.vector_store %arg22[%c10, %c0_44], %48 {strides = array<i32>} : memref<18x256xf32, #tpu.memory_space<vmem>>, vector<2x256xf32>,
    %c0_45 = arith.constant 0 : index
    %c32 = arith.constant 32 : index
    %50 = vector.load %arg21[%c0_45, %c32] : memref<2x290xf32, #tpu.memory_space<vmem>>, vector<2x256xf32>
    %c6_46 = arith.constant 6 : index
    %c0_47 = arith.constant 0 : index
    %c0_48 = arith.constant 0 : index
    %51 = vector.load %arg2[%c6_46, %c0_47, %c0_48] : memref<9x1x256xf32, #tpu.memory_space<vmem>>, vector<1x1x256xf32>
    %52 = vector.shape_cast %51 : vector<1x1x256xf32> to vector<1x256xf32>
    %53 = vector.broadcast %52 : vector<1x256xf32> to vector<2x256xf32>
    %54 = arith.mulf %50, %53 : vector<2x256xf32>
    %c12 = arith.constant 12 : index
    %c0_49 = arith.constant 0 : index
    %55 = vector.load %arg22[%c12, %c0_49] : memref<18x256xf32, #tpu.memory_space<vmem>>, vector<2x256xf32>
    tpu.vector_store %arg22[%c12, %c0_49], %54 {strides = array<i32>} : memref<18x256xf32, #tpu.memory_space<vmem>>, vector<2x256xf32>,
    %c0_50 = arith.constant 0 : index
    %c33 = arith.constant 33 : index
    %56 = vector.load %arg21[%c0_50, %c33] : memref<2x290xf32, #tpu.memory_space<vmem>>, vector<2x256xf32>
    %c7 = arith.constant 7 : index
    %c0_51 = arith.constant 0 : index
    %c0_52 = arith.constant 0 : index
    %57 = vector.load %arg2[%c7, %c0_51, %c0_52] : memref<9x1x256xf32, #tpu.memory_space<vmem>>, vector<1x1x256xf32>
    %58 = vector.shape_cast %57 : vector<1x1x256xf32> to vector<1x256xf32>
    %59 = vector.broadcast %58 : vector<1x256xf32> to vector<2x256xf32>
    %60 = arith.mulf %56, %59 : vector<2x256xf32>
    %c14 = arith.constant 14 : index
    %c0_53 = arith.constant 0 : index
    %61 = vector.load %arg22[%c14, %c0_53] : memref<18x256xf32, #tpu.memory_space<vmem>>, vector<2x256xf32>
    tpu.vector_store %arg22[%c14, %c0_53], %60 {strides = array<i32>} : memref<18x256xf32, #tpu.memory_space<vmem>>, vector<2x256xf32>,
    %c0_54 = arith.constant 0 : index
    %c34 = arith.constant 34 : index
    %62 = vector.load %arg21[%c0_54, %c34] : memref<2x290xf32, #tpu.memory_space<vmem>>, vector<2x256xf32>
    %c8_55 = arith.constant 8 : index
    %c0_56 = arith.constant 0 : index
    %c0_57 = arith.constant 0 : index
    %63 = vector.load %arg2[%c8_55, %c0_56, %c0_57] : memref<9x1x256xf32, #tpu.memory_space<vmem>>, vector<1x1x256xf32>
    %64 = vector.shape_cast %63 : vector<1x1x256xf32> to vector<1x256xf32>
    %65 = vector.broadcast %64 : vector<1x256xf32> to vector<2x256xf32>
    %66 = arith.mulf %62, %65 : vector<2x256xf32>
    %c16_58 = arith.constant 16 : index
    %c0_59 = arith.constant 0 : index
    %67 = vector.load %arg22[%c16_58, %c0_59] : memref<18x256xf32, #tpu.memory_space<vmem>>, vector<2x256xf32>
    tpu.vector_store %arg22[%c16_58, %c0_59], %66 {strides = array<i32>} : memref<18x256xf32, #tpu.memory_space<vmem>>, vector<2x256xf32>,
    %c0_60 = arith.constant 0 : index
    %c0_61 = arith.constant 0 : index
    %68 = vector.load %arg9[%c0_60, %c0_61] : memref<2x18xf32, #tpu.memory_space<vmem>>, vector<2x18xf32>
    %c0_62 = arith.constant 0 : index
    %c0_63 = arith.constant 0 : index
    %69 = vector.load %arg22[%c0_62, %c0_63] : memref<18x256xf32, #tpu.memory_space<vmem>>, vector<18x256xf32>
    %cst_64 = arith.constant dense<0.000000e+00> : vector<2x256xf32>
    %70 = tpu.matmul %68, %69, %cst_64 {dimension_numbers = #tpu.dot_dimension_numbers<[1], [0], [0], [1], [0, 0, 1, 1], [], []>} : vector<2x18xf32>, vector<18x256xf32>, vector<2x256xf32> -> vector<2x256xf32>
    %c0_65 = arith.constant 0 : index
    %c0_66 = arith.constant 0 : index
    %71 = vector.load %arg10[%c0_65, %c0_66] : memref<2x1xf32, #tpu.memory_space<vmem>>, vector<2x1xf32>
    %72 = vector.broadcast %71 : vector<2x1xf32> to vector<2x256xf32>
    %73 = arith.addf %70, %72 : vector<2x256xf32>
    %cst_67 = arith.constant 0.000000e+00 : f32
    %74 = vector.broadcast %cst_67 : f32 to vector<2x256xf32>
    %75 = arith.maximumf %73, %74 : vector<2x256xf32>
    %c0_68 = arith.constant 0 : index
    %c0_69 = arith.constant 0 : index
    %76 = vector.load %arg7[%c0_68, %c0_69] : memref<2x4xf32, #tpu.memory_space<vmem>>, vector<2x4xf32>
    %cst_70 = arith.constant dense<0.000000e+00> : vector<2x256xf32>
    %77 = tpu.matmul %76, %5, %cst_70 {dimension_numbers = #tpu.dot_dimension_numbers<[1], [0], [0], [1], [0, 0, 1, 1], [], []>} : vector<2x4xf32>, vector<4x256xf32>, vector<2x256xf32> -> vector<2x256xf32>
    %c0_71 = arith.constant 0 : index
    %c0_72 = arith.constant 0 : index
    %78 = vector.load %arg8[%c0_71, %c0_72] : memref<2x1xf32, #tpu.memory_space<vmem>>, vector<2x1xf32>
    %79 = vector.broadcast %78 : vector<2x1xf32> to vector<2x256xf32>
    %80 = arith.addf %77, %79 : vector<2x256xf32>
    %cst_73 = arith.constant 0.000000e+00 : f32
    %81 = vector.broadcast %cst_73 : f32 to vector<2x256xf32>
    %82 = arith.maximumf %80, %81 : vector<2x256xf32>
    %cst_74 = arith.constant 0.000000e+00 : f32
    %83 = vector.broadcast %cst_74 : f32 to vector<2x16xf32>
    %c0_75 = arith.constant 0 : index
    %c0_76 = arith.constant 0 : index
    %84 = vector.load %arg12[%c0_75, %c0_76] : memref<2x1xf32, #tpu.memory_space<vmem>>, vector<2x1xf32>
    %85 = vector.broadcast %84 : vector<2x1xf32> to vector<2x16xf32>
    %86 = arith.addf %83, %85 : vector<2x16xf32>
    %c0_77 = arith.constant 0 : index
    %c0_78 = arith.constant 0 : index
    %c0_79 = arith.constant 0 : index
    %87 = vector.load %arg3[%c0_77, %c0_78, %c0_79] : memref<9x256x16xf32, #tpu.memory_space<vmem>>, vector<1x256x16xf32>
    %88 = vector.shape_cast %87 : vector<1x256x16xf32> to vector<256x16xf32>
    %cst_80 = arith.constant dense<0.000000e+00> : vector<2x16xf32>
    %89 = tpu.matmul %82, %88, %cst_80 {dimension_numbers = #tpu.dot_dimension_numbers<[1], [0], [0], [1], [0, 0, 1, 1], [], []>} : vector<2x256xf32>, vector<256x16xf32>, vector<2x16xf32> -> vector<2x16xf32>
    %c0_81 = arith.constant 0 : index
    %c0_82 = arith.constant 0 : index
    %c0_83 = arith.constant 0 : index
    %90 = vector.load %arg11[%c0_81, %c0_82, %c0_83] : memref<9x2x2xf32, #tpu.memory_space<vmem>>, vector<1x2x2xf32>
    %91 = vector.shape_cast %90 : vector<1x2x2xf32> to vector<2x2xf32>
    %cst_84 = arith.constant dense<0.000000e+00> : vector<2x16xf32>
    %92 = tpu.matmul %91, %89, %cst_84 {dimension_numbers = #tpu.dot_dimension_numbers<[1], [0], [0], [1], [0, 0, 1, 1], [], []>} : vector<2x2xf32>, vector<2x16xf32>, vector<2x16xf32> -> vector<2x16xf32>
    %93 = arith.addf %86, %92 : vector<2x16xf32>
    %c1_85 = arith.constant 1 : index
    %c0_86 = arith.constant 0 : index
    %c0_87 = arith.constant 0 : index
    %94 = vector.load %arg3[%c1_85, %c0_86, %c0_87] : memref<9x256x16xf32, #tpu.memory_space<vmem>>, vector<1x256x16xf32>
    %95 = vector.shape_cast %94 : vector<1x256x16xf32> to vector<256x16xf32>
    %cst_88 = arith.constant dense<0.000000e+00> : vector<2x16xf32>
    %96 = tpu.matmul %82, %95, %cst_88 {dimension_numbers = #tpu.dot_dimension_numbers<[1], [0], [0], [1], [0, 0, 1, 1], [], []>} : vector<2x256xf32>, vector<256x16xf32>, vector<2x16xf32> -> vector<2x16xf32>
    %c1_89 = arith.constant 1 : index
    %c0_90 = arith.constant 0 : index
    %c0_91 = arith.constant 0 : index
    %97 = vector.load %arg11[%c1_89, %c0_90, %c0_91] : memref<9x2x2xf32, #tpu.memory_space<vmem>>, vector<1x2x2xf32>
    %98 = vector.shape_cast %97 : vector<1x2x2xf32> to vector<2x2xf32>
    %cst_92 = arith.constant dense<0.000000e+00> : vector<2x16xf32>
    %99 = tpu.matmul %98, %96, %cst_92 {dimension_numbers = #tpu.dot_dimension_numbers<[1], [0], [0], [1], [0, 0, 1, 1], [], []>} : vector<2x2xf32>, vector<2x16xf32>, vector<2x16xf32> -> vector<2x16xf32>
    %100 = arith.addf %93, %99 : vector<2x16xf32>
    %c2_93 = arith.constant 2 : index
    %c0_94 = arith.constant 0 : index
    %c0_95 = arith.constant 0 : index
    %101 = vector.load %arg3[%c2_93, %c0_94, %c0_95] : memref<9x256x16xf32, #tpu.memory_space<vmem>>, vector<1x256x16xf32>
    %102 = vector.shape_cast %101 : vector<1x256x16xf32> to vector<256x16xf32>
    %cst_96 = arith.constant dense<0.000000e+00> : vector<2x16xf32>
    %103 = tpu.matmul %82, %102, %cst_96 {dimension_numbers = #tpu.dot_dimension_numbers<[1], [0], [0], [1], [0, 0, 1, 1], [], []>} : vector<2x256xf32>, vector<256x16xf32>, vector<2x16xf32> -> vector<2x16xf32>
    %c2_97 = arith.constant 2 : index
    %c0_98 = arith.constant 0 : index
    %c0_99 = arith.constant 0 : index
    %104 = vector.load %arg11[%c2_97, %c0_98, %c0_99] : memref<9x2x2xf32, #tpu.memory_space<vmem>>, vector<1x2x2xf32>
    %105 = vector.shape_cast %104 : vector<1x2x2xf32> to vector<2x2xf32>
    %cst_100 = arith.constant dense<0.000000e+00> : vector<2x16xf32>
    %106 = tpu.matmul %105, %103, %cst_100 {dimension_numbers = #tpu.dot_dimension_numbers<[1], [0], [0], [1], [0, 0, 1, 1], [], []>} : vector<2x2xf32>, vector<2x16xf32>, vector<2x16xf32> -> vector<2x16xf32>
    %107 = arith.addf %100, %106 : vector<2x16xf32>
    %c3_101 = arith.constant 3 : index
    %c0_102 = arith.constant 0 : index
    %c0_103 = arith.constant 0 : index
    %108 = vector.load %arg3[%c3_101, %c0_102, %c0_103] : memref<9x256x16xf32, #tpu.memory_space<vmem>>, vector<1x256x16xf32>
    %109 = vector.shape_cast %108 : vector<1x256x16xf32> to vector<256x16xf32>
    %cst_104 = arith.constant dense<0.000000e+00> : vector<2x16xf32>
    %110 = tpu.matmul %82, %109, %cst_104 {dimension_numbers = #tpu.dot_dimension_numbers<[1], [0], [0], [1], [0, 0, 1, 1], [], []>} : vector<2x256xf32>, vector<256x16xf32>, vector<2x16xf32> -> vector<2x16xf32>
    %c3_105 = arith.constant 3 : index
    %c0_106 = arith.constant 0 : index
    %c0_107 = arith.constant 0 : index
    %111 = vector.load %arg11[%c3_105, %c0_106, %c0_107] : memref<9x2x2xf32, #tpu.memory_space<vmem>>, vector<1x2x2xf32>
    %112 = vector.shape_cast %111 : vector<1x2x2xf32> to vector<2x2xf32>
    %cst_108 = arith.constant dense<0.000000e+00> : vector<2x16xf32>
    %113 = tpu.matmul %112, %110, %cst_108 {dimension_numbers = #tpu.dot_dimension_numbers<[1], [0], [0], [1], [0, 0, 1, 1], [], []>} : vector<2x2xf32>, vector<2x16xf32>, vector<2x16xf32> -> vector<2x16xf32>
    %114 = arith.addf %107, %113 : vector<2x16xf32>
    %c4_109 = arith.constant 4 : index
    %c0_110 = arith.constant 0 : index
    %c0_111 = arith.constant 0 : index
    %115 = vector.load %arg3[%c4_109, %c0_110, %c0_111] : memref<9x256x16xf32, #tpu.memory_space<vmem>>, vector<1x256x16xf32>
    %116 = vector.shape_cast %115 : vector<1x256x16xf32> to vector<256x16xf32>
    %cst_112 = arith.constant dense<0.000000e+00> : vector<2x16xf32>
    %117 = tpu.matmul %82, %116, %cst_112 {dimension_numbers = #tpu.dot_dimension_numbers<[1], [0], [0], [1], [0, 0, 1, 1], [], []>} : vector<2x256xf32>, vector<256x16xf32>, vector<2x16xf32> -> vector<2x16xf32>
    %c4_113 = arith.constant 4 : index
    %c0_114 = arith.constant 0 : index
    %c0_115 = arith.constant 0 : index
    %118 = vector.load %arg11[%c4_113, %c0_114, %c0_115] : memref<9x2x2xf32, #tpu.memory_space<vmem>>, vector<1x2x2xf32>
    %119 = vector.shape_cast %118 : vector<1x2x2xf32> to vector<2x2xf32>
    %cst_116 = arith.constant dense<0.000000e+00> : vector<2x16xf32>
    %120 = tpu.matmul %119, %117, %cst_116 {dimension_numbers = #tpu.dot_dimension_numbers<[1], [0], [0], [1], [0, 0, 1, 1], [], []>} : vector<2x2xf32>, vector<2x16xf32>, vector<2x16xf32> -> vector<2x16xf32>
    %121 = arith.addf %114, %120 : vector<2x16xf32>
    %c5_117 = arith.constant 5 : index
    %c0_118 = arith.constant 0 : index
    %c0_119 = arith.constant 0 : index
    %122 = vector.load %arg3[%c5_117, %c0_118, %c0_119] : memref<9x256x16xf32, #tpu.memory_space<vmem>>, vector<1x256x16xf32>
    %123 = vector.shape_cast %122 : vector<1x256x16xf32> to vector<256x16xf32>
    %cst_120 = arith.constant dense<0.000000e+00> : vector<2x16xf32>
    %124 = tpu.matmul %82, %123, %cst_120 {dimension_numbers = #tpu.dot_dimension_numbers<[1], [0], [0], [1], [0, 0, 1, 1], [], []>} : vector<2x256xf32>, vector<256x16xf32>, vector<2x16xf32> -> vector<2x16xf32>
    %c5_121 = arith.constant 5 : index
    %c0_122 = arith.constant 0 : index
    %c0_123 = arith.constant 0 : index
    %125 = vector.load %arg11[%c5_121, %c0_122, %c0_123] : memref<9x2x2xf32, #tpu.memory_space<vmem>>, vector<1x2x2xf32>
    %126 = vector.shape_cast %125 : vector<1x2x2xf32> to vector<2x2xf32>
    %cst_124 = arith.constant dense<0.000000e+00> : vector<2x16xf32>
    %127 = tpu.matmul %126, %124, %cst_124 {dimension_numbers = #tpu.dot_dimension_numbers<[1], [0], [0], [1], [0, 0, 1, 1], [], []>} : vector<2x2xf32>, vector<2x16xf32>, vector<2x16xf32> -> vector<2x16xf32>
    %128 = arith.addf %121, %127 : vector<2x16xf32>
    %c6_125 = arith.constant 6 : index
    %c0_126 = arith.constant 0 : index
    %c0_127 = arith.constant 0 : index
    %129 = vector.load %arg3[%c6_125, %c0_126, %c0_127] : memref<9x256x16xf32, #tpu.memory_space<vmem>>, vector<1x256x16xf32>
    %130 = vector.shape_cast %129 : vector<1x256x16xf32> to vector<256x16xf32>
    %cst_128 = arith.constant dense<0.000000e+00> : vector<2x16xf32>
    %131 = tpu.matmul %82, %130, %cst_128 {dimension_numbers = #tpu.dot_dimension_numbers<[1], [0], [0], [1], [0, 0, 1, 1], [], []>} : vector<2x256xf32>, vector<256x16xf32>, vector<2x16xf32> -> vector<2x16xf32>
    %c6_129 = arith.constant 6 : index
    %c0_130 = arith.constant 0 : index
    %c0_131 = arith.constant 0 : index
    %132 = vector.load %arg11[%c6_129, %c0_130, %c0_131] : memref<9x2x2xf32, #tpu.memory_space<vmem>>, vector<1x2x2xf32>
    %133 = vector.shape_cast %132 : vector<1x2x2xf32> to vector<2x2xf32>
    %cst_132 = arith.constant dense<0.000000e+00> : vector<2x16xf32>
    %134 = tpu.matmul %133, %131, %cst_132 {dimension_numbers = #tpu.dot_dimension_numbers<[1], [0], [0], [1], [0, 0, 1, 1], [], []>} : vector<2x2xf32>, vector<2x16xf32>, vector<2x16xf32> -> vector<2x16xf32>
    %135 = arith.addf %128, %134 : vector<2x16xf32>
    %c7_133 = arith.constant 7 : index
    %c0_134 = arith.constant 0 : index
    %c0_135 = arith.constant 0 : index
    %136 = vector.load %arg3[%c7_133, %c0_134, %c0_135] : memref<9x256x16xf32, #tpu.memory_space<vmem>>, vector<1x256x16xf32>
    %137 = vector.shape_cast %136 : vector<1x256x16xf32> to vector<256x16xf32>
    %cst_136 = arith.constant dense<0.000000e+00> : vector<2x16xf32>
    %138 = tpu.matmul %82, %137, %cst_136 {dimension_numbers = #tpu.dot_dimension_numbers<[1], [0], [0], [1], [0, 0, 1, 1], [], []>} : vector<2x256xf32>, vector<256x16xf32>, vector<2x16xf32> -> vector<2x16xf32>
    %c7_137 = arith.constant 7 : index
    %c0_138 = arith.constant 0 : index
    %c0_139 = arith.constant 0 : index
    %139 = vector.load %arg11[%c7_137, %c0_138, %c0_139] : memref<9x2x2xf32, #tpu.memory_space<vmem>>, vector<1x2x2xf32>
    %140 = vector.shape_cast %139 : vector<1x2x2xf32> to vector<2x2xf32>
    %cst_140 = arith.constant dense<0.000000e+00> : vector<2x16xf32>
    %141 = tpu.matmul %140, %138, %cst_140 {dimension_numbers = #tpu.dot_dimension_numbers<[1], [0], [0], [1], [0, 0, 1, 1], [], []>} : vector<2x2xf32>, vector<2x16xf32>, vector<2x16xf32> -> vector<2x16xf32>
    %142 = arith.addf %135, %141 : vector<2x16xf32>
    %c8_141 = arith.constant 8 : index
    %c0_142 = arith.constant 0 : index
    %c0_143 = arith.constant 0 : index
    %143 = vector.load %arg3[%c8_141, %c0_142, %c0_143] : memref<9x256x16xf32, #tpu.memory_space<vmem>>, vector<1x256x16xf32>
    %144 = vector.shape_cast %143 : vector<1x256x16xf32> to vector<256x16xf32>
    %cst_144 = arith.constant dense<0.000000e+00> : vector<2x16xf32>
    %145 = tpu.matmul %82, %144, %cst_144 {dimension_numbers = #tpu.dot_dimension_numbers<[1], [0], [0], [1], [0, 0, 1, 1], [], []>} : vector<2x256xf32>, vector<256x16xf32>, vector<2x16xf32> -> vector<2x16xf32>
    %c8_145 = arith.constant 8 : index
    %c0_146 = arith.constant 0 : index
    %c0_147 = arith.constant 0 : index
    %146 = vector.load %arg11[%c8_145, %c0_146, %c0_147] : memref<9x2x2xf32, #tpu.memory_space<vmem>>, vector<1x2x2xf32>
    %147 = vector.shape_cast %146 : vector<1x2x2xf32> to vector<2x2xf32>
    %cst_148 = arith.constant dense<0.000000e+00> : vector<2x16xf32>
    %148 = tpu.matmul %147, %145, %cst_148 {dimension_numbers = #tpu.dot_dimension_numbers<[1], [0], [0], [1], [0, 0, 1, 1], [], []>} : vector<2x2xf32>, vector<2x16xf32>, vector<2x16xf32> -> vector<2x16xf32>
    %149 = arith.addf %142, %148 : vector<2x16xf32>
    %c0_149 = arith.constant 0 : index
    %c0_150 = arith.constant 0 : index
    %150 = vector.load %arg4[%c0_149, %c0_150] : memref<16x256xf32, #tpu.memory_space<vmem>>, vector<16x256xf32>
    %cst_151 = arith.constant dense<0.000000e+00> : vector<2x256xf32>
    %151 = tpu.matmul %149, %150, %cst_151 {dimension_numbers = #tpu.dot_dimension_numbers<[1], [0], [0], [1], [0, 0, 1, 1], [], []>} : vector<2x16xf32>, vector<16x256xf32>, vector<2x256xf32> -> vector<2x256xf32>
    %152 = arith.addf %82, %151 : vector<2x256xf32>
    %cst_152 = arith.constant 9.99999993E-9 : f32
    %153 = vector.broadcast %cst_152 : f32 to vector<2x256xf32>
    %154 = arith.addf %152, %153 : vector<2x256xf32>
    %cst_153 = arith.constant 0.000000e+00 : f32
    %155 = vector.broadcast %cst_153 : f32 to vector<2x256xf32>
    %156 = arith.subf %155, %154 : vector<2x256xf32>
    %157 = math.exp %156 : vector<2x256xf32>
    %cst_154 = arith.constant 1.000000e+00 : f32
    %158 = vector.broadcast %cst_154 : f32 to vector<2x256xf32>
    %159 = arith.addf %158, %157 : vector<2x256xf32>
    %160 = tpu.reciprocal %159 {approx = true} : vector<2x256xf32> -> vector<2x256xf32>
    %c0_155 = arith.constant 0 : index
    %c17_156 = arith.constant 17 : index
    %161 = vector.load %arg21[%c0_155, %c17_156] : memref<2x290xf32, #tpu.memory_space<vmem>>, vector<2x256xf32>
    tpu.vector_store %arg21[%c0_155, %c17_156], %82 {strides = array<i32>} : memref<2x290xf32, #tpu.memory_space<vmem>>, vector<2x256xf32>,
    %c0_157 = arith.constant 0 : index
    %c0_158 = arith.constant 0 : index
    %162 = vector.load %arg21[%c0_157, %c0_158] : memref<2x290xf32, #tpu.memory_space<vmem>>, vector<2x256xf32>
    %c0_159 = arith.constant 0 : index
    %c0_160 = arith.constant 0 : index
    %c0_161 = arith.constant 0 : index
    %163 = vector.load %arg2[%c0_159, %c0_160, %c0_161] : memref<9x1x256xf32, #tpu.memory_space<vmem>>, vector<1x1x256xf32>
    %164 = vector.shape_cast %163 : vector<1x1x256xf32> to vector<1x256xf32>
    %165 = vector.broadcast %164 : vector<1x256xf32> to vector<2x256xf32>
    %166 = arith.mulf %162, %165 : vector<2x256xf32>
    %c0_162 = arith.constant 0 : index
    %c0_163 = arith.constant 0 : index
    %167 = vector.load %arg22[%c0_162, %c0_163] : memref<18x256xf32, #tpu.memory_space<vmem>>, vector<2x256xf32>
    tpu.vector_store %arg22[%c0_162, %c0_163], %166 {strides = array<i32>} : memref<18x256xf32, #tpu.memory_space<vmem>>, vector<2x256xf32>,
    %c0_164 = arith.constant 0 : index
    %c1_165 = arith.constant 1 : index
    %168 = vector.load %arg21[%c0_164, %c1_165] : memref<2x290xf32, #tpu.memory_space<vmem>>, vector<2x256xf32>
    %c1_166 = arith.constant 1 : index
    %c0_167 = arith.constant 0 : index
    %c0_168 = arith.constant 0 : index
    %169 = vector.load %arg2[%c1_166, %c0_167, %c0_168] : memref<9x1x256xf32, #tpu.memory_space<vmem>>, vector<1x1x256xf32>
    %170 = vector.shape_cast %169 : vector<1x1x256xf32> to vector<1x256xf32>
    %171 = vector.broadcast %170 : vector<1x256xf32> to vector<2x256xf32>
    %172 = arith.mulf %168, %171 : vector<2x256xf32>
    %c2_169 = arith.constant 2 : index
    %c0_170 = arith.constant 0 : index
    %173 = vector.load %arg22[%c2_169, %c0_170] : memref<18x256xf32, #tpu.memory_space<vmem>>, vector<2x256xf32>
    tpu.vector_store %arg22[%c2_169, %c0_170], %172 {strides = array<i32>} : memref<18x256xf32, #tpu.memory_space<vmem>>, vector<2x256xf32>,
    %c0_171 = arith.constant 0 : index
    %c2_172 = arith.constant 2 : index
    %174 = vector.load %arg21[%c0_171, %c2_172] : memref<2x290xf32, #tpu.memory_space<vmem>>, vector<2x256xf32>
    %c2_173 = arith.constant 2 : index
    %c0_174 = arith.constant 0 : index
    %c0_175 = arith.constant 0 : index
    %175 = vector.load %arg2[%c2_173, %c0_174, %c0_175] : memref<9x1x256xf32, #tpu.memory_space<vmem>>, vector<1x1x256xf32>
    %176 = vector.shape_cast %175 : vector<1x1x256xf32> to vector<1x256xf32>
    %177 = vector.broadcast %176 : vector<1x256xf32> to vector<2x256xf32>
    %178 = arith.mulf %174, %177 : vector<2x256xf32>
    %c4_176 = arith.constant 4 : index
    %c0_177 = arith.constant 0 : index
    %179 = vector.load %arg22[%c4_176, %c0_177] : memref<18x256xf32, #tpu.memory_space<vmem>>, vector<2x256xf32>
    tpu.vector_store %arg22[%c4_176, %c0_177], %178 {strides = array<i32>} : memref<18x256xf32, #tpu.memory_space<vmem>>, vector<2x256xf32>,
    %c0_178 = arith.constant 0 : index
    %c16_179 = arith.constant 16 : index
    %180 = vector.load %arg21[%c0_178, %c16_179] : memref<2x290xf32, #tpu.memory_space<vmem>>, vector<2x256xf32>
    %c3_180 = arith.constant 3 : index
    %c0_181 = arith.constant 0 : index
    %c0_182 = arith.constant 0 : index
    %181 = vector.load %arg2[%c3_180, %c0_181, %c0_182] : memref<9x1x256xf32, #tpu.memory_space<vmem>>, vector<1x1x256xf32>
    %182 = vector.shape_cast %181 : vector<1x1x256xf32> to vector<1x256xf32>
    %183 = vector.broadcast %182 : vector<1x256xf32> to vector<2x256xf32>
    %184 = arith.mulf %180, %183 : vector<2x256xf32>
    %c6_183 = arith.constant 6 : index
    %c0_184 = arith.constant 0 : index
    %185 = vector.load %arg22[%c6_183, %c0_184] : memref<18x256xf32, #tpu.memory_space<vmem>>, vector<2x256xf32>
    tpu.vector_store %arg22[%c6_183, %c0_184], %184 {strides = array<i32>} : memref<18x256xf32, #tpu.memory_space<vmem>>, vector<2x256xf32>,
    %c0_185 = arith.constant 0 : index
    %c17_186 = arith.constant 17 : index
    %186 = vector.load %arg21[%c0_185, %c17_186] : memref<2x290xf32, #tpu.memory_space<vmem>>, vector<2x256xf32>
    %c4_187 = arith.constant 4 : index
    %c0_188 = arith.constant 0 : index
    %c0_189 = arith.constant 0 : index
    %187 = vector.load %arg2[%c4_187, %c0_188, %c0_189] : memref<9x1x256xf32, #tpu.memory_space<vmem>>, vector<1x1x256xf32>
    %188 = vector.shape_cast %187 : vector<1x1x256xf32> to vector<1x256xf32>
    %189 = vector.broadcast %188 : vector<1x256xf32> to vector<2x256xf32>
    %190 = arith.mulf %186, %189 : vector<2x256xf32>
    %c8_190 = arith.constant 8 : index
    %c0_191 = arith.constant 0 : index
    %191 = vector.load %arg22[%c8_190, %c0_191] : memref<18x256xf32, #tpu.memory_space<vmem>>, vector<2x256xf32>
    tpu.vector_store %arg22[%c8_190, %c0_191], %190 {strides = array<i32>} : memref<18x256xf32, #tpu.memory_space<vmem>>, vector<2x256xf32>,
    %c0_192 = arith.constant 0 : index
    %c18_193 = arith.constant 18 : index
    %192 = vector.load %arg21[%c0_192, %c18_193] : memref<2x290xf32, #tpu.memory_space<vmem>>, vector<2x256xf32>
    %c5_194 = arith.constant 5 : index
    %c0_195 = arith.constant 0 : index
    %c0_196 = arith.constant 0 : index
    %193 = vector.load %arg2[%c5_194, %c0_195, %c0_196] : memref<9x1x256xf32, #tpu.memory_space<vmem>>, vector<1x1x256xf32>
    %194 = vector.shape_cast %193 : vector<1x1x256xf32> to vector<1x256xf32>
    %195 = vector.broadcast %194 : vector<1x256xf32> to vector<2x256xf32>
    %196 = arith.mulf %192, %195 : vector<2x256xf32>
    %c10_197 = arith.constant 10 : index
    %c0_198 = arith.constant 0 : index
    %197 = vector.load %arg22[%c10_197, %c0_198] : memref<18x256xf32, #tpu.memory_space<vmem>>, vector<2x256xf32>
    tpu.vector_store %arg22[%c10_197, %c0_198], %196 {strides = array<i32>} : memref<18x256xf32, #tpu.memory_space<vmem>>, vector<2x256xf32>,
    %c0_199 = arith.constant 0 : index
    %c32_200 = arith.constant 32 : index
    %198 = vector.load %arg21[%c0_199, %c32_200] : memref<2x290xf32, #tpu.memory_space<vmem>>, vector<2x256xf32>
    %c6_201 = arith.constant 6 : index
    %c0_202 = arith.constant 0 : index
    %c0_203 = arith.constant 0 : index
    %199 = vector.load %arg2[%c6_201, %c0_202, %c0_203] : memref<9x1x256xf32, #tpu.memory_space<vmem>>, vector<1x1x256xf32>
    %200 = vector.shape_cast %199 : vector<1x1x256xf32> to vector<1x256xf32>
    %201 = vector.broadcast %200 : vector<1x256xf32> to vector<2x256xf32>
    %202 = arith.mulf %198, %201 : vector<2x256xf32>
    %c12_204 = arith.constant 12 : index
    %c0_205 = arith.constant 0 : index
    %203 = vector.load %arg22[%c12_204, %c0_205] : memref<18x256xf32, #tpu.memory_space<vmem>>, vector<2x256xf32>
    tpu.vector_store %arg22[%c12_204, %c0_205], %202 {strides = array<i32>} : memref<18x256xf32, #tpu.memory_space<vmem>>, vector<2x256xf32>,
    %c0_206 = arith.constant 0 : index
    %c33_207 = arith.constant 33 : index
    %204 = vector.load %arg21[%c0_206, %c33_207] : memref<2x290xf32, #tpu.memory_space<vmem>>, vector<2x256xf32>
    %c7_208 = arith.constant 7 : index
    %c0_209 = arith.constant 0 : index
    %c0_210 = arith.constant 0 : index
    %205 = vector.load %arg2[%c7_208, %c0_209, %c0_210] : memref<9x1x256xf32, #tpu.memory_space<vmem>>, vector<1x1x256xf32>
    %206 = vector.shape_cast %205 : vector<1x1x256xf32> to vector<1x256xf32>
    %207 = vector.broadcast %206 : vector<1x256xf32> to vector<2x256xf32>
    %208 = arith.mulf %204, %207 : vector<2x256xf32>
    %c14_211 = arith.constant 14 : index
    %c0_212 = arith.constant 0 : index
    %209 = vector.load %arg22[%c14_211, %c0_212] : memref<18x256xf32, #tpu.memory_space<vmem>>, vector<2x256xf32>
    tpu.vector_store %arg22[%c14_211, %c0_212], %208 {strides = array<i32>} : memref<18x256xf32, #tpu.memory_space<vmem>>, vector<2x256xf32>,
    %c0_213 = arith.constant 0 : index
    %c34_214 = arith.constant 34 : index
    %210 = vector.load %arg21[%c0_213, %c34_214] : memref<2x290xf32, #tpu.memory_space<vmem>>, vector<2x256xf32>
    %c8_215 = arith.constant 8 : index
    %c0_216 = arith.constant 0 : index
    %c0_217 = arith.constant 0 : index
    %211 = vector.load %arg2[%c8_215, %c0_216, %c0_217] : memref<9x1x256xf32, #tpu.memory_space<vmem>>, vector<1x1x256xf32>
    %212 = vector.shape_cast %211 : vector<1x1x256xf32> to vector<1x256xf32>
    %213 = vector.broadcast %212 : vector<1x256xf32> to vector<2x256xf32>
    %214 = arith.mulf %210, %213 : vector<2x256xf32>
    %c16_218 = arith.constant 16 : index
    %c0_219 = arith.constant 0 : index
    %215 = vector.load %arg22[%c16_218, %c0_219] : memref<18x256xf32, #tpu.memory_space<vmem>>, vector<2x256xf32>
    tpu.vector_store %arg22[%c16_218, %c0_219], %214 {strides = array<i32>} : memref<18x256xf32, #tpu.memory_space<vmem>>, vector<2x256xf32>,
    %c0_220 = arith.constant 0 : index
    %c0_221 = arith.constant 0 : index
    %216 = vector.load %arg13[%c0_220, %c0_221] : memref<2x18xf32, #tpu.memory_space<vmem>>, vector<2x18xf32>
    %c0_222 = arith.constant 0 : index
    %c0_223 = arith.constant 0 : index
    %217 = vector.load %arg22[%c0_222, %c0_223] : memref<18x256xf32, #tpu.memory_space<vmem>>, vector<18x256xf32>
    %cst_224 = arith.constant dense<0.000000e+00> : vector<2x256xf32>
    %218 = tpu.matmul %216, %217, %cst_224 {dimension_numbers = #tpu.dot_dimension_numbers<[1], [0], [0], [1], [0, 0, 1, 1], [], []>} : vector<2x18xf32>, vector<18x256xf32>, vector<2x256xf32> -> vector<2x256xf32>
    %c0_225 = arith.constant 0 : index
    %c0_226 = arith.constant 0 : index
    %219 = vector.load %arg14[%c0_225, %c0_226] : memref<2x1xf32, #tpu.memory_space<vmem>>, vector<2x1xf32>
    %220 = vector.broadcast %219 : vector<2x1xf32> to vector<2x256xf32>
    %221 = arith.addf %218, %220 : vector<2x256xf32>
    %222 = arith.mulf %221, %160 : vector<2x256xf32>
    %c0_227 = arith.constant 0 : index
    %c17_228 = arith.constant 17 : index
    %223 = vector.load %arg21[%c0_227, %c17_228] : memref<2x290xf32, #tpu.memory_space<vmem>>, vector<2x256xf32>
    tpu.vector_store %arg21[%c0_227, %c17_228], %222 {strides = array<i32>} : memref<2x290xf32, #tpu.memory_space<vmem>>, vector<2x256xf32>,
    %c0_229 = arith.constant 0 : index
    %c0_230 = arith.constant 0 : index
    %224 = vector.load %arg21[%c0_229, %c0_230] : memref<2x290xf32, #tpu.memory_space<vmem>>, vector<2x256xf32>
    %c0_231 = arith.constant 0 : index
    %c0_232 = arith.constant 0 : index
    %c0_233 = arith.constant 0 : index
    %225 = vector.load %arg2[%c0_231, %c0_232, %c0_233] : memref<9x1x256xf32, #tpu.memory_space<vmem>>, vector<1x1x256xf32>
    %226 = vector.shape_cast %225 : vector<1x1x256xf32> to vector<1x256xf32>
    %227 = vector.broadcast %226 : vector<1x256xf32> to vector<2x256xf32>
    %228 = arith.mulf %224, %227 : vector<2x256xf32>
    %c0_234 = arith.constant 0 : index
    %c0_235 = arith.constant 0 : index
    %229 = vector.load %arg22[%c0_234, %c0_235] : memref<18x256xf32, #tpu.memory_space<vmem>>, vector<2x256xf32>
    tpu.vector_store %arg22[%c0_234, %c0_235], %228 {strides = array<i32>} : memref<18x256xf32, #tpu.memory_space<vmem>>, vector<2x256xf32>,
    %c0_236 = arith.constant 0 : index
    %c1_237 = arith.constant 1 : index
    %230 = vector.load %arg21[%c0_236, %c1_237] : memref<2x290xf32, #tpu.memory_space<vmem>>, vector<2x256xf32>
    %c1_238 = arith.constant 1 : index
    %c0_239 = arith.constant 0 : index
    %c0_240 = arith.constant 0 : index
    %231 = vector.load %arg2[%c1_238, %c0_239, %c0_240] : memref<9x1x256xf32, #tpu.memory_space<vmem>>, vector<1x1x256xf32>
    %232 = vector.shape_cast %231 : vector<1x1x256xf32> to vector<1x256xf32>
    %233 = vector.broadcast %232 : vector<1x256xf32> to vector<2x256xf32>
    %234 = arith.mulf %230, %233 : vector<2x256xf32>
    %c2_241 = arith.constant 2 : index
    %c0_242 = arith.constant 0 : index
    %235 = vector.load %arg22[%c2_241, %c0_242] : memref<18x256xf32, #tpu.memory_space<vmem>>, vector<2x256xf32>
    tpu.vector_store %arg22[%c2_241, %c0_242], %234 {strides = array<i32>} : memref<18x256xf32, #tpu.memory_space<vmem>>, vector<2x256xf32>,
    %c0_243 = arith.constant 0 : index
    %c2_244 = arith.constant 2 : index
    %236 = vector.load %arg21[%c0_243, %c2_244] : memref<2x290xf32, #tpu.memory_space<vmem>>, vector<2x256xf32>
    %c2_245 = arith.constant 2 : index
    %c0_246 = arith.constant 0 : index
    %c0_247 = arith.constant 0 : index
    %237 = vector.load %arg2[%c2_245, %c0_246, %c0_247] : memref<9x1x256xf32, #tpu.memory_space<vmem>>, vector<1x1x256xf32>
    %238 = vector.shape_cast %237 : vector<1x1x256xf32> to vector<1x256xf32>
    %239 = vector.broadcast %238 : vector<1x256xf32> to vector<2x256xf32>
    %240 = arith.mulf %236, %239 : vector<2x256xf32>
    %c4_248 = arith.constant 4 : index
    %c0_249 = arith.constant 0 : index
    %241 = vector.load %arg22[%c4_248, %c0_249] : memref<18x256xf32, #tpu.memory_space<vmem>>, vector<2x256xf32>
    tpu.vector_store %arg22[%c4_248, %c0_249], %240 {strides = array<i32>} : memref<18x256xf32, #tpu.memory_space<vmem>>, vector<2x256xf32>,
    %c0_250 = arith.constant 0 : index
    %c16_251 = arith.constant 16 : index
    %242 = vector.load %arg21[%c0_250, %c16_251] : memref<2x290xf32, #tpu.memory_space<vmem>>, vector<2x256xf32>
    %c3_252 = arith.constant 3 : index
    %c0_253 = arith.constant 0 : index
    %c0_254 = arith.constant 0 : index
    %243 = vector.load %arg2[%c3_252, %c0_253, %c0_254] : memref<9x1x256xf32, #tpu.memory_space<vmem>>, vector<1x1x256xf32>
    %244 = vector.shape_cast %243 : vector<1x1x256xf32> to vector<1x256xf32>
    %245 = vector.broadcast %244 : vector<1x256xf32> to vector<2x256xf32>
    %246 = arith.mulf %242, %245 : vector<2x256xf32>
    %c6_255 = arith.constant 6 : index
    %c0_256 = arith.constant 0 : index
    %247 = vector.load %arg22[%c6_255, %c0_256] : memref<18x256xf32, #tpu.memory_space<vmem>>, vector<2x256xf32>
    tpu.vector_store %arg22[%c6_255, %c0_256], %246 {strides = array<i32>} : memref<18x256xf32, #tpu.memory_space<vmem>>, vector<2x256xf32>,
    %c0_257 = arith.constant 0 : index
    %c17_258 = arith.constant 17 : index
    %248 = vector.load %arg21[%c0_257, %c17_258] : memref<2x290xf32, #tpu.memory_space<vmem>>, vector<2x256xf32>
    %c4_259 = arith.constant 4 : index
    %c0_260 = arith.constant 0 : index
    %c0_261 = arith.constant 0 : index
    %249 = vector.load %arg2[%c4_259, %c0_260, %c0_261] : memref<9x1x256xf32, #tpu.memory_space<vmem>>, vector<1x1x256xf32>
    %250 = vector.shape_cast %249 : vector<1x1x256xf32> to vector<1x256xf32>
    %251 = vector.broadcast %250 : vector<1x256xf32> to vector<2x256xf32>
    %252 = arith.mulf %248, %251 : vector<2x256xf32>
    %c8_262 = arith.constant 8 : index
    %c0_263 = arith.constant 0 : index
    %253 = vector.load %arg22[%c8_262, %c0_263] : memref<18x256xf32, #tpu.memory_space<vmem>>, vector<2x256xf32>
    tpu.vector_store %arg22[%c8_262, %c0_263], %252 {strides = array<i32>} : memref<18x256xf32, #tpu.memory_space<vmem>>, vector<2x256xf32>,
    %c0_264 = arith.constant 0 : index
    %c18_265 = arith.constant 18 : index
    %254 = vector.load %arg21[%c0_264, %c18_265] : memref<2x290xf32, #tpu.memory_space<vmem>>, vector<2x256xf32>
    %c5_266 = arith.constant 5 : index
    %c0_267 = arith.constant 0 : index
    %c0_268 = arith.constant 0 : index
    %255 = vector.load %arg2[%c5_266, %c0_267, %c0_268] : memref<9x1x256xf32, #tpu.memory_space<vmem>>, vector<1x1x256xf32>
    %256 = vector.shape_cast %255 : vector<1x1x256xf32> to vector<1x256xf32>
    %257 = vector.broadcast %256 : vector<1x256xf32> to vector<2x256xf32>
    %258 = arith.mulf %254, %257 : vector<2x256xf32>
    %c10_269 = arith.constant 10 : index
    %c0_270 = arith.constant 0 : index
    %259 = vector.load %arg22[%c10_269, %c0_270] : memref<18x256xf32, #tpu.memory_space<vmem>>, vector<2x256xf32>
    tpu.vector_store %arg22[%c10_269, %c0_270], %258 {strides = array<i32>} : memref<18x256xf32, #tpu.memory_space<vmem>>, vector<2x256xf32>,
    %c0_271 = arith.constant 0 : index
    %c32_272 = arith.constant 32 : index
    %260 = vector.load %arg21[%c0_271, %c32_272] : memref<2x290xf32, #tpu.memory_space<vmem>>, vector<2x256xf32>
    %c6_273 = arith.constant 6 : index
    %c0_274 = arith.constant 0 : index
    %c0_275 = arith.constant 0 : index
    %261 = vector.load %arg2[%c6_273, %c0_274, %c0_275] : memref<9x1x256xf32, #tpu.memory_space<vmem>>, vector<1x1x256xf32>
    %262 = vector.shape_cast %261 : vector<1x1x256xf32> to vector<1x256xf32>
    %263 = vector.broadcast %262 : vector<1x256xf32> to vector<2x256xf32>
    %264 = arith.mulf %260, %263 : vector<2x256xf32>
    %c12_276 = arith.constant 12 : index
    %c0_277 = arith.constant 0 : index
    %265 = vector.load %arg22[%c12_276, %c0_277] : memref<18x256xf32, #tpu.memory_space<vmem>>, vector<2x256xf32>
    tpu.vector_store %arg22[%c12_276, %c0_277], %264 {strides = array<i32>} : memref<18x256xf32, #tpu.memory_space<vmem>>, vector<2x256xf32>,
    %c0_278 = arith.constant 0 : index
    %c33_279 = arith.constant 33 : index
    %266 = vector.load %arg21[%c0_278, %c33_279] : memref<2x290xf32, #tpu.memory_space<vmem>>, vector<2x256xf32>
    %c7_280 = arith.constant 7 : index
    %c0_281 = arith.constant 0 : index
    %c0_282 = arith.constant 0 : index
    %267 = vector.load %arg2[%c7_280, %c0_281, %c0_282] : memref<9x1x256xf32, #tpu.memory_space<vmem>>, vector<1x1x256xf32>
    %268 = vector.shape_cast %267 : vector<1x1x256xf32> to vector<1x256xf32>
    %269 = vector.broadcast %268 : vector<1x256xf32> to vector<2x256xf32>
    %270 = arith.mulf %266, %269 : vector<2x256xf32>
    %c14_283 = arith.constant 14 : index
    %c0_284 = arith.constant 0 : index
    %271 = vector.load %arg22[%c14_283, %c0_284] : memref<18x256xf32, #tpu.memory_space<vmem>>, vector<2x256xf32>
    tpu.vector_store %arg22[%c14_283, %c0_284], %270 {strides = array<i32>} : memref<18x256xf32, #tpu.memory_space<vmem>>, vector<2x256xf32>,
    %c0_285 = arith.constant 0 : index
    %c34_286 = arith.constant 34 : index
    %272 = vector.load %arg21[%c0_285, %c34_286] : memref<2x290xf32, #tpu.memory_space<vmem>>, vector<2x256xf32>
    %c8_287 = arith.constant 8 : index
    %c0_288 = arith.constant 0 : index
    %c0_289 = arith.constant 0 : index
    %273 = vector.load %arg2[%c8_287, %c0_288, %c0_289] : memref<9x1x256xf32, #tpu.memory_space<vmem>>, vector<1x1x256xf32>
    %274 = vector.shape_cast %273 : vector<1x1x256xf32> to vector<1x256xf32>
    %275 = vector.broadcast %274 : vector<1x256xf32> to vector<2x256xf32>
    %276 = arith.mulf %272, %275 : vector<2x256xf32>
    %c16_290 = arith.constant 16 : index
    %c0_291 = arith.constant 0 : index
    %277 = vector.load %arg22[%c16_290, %c0_291] : memref<18x256xf32, #tpu.memory_space<vmem>>, vector<2x256xf32>
    tpu.vector_store %arg22[%c16_290, %c0_291], %276 {strides = array<i32>} : memref<18x256xf32, #tpu.memory_space<vmem>>, vector<2x256xf32>,
    %c0_292 = arith.constant 0 : index
    %c0_293 = arith.constant 0 : index
    %278 = vector.load %arg15[%c0_292, %c0_293] : memref<2x18xf32, #tpu.memory_space<vmem>>, vector<2x18xf32>
    %c0_294 = arith.constant 0 : index
    %c0_295 = arith.constant 0 : index
    %279 = vector.load %arg22[%c0_294, %c0_295] : memref<18x256xf32, #tpu.memory_space<vmem>>, vector<18x256xf32>
    %cst_296 = arith.constant dense<0.000000e+00> : vector<2x256xf32>
    %280 = tpu.matmul %278, %279, %cst_296 {dimension_numbers = #tpu.dot_dimension_numbers<[1], [0], [0], [1], [0, 0, 1, 1], [], []>} : vector<2x18xf32>, vector<18x256xf32>, vector<2x256xf32> -> vector<2x256xf32>
    %c0_297 = arith.constant 0 : index
    %c0_298 = arith.constant 0 : index
    %281 = vector.load %arg16[%c0_297, %c0_298] : memref<2x1xf32, #tpu.memory_space<vmem>>, vector<2x1xf32>
    %282 = vector.broadcast %281 : vector<2x1xf32> to vector<2x256xf32>
    %283 = arith.addf %280, %282 : vector<2x256xf32>
    %cst_299 = arith.constant 0.000000e+00 : f32
    %284 = vector.broadcast %cst_299 : f32 to vector<2x256xf32>
    %285 = arith.maximumf %283, %284 : vector<2x256xf32>
    %c0_300 = arith.constant 0 : index
    %c0_301 = arith.constant 0 : index
    %286 = vector.load %arg17[%c0_300, %c0_301] : memref<4x2xf32, #tpu.memory_space<vmem>>, vector<4x2xf32>
    %cst_302 = arith.constant dense<0.000000e+00> : vector<4x256xf32>
    %287 = tpu.matmul %286, %75, %cst_302 {dimension_numbers = #tpu.dot_dimension_numbers<[1], [0], [0], [1], [0, 0, 1, 1], [], []>} : vector<4x2xf32>, vector<2x256xf32>, vector<4x256xf32> -> vector<4x256xf32>
    %c0_303 = arith.constant 0 : index
    %c0_304 = arith.constant 0 : index
    %288 = vector.load %arg18[%c0_303, %c0_304] : memref<4x2xf32, #tpu.memory_space<vmem>>, vector<4x2xf32>
    %cst_305 = arith.constant dense<0.000000e+00> : vector<4x256xf32>
    %289 = tpu.matmul %288, %285, %cst_305 {dimension_numbers = #tpu.dot_dimension_numbers<[1], [0], [0], [1], [0, 0, 1, 1], [], []>} : vector<4x2xf32>, vector<2x256xf32>, vector<4x256xf32> -> vector<4x256xf32>
    %290 = arith.addf %287, %289 : vector<4x256xf32>
    %c0_306 = arith.constant 0 : index
    %c0_307 = arith.constant 0 : index
    %291 = vector.load %arg19[%c0_306, %c0_307] : memref<4x1xf32, #tpu.memory_space<vmem>>, vector<4x1xf32>
    %292 = vector.broadcast %291 : vector<4x1xf32> to vector<4x256xf32>
    %293 = arith.addf %290, %292 : vector<4x256xf32>
    %294 = arith.addf %293, %5 : vector<4x256xf32>
    %cst_308 = arith.constant 0.000000e+00 : f32
    %295 = vector.broadcast %cst_308 : f32 to vector<4x256xf32>
    %296 = arith.maximumf %294, %295 : vector<4x256xf32>
    %c0_309 = arith.constant 0 : index
    %c0_310 = arith.constant 0 : index
    %c0_311 = arith.constant 0 : index
    %297 = vector.load %arg20[%c0_309, %c0_310, %c0_311] : memref<1x4x256xf32, #tpu.memory_space<vmem>>, vector<1x4x256xf32>
    %298 = vector.shape_cast %297 : vector<1x4x256xf32> to vector<4x256xf32>
    %299 = vector.shape_cast %296 : vector<4x256xf32> to vector<1x4x256xf32>
    tpu.vector_store %arg20[%c0_309, %c0_310, %c0_311], %299 {strides = array<i32>} : memref<1x4x256xf32, #tpu.memory_space<vmem>>, vector<1x4x256xf32>,
    return
  }
  func.func @transform_0(%arg0: i32) -> (i32, i32, i32) {
    %c0_i32 = arith.constant 0 : i32
    %c0_i32_0 = arith.constant 0 : i32
    %c0_i32_1 = arith.constant 0 : i32
    return %arg0, %c0_i32, %c0_i32_0 : i32, i32, i32
  }
  func.func @transform_1(%arg0: i32) -> (i32, i32, i32) {
    %c0_i32 = arith.constant 0 : i32
    %c0_i32_0 = arith.constant 0 : i32
    %c0_i32_1 = arith.constant 0 : i32
    %c0_i32_2 = arith.constant 0 : i32
    return %c0_i32, %c0_i32_0, %c0_i32_1 : i32, i32, i32
  }
  func.func @transform_2(%arg0: i32) -> (i32, i32, i32) {
    %c0_i32 = arith.constant 0 : i32
    %c0_i32_0 = arith.constant 0 : i32
    %c0_i32_1 = arith.constant 0 : i32
    %c0_i32_2 = arith.constant 0 : i32
    return %c0_i32, %c0_i32_0, %c0_i32_1 : i32, i32, i32
  }
  func.func @transform_3(%arg0: i32) -> (i32, i32) {
    %c0_i32 = arith.constant 0 : i32
    %c0_i32_0 = arith.constant 0 : i32
    %c0_i32_1 = arith.constant 0 : i32
    return %c0_i32, %c0_i32_0 : i32, i32
  }
  func.func @transform_4(%arg0: i32) -> (i32, i32) {
    %c0_i32 = arith.constant 0 : i32
    %c0_i32_0 = arith.constant 0 : i32
    %c0_i32_1 = arith.constant 0 : i32
    return %c0_i32, %c0_i32_0 : i32, i32
  }
  func.func @transform_5(%arg0: i32) -> (i32, i32) {
    %c0_i32 = arith.constant 0 : i32
    %c0_i32_0 = arith.constant 0 : i32
    %c0_i32_1 = arith.constant 0 : i32
    return %c0_i32, %c0_i32_0 : i32, i32
  }
  func.func @transform_6(%arg0: i32) -> (i32, i32) {
    %c0_i32 = arith.constant 0 : i32
    %c0_i32_0 = arith.constant 0 : i32
    %c0_i32_1 = arith.constant 0 : i32
    return %c0_i32, %c0_i32_0 : i32, i32
  }
  func.func @transform_7(%arg0: i32) -> (i32, i32) {
    %c0_i32 = arith.constant 0 : i32
    %c0_i32_0 = arith.constant 0 : i32
    %c0_i32_1 = arith.constant 0 : i32
    return %c0_i32, %c0_i32_0 : i32, i32
  }
  func.func @transform_8(%arg0: i32) -> (i32, i32) {
    %c0_i32 = arith.constant 0 : i32
    %c0_i32_0 = arith.constant 0 : i32
    %c0_i32_1 = arith.constant 0 : i32
    return %c0_i32, %c0_i32_0 : i32, i32
  }
  func.func @transform_9(%arg0: i32) -> (i32, i32) {
    %c0_i32 = arith.constant 0 : i32
    %c0_i32_0 = arith.constant 0 : i32
    %c0_i32_1 = arith.constant 0 : i32
    return %c0_i32, %c0_i32_0 : i32, i32
  }
  func.func @transform_10(%arg0: i32) -> (i32, i32, i32) {
    %c0_i32 = arith.constant 0 : i32
    %c0_i32_0 = arith.constant 0 : i32
    %c0_i32_1 = arith.constant 0 : i32
    %c0_i32_2 = arith.constant 0 : i32
    return %c0_i32, %c0_i32_0, %c0_i32_1 : i32, i32, i32
  }
  func.func @transform_11(%arg0: i32) -> (i32, i32) {
    %c0_i32 = arith.constant 0 : i32
    %c0_i32_0 = arith.constant 0 : i32
    %c0_i32_1 = arith.constant 0 : i32
    return %c0_i32, %c0_i32_0 : i32, i32
  }
  func.func @transform_12(%arg0: i32) -> (i32, i32) {
    %c0_i32 = arith.constant 0 : i32
    %c0_i32_0 = arith.constant 0 : i32
    %c0_i32_1 = arith.constant 0 : i32
    return %c0_i32, %c0_i32_0 : i32, i32
  }
  func.func @transform_13(%arg0: i32) -> (i32, i32) {
    %c0_i32 = arith.constant 0 : i32
    %c0_i32_0 = arith.constant 0 : i32
    %c0_i32_1 = arith.constant 0 : i32
    return %c0_i32, %c0_i32_0 : i32, i32
  }
  func.func @transform_14(%arg0: i32) -> (i32, i32) {
    %c0_i32 = arith.constant 0 : i32
    %c0_i32_0 = arith.constant 0 : i32
    %c0_i32_1 = arith.constant 0 : i32
    return %c0_i32, %c0_i32_0 : i32, i32
  }
  func.func @transform_15(%arg0: i32) -> (i32, i32) {
    %c0_i32 = arith.constant 0 : i32
    %c0_i32_0 = arith.constant 0 : i32
    %c0_i32_1 = arith.constant 0 : i32
    return %c0_i32, %c0_i32_0 : i32, i32
  }
  func.func @transform_16(%arg0: i32) -> (i32, i32) {
    %c0_i32 = arith.constant 0 : i32
    %c0_i32_0 = arith.constant 0 : i32
    %c0_i32_1 = arith.constant 0 : i32
    return %c0_i32, %c0_i32_0 : i32, i32
  }
  func.func @transform_17(%arg0: i32) -> (i32, i32) {
    %c0_i32 = arith.constant 0 : i32
    %c0_i32_0 = arith.constant 0 : i32
    %c0_i32_1 = arith.constant 0 : i32
    return %c0_i32, %c0_i32_0 : i32, i32
  }
  func.func @transform_18(%arg0: i32) -> (i32, i32) {
    %c0_i32 = arith.constant 0 : i32
    %c0_i32_0 = arith.constant 0 : i32
    %c0_i32_1 = arith.constant 0 : i32
    return %c0_i32, %c0_i32_0 : i32, i32
  }
  func.func @transform_19(%arg0: i32) -> (i32, i32, i32) {
    %c0_i32 = arith.constant 0 : i32
    %c0_i32_0 = arith.constant 0 : i32
    %c0_i32_1 = arith.constant 0 : i32
    return %arg0, %c0_i32, %c0_i32_0 : i32, i32, i32
  }
}

</mosaic_0001>

<llo_original>
// kernel: tpu_custom_call.1
$region0: #{tpu_custom_call.1}
  #allocation0 [shape = 'u32[]', space=smem, size = 0x4, offset = 0x4, fixed_abs, tag = 'smem constant byte address 0x4 - core index']
  #allocation1 [shape = 'u32[72,128]{1,0:T(1,128)}', space=vmem, size = 0x9000, scoped, tag = 'internal scratch']
  #allocation2 [shape = 'f32[2,290]{1,0:T(2,128)}', space=vmem, size = 0xc00, scoped, tag = 'scratch operand']
  #allocation3 [shape = 'f32[18,256]{1,0:T(8,128)}', space=vmem, size = 0x6000, scoped, tag = 'scratch operand']
  %s0 = inlined_call_operand.vmem [shape: f32[2,4,256], index: 0, kind: input, shape index: {}]
  %s1 = inlined_call_operand.vmem [shape: f32[9,1,256], index: 1, kind: input, shape index: {}]
  %s2 = inlined_call_operand.vmem [shape: f32[9,256,16], index: 2, kind: input, shape index: {}]
  %s3 = inlined_call_operand.vmem [shape: f32[16,256], index: 3, kind: input, shape index: {}]
  %s4 = inlined_call_operand.vmem [shape: f32[2,4], index: 4, kind: input, shape index: {}]
  %s5 = inlined_call_operand.vmem [shape: f32[2,1], index: 5, kind: input, shape index: {}]
  %s6 = inlined_call_operand.vmem [shape: f32[2,4], index: 6, kind: input, shape index: {}]
  %s7 = inlined_call_operand.vmem [shape: f32[2,1], index: 7, kind: input, shape index: {}]
  %s8 = inlined_call_operand.vmem [shape: f32[2,18], index: 8, kind: input, shape index: {}]
  %s9 = inlined_call_operand.vmem [shape: f32[2,1], index: 9, kind: input, shape index: {}]
  %s10 = inlined_call_operand.vmem [shape: f32[9,2,2], index: 10, kind: input, shape index: {}]
  %s11 = inlined_call_operand.vmem [shape: f32[2,1], index: 11, kind: input, shape index: {}]
  %s12 = inlined_call_operand.vmem [shape: f32[2,18], index: 12, kind: input, shape index: {}]
  %s13 = inlined_call_operand.vmem [shape: f32[2,1], index: 13, kind: input, shape index: {}]
  %s14 = inlined_call_operand.vmem [shape: f32[2,18], index: 14, kind: input, shape index: {}]
  %s15 = inlined_call_operand.vmem [shape: f32[2,1], index: 15, kind: input, shape index: {}]
  %s16 = inlined_call_operand.vmem [shape: f32[4,2], index: 16, kind: input, shape index: {}]
  %s17 = inlined_call_operand.vmem [shape: f32[4,2], index: 17, kind: input, shape index: {}]
  %s18 = inlined_call_operand.vmem [shape: f32[4,1], index: 18, kind: input, shape index: {}]
  %s19 = inlined_call_operand.hbm [shape: f32[2,4,256], index: 19, kind: output, shape index: {}]
  %s20 = sld [smem:[#allocation0]]
  $region109: #{tpu_custom_call.1} parent=0
    _
  %s22 = ssub.s32 1, %s20
  %s23 = scalar_select 0, %s22, %s20
  $region1: #{tpu_custom_call.1} parent=0
    #allocation4 [shape = 'u8[8192]{0}', space=vmem, size = 0x2000, scoped, tag = 'output window, operand 0']
    #allocation5 [shape = 's32[2]{0}', space=sflag, size = 0x8, scoped, tag = 'scoped memory for tpu_custom_call.1']
    %24 = vsyncpa [#allocation5], 0
    %s25 = scalar_lea.sflag [#allocation5], 1
    %26 = vsyncpa %s25, 0
    loop: start=0, step=1, limit=4
    $region2: #{tpu_custom_call.1} parent=1 // loop_pre_header
      _
    $region3: #{tpu_custom_call.1} parent=1 // loop_header
      %s28 = sphi 0, %s32
      %p29 = scmp.ge.s32.totalorder %s28, 4
      %s38 = sphi 0, %s40
      %s41 = sphi 0, %s38
      %s42 = sphi 0, %s41
      %s58 = sphi 0, %s42
      %s62 = sphi 0, %s62
      %s64 = sphi 0, %s62
      %s65 = sphi 0, %s64
      %s79 = sphi 0, %s65
      %s83 = sphi 0, %s83
      %s85 = sphi 0, %s83
      %s86 = sphi 0, %s85
      %s100 = sphi 0, %s86
      %s104 = sphi 0, %s104
      %s106 = sphi 0, %s104
      %s107 = sphi 0, %s106
      %s121 = sphi 0, %s107
      %s125 = sphi 0, %s125
      %s127 = sphi 0, %s125
      %s128 = sphi 0, %s127
      %s142 = sphi 0, %s128
      %s146 = sphi 0, %s146
      %s148 = sphi 0, %s146
      %s149 = sphi 0, %s148
      %s163 = sphi 0, %s149
      %s167 = sphi 0, %s167
      %s169 = sphi 0, %s167
      %s170 = sphi 0, %s169
      %s184 = sphi 0, %s170
      %s188 = sphi 0, %s188
      %s190 = sphi 0, %s188
      %s191 = sphi 0, %s190
      %s205 = sphi 0, %s191
      %s209 = sphi 0, %s209
      %s211 = sphi 0, %s209
      %s212 = sphi 0, %s211
      %s226 = sphi 0, %s212
      %s230 = sphi 0, %s230
      %s232 = sphi 0, %s230
      %s233 = sphi 0, %s232
      %s247 = sphi 0, %s233
      %s251 = sphi 0, %s251
      %s253 = sphi 0, %s251
      %s254 = sphi 0, %s253
      %s268 = sphi 0, %s254
      %s272 = sphi 0, %s272
      %s274 = sphi 0, %s272
      %s275 = sphi 0, %s274
      %s289 = sphi 0, %s275
      %s293 = sphi 0, %s293
      %s295 = sphi 0, %s293
      %s296 = sphi 0, %s295
      %s310 = sphi 0, %s296
      %s314 = sphi 0, %s314
      %s316 = sphi 0, %s314
      %s317 = sphi 0, %s316
      %s331 = sphi 0, %s317
      %s335 = sphi 0, %s335
      %s337 = sphi 0, %s335
      %s338 = sphi 0, %s337
      %s352 = sphi 0, %s338
      %s356 = sphi 0, %s356
      %s358 = sphi 0, %s356
      %s359 = sphi 0, %s358
      %s373 = sphi 0, %s359
      %s377 = sphi 0, %s377
      %s379 = sphi 0, %s377
      %s380 = sphi 0, %s379
      %s394 = sphi 0, %s380
      %s398 = sphi 0, %s398
      %s400 = sphi 0, %s398
      %s401 = sphi 0, %s400
      %s415 = sphi 0, %s401
      %s419 = sphi 0, %s419
      %s421 = sphi 0, %s419
      %s422 = sphi 0, %s421
      %s436 = sphi 0, %s422
      %s442 = sphi 0, %s444
      %s445 = sphi 0, %s442
      %s446 = sphi 0, %s445
      %s462 = sphi 0, %s446
    $region4: #{tpu_custom_call.1} parent=1 // loop_header_branch
      %31 = sbr.rel (%p29) target = $region8
    $region5: #{tpu_custom_call.1} parent=1 // loop_body
      %s33 = ssub.s32 %s28, 1
      %s34 = ssub.s32 %s28, 2
      %s35 = sadd.s32 %s28, 1
      %s36 = ssub.s32 %s28, %s35
      %p37 = scmp.eq.s32.totalorder %s36, 0
      %s39 = sadd.s32 %s38, 1
      %s40 = scalar_select %p37, %s38, %s39
      %p43 = pneg %p37
      %p44 = scmp.eq.s32.totalorder %s28, 1
      %p45 = por %p43, %p44
      %p46 = scmp.ne.s32.totalorder %s38, %s41
      %p47 = scmp.eq.s32.totalorder %s28, 0
      %p48 = por %p46, %p47
      %p49 = scmp.ne.s32.totalorder %s38, %s41
      %p50 = scmp.eq.s32.totalorder %s33, 1
      %p51 = por %p49, %p50
      %p52 = scmp.ne.s32.totalorder %s41, %s42
      %p53 = scmp.eq.s32.totalorder %s33, 0
      %p54 = por %p52, %p53
      %p55 = scmp.ne.s32.totalorder %s41, %s42
      %p56 = scmp.eq.s32.totalorder %s34, 1
      %p57 = por %p55, %p56
      %p59 = scmp.ne.s32.totalorder %s42, %s58
      %p60 = scmp.eq.s32.totalorder %s34, 0
      %p61 = por %p59, %p60
      %s63 = sadd.s32 %s62, 1
      %p66 = scmp.eq.s32.totalorder %s28, 1
      %p67 = scmp.ne.s32.totalorder %s62, %s64
      %p68 = scmp.eq.s32.totalorder %s28, 0
      %p69 = por %p67, %p68
      %p70 = scmp.ne.s32.totalorder %s62, %s64
      %p71 = scmp.eq.s32.totalorder %s33, 1
      %p72 = por %p70, %p71
      %p73 = scmp.ne.s32.totalorder %s64, %s65
      %p74 = scmp.eq.s32.totalorder %s33, 0
      %p75 = por %p73, %p74
      %p76 = scmp.ne.s32.totalorder %s64, %s65
      %p77 = scmp.eq.s32.totalorder %s34, 1
      %p78 = por %p76, %p77
      %p80 = scmp.ne.s32.totalorder %s65, %s79
      %p81 = scmp.eq.s32.totalorder %s34, 0
      %p82 = por %p80, %p81
      %s84 = sadd.s32 %s83, 1
      %p87 = scmp.eq.s32.totalorder %s28, 1
      %p88 = scmp.ne.s32.totalorder %s83, %s85
      %p89 = scmp.eq.s32.totalorder %s28, 0
      %p90 = por %p88, %p89
      %p91 = scmp.ne.s32.totalorder %s83, %s85
      %p92 = scmp.eq.s32.totalorder %s33, 1
      %p93 = por %p91, %p92
      %p94 = scmp.ne.s32.totalorder %s85, %s86
      %p95 = scmp.eq.s32.totalorder %s33, 0
      %p96 = por %p94, %p95
      %p97 = scmp.ne.s32.totalorder %s85, %s86
      %p98 = scmp.eq.s32.totalorder %s34, 1
      %p99 = por %p97, %p98
      %p101 = scmp.ne.s32.totalorder %s86, %s100
      %p102 = scmp.eq.s32.totalorder %s34, 0
      %p103 = por %p101, %p102
      %s105 = sadd.s32 %s104, 1
      %p108 = scmp.eq.s32.totalorder %s28, 1
      %p109 = scmp.ne.s32.totalorder %s104, %s106
      %p110 = scmp.eq.s32.totalorder %s28, 0
      %p111 = por %p109, %p110
      %p112 = scmp.ne.s32.totalorder %s104, %s106
      %p113 = scmp.eq.s32.totalorder %s33, 1
      %p114 = por %p112, %p113
      %p115 = scmp.ne.s32.totalorder %s106, %s107
      %p116 = scmp.eq.s32.totalorder %s33, 0
      %p117 = por %p115, %p116
      %p118 = scmp.ne.s32.totalorder %s106, %s107
      %p119 = scmp.eq.s32.totalorder %s34, 1
      %p120 = por %p118, %p119
      %p122 = scmp.ne.s32.totalorder %s107, %s121
      %p123 = scmp.eq.s32.totalorder %s34, 0
      %p124 = por %p122, %p123
      %s126 = sadd.s32 %s125, 1
      %p129 = scmp.eq.s32.totalorder %s28, 1
      %p130 = scmp.ne.s32.totalorder %s125, %s127
      %p131 = scmp.eq.s32.totalorder %s28, 0
      %p132 = por %p130, %p131
      %p133 = scmp.ne.s32.totalorder %s125, %s127
      %p134 = scmp.eq.s32.totalorder %s33, 1
      %p135 = por %p133, %p134
      %p136 = scmp.ne.s32.totalorder %s127, %s128
      %p137 = scmp.eq.s32.totalorder %s33, 0
      %p138 = por %p136, %p137
      %p139 = scmp.ne.s32.totalorder %s127, %s128
      %p140 = scmp.eq.s32.totalorder %s34, 1
      %p141 = por %p139, %p140
      %p143 = scmp.ne.s32.totalorder %s128, %s142
      %p144 = scmp.eq.s32.totalorder %s34, 0
      %p145 = por %p143, %p144
      %s147 = sadd.s32 %s146, 1
      %p150 = scmp.eq.s32.totalorder %s28, 1
      %p151 = scmp.ne.s32.totalorder %s146, %s148
      %p152 = scmp.eq.s32.totalorder %s28, 0
      %p153 = por %p151, %p152
      %p154 = scmp.ne.s32.totalorder %s146, %s148
      %p155 = scmp.eq.s32.totalorder %s33, 1
      %p156 = por %p154, %p155
      %p157 = scmp.ne.s32.totalorder %s148, %s149
      %p158 = scmp.eq.s32.totalorder %s33, 0
      %p159 = por %p157, %p158
      %p160 = scmp.ne.s32.totalorder %s148, %s149
      %p161 = scmp.eq.s32.totalorder %s34, 1
      %p162 = por %p160, %p161
      %p164 = scmp.ne.s32.totalorder %s149, %s163
      %p165 = scmp.eq.s32.totalorder %s34, 0
      %p166 = por %p164, %p165
      %s168 = sadd.s32 %s167, 1
      %p171 = scmp.eq.s32.totalorder %s28, 1
      %p172 = scmp.ne.s32.totalorder %s167, %s169
      %p173 = scmp.eq.s32.totalorder %s28, 0
      %p174 = por %p172, %p173
      %p175 = scmp.ne.s32.totalorder %s167, %s169
      %p176 = scmp.eq.s32.totalorder %s33, 1
      %p177 = por %p175, %p176
      %p178 = scmp.ne.s32.totalorder %s169, %s170
      %p179 = scmp.eq.s32.totalorder %s33, 0
      %p180 = por %p178, %p179
      %p181 = scmp.ne.s32.totalorder %s169, %s170
      %p182 = scmp.eq.s32.totalorder %s34, 1
      %p183 = por %p181, %p182
      %p185 = scmp.ne.s32.totalorder %s170, %s184
      %p186 = scmp.eq.s32.totalorder %s34, 0
      %p187 = por %p185, %p186
      %s189 = sadd.s32 %s188, 1
      %p192 = scmp.eq.s32.totalorder %s28, 1
      %p193 = scmp.ne.s32.totalorder %s188, %s190
      %p194 = scmp.eq.s32.totalorder %s28, 0
      %p195 = por %p193, %p194
      %p196 = scmp.ne.s32.totalorder %s188, %s190
      %p197 = scmp.eq.s32.totalorder %s33, 1
      %p198 = por %p196, %p197
      %p199 = scmp.ne.s32.totalorder %s190, %s191
      %p200 = scmp.eq.s32.totalorder %s33, 0
      %p201 = por %p199, %p200
      %p202 = scmp.ne.s32.totalorder %s190, %s191
      %p203 = scmp.eq.s32.totalorder %s34, 1
      %p204 = por %p202, %p203
      %p206 = scmp.ne.s32.totalorder %s191, %s205
      %p207 = scmp.eq.s32.totalorder %s34, 0
      %p208 = por %p206, %p207
      %s210 = sadd.s32 %s209, 1
      %p213 = scmp.eq.s32.totalorder %s28, 1
      %p214 = scmp.ne.s32.totalorder %s209, %s211
      %p215 = scmp.eq.s32.totalorder %s28, 0
      %p216 = por %p214, %p215
      %p217 = scmp.ne.s32.totalorder %s209, %s211
      %p218 = scmp.eq.s32.totalorder %s33, 1
      %p219 = por %p217, %p218
      %p220 = scmp.ne.s32.totalorder %s211, %s212
      %p221 = scmp.eq.s32.totalorder %s33, 0
      %p222 = por %p220, %p221
      %p223 = scmp.ne.s32.totalorder %s211, %s212
      %p224 = scmp.eq.s32.totalorder %s34, 1
      %p225 = por %p223, %p224
      %p227 = scmp.ne.s32.totalorder %s212, %s226
      %p228 = scmp.eq.s32.totalorder %s34, 0
      %p229 = por %p227, %p228
      %s231 = sadd.s32 %s230, 1
      %p234 = scmp.eq.s32.totalorder %s28, 1
      %p235 = scmp.ne.s32.totalorder %s230, %s232
      %p236 = scmp.eq.s32.totalorder %s28, 0
      %p237 = por %p235, %p236
      %p238 = scmp.ne.s32.totalorder %s230, %s232
      %p239 = scmp.eq.s32.totalorder %s33, 1
      %p240 = por %p238, %p239
      %p241 = scmp.ne.s32.totalorder %s232, %s233
      %p242 = scmp.eq.s32.totalorder %s33, 0
      %p243 = por %p241, %p242
      %p244 = scmp.ne.s32.totalorder %s232, %s233
      %p245 = scmp.eq.s32.totalorder %s34, 1
      %p246 = por %p244, %p245
      %p248 = scmp.ne.s32.totalorder %s233, %s247
      %p249 = scmp.eq.s32.totalorder %s34, 0
      %p250 = por %p248, %p249
      %s252 = sadd.s32 %s251, 1
      %p255 = scmp.eq.s32.totalorder %s28, 1
      %p256 = scmp.ne.s32.totalorder %s251, %s253
      %p257 = scmp.eq.s32.totalorder %s28, 0
      %p258 = por %p256, %p257
      %p259 = scmp.ne.s32.totalorder %s251, %s253
      %p260 = scmp.eq.s32.totalorder %s33, 1
      %p261 = por %p259, %p260
      %p262 = scmp.ne.s32.totalorder %s253, %s254
      %p263 = scmp.eq.s32.totalorder %s33, 0
      %p264 = por %p262, %p263
      %p265 = scmp.ne.s32.totalorder %s253, %s254
      %p266 = scmp.eq.s32.totalorder %s34, 1
      %p267 = por %p265, %p266
      %p269 = scmp.ne.s32.totalorder %s254, %s268
      %p270 = scmp.eq.s32.totalorder %s34, 0
      %p271 = por %p269, %p270
      %s273 = sadd.s32 %s272, 1
      %p276 = scmp.eq.s32.totalorder %s28, 1
      %p277 = scmp.ne.s32.totalorder %s272, %s274
      %p278 = scmp.eq.s32.totalorder %s28, 0
      %p279 = por %p277, %p278
      %p280 = scmp.ne.s32.totalorder %s272, %s274
      %p281 = scmp.eq.s32.totalorder %s33, 1
      %p282 = por %p280, %p281
      %p283 = scmp.ne.s32.totalorder %s274, %s275
      %p284 = scmp.eq.s32.totalorder %s33, 0
      %p285 = por %p283, %p284
      %p286 = scmp.ne.s32.totalorder %s274, %s275
      %p287 = scmp.eq.s32.totalorder %s34, 1
      %p288 = por %p286, %p287
      %p290 = scmp.ne.s32.totalorder %s275, %s289
      %p291 = scmp.eq.s32.totalorder %s34, 0
      %p292 = por %p290, %p291
      %s294 = sadd.s32 %s293, 1
      %p297 = scmp.eq.s32.totalorder %s28, 1
      %p298 = scmp.ne.s32.totalorder %s293, %s295
      %p299 = scmp.eq.s32.totalorder %s28, 0
      %p300 = por %p298, %p299
      %p301 = scmp.ne.s32.totalorder %s293, %s295
      %p302 = scmp.eq.s32.totalorder %s33, 1
      %p303 = por %p301, %p302
      %p304 = scmp.ne.s32.totalorder %s295, %s296
      %p305 = scmp.eq.s32.totalorder %s33, 0
      %p306 = por %p304, %p305
      %p307 = scmp.ne.s32.totalorder %s295, %s296
      %p308 = scmp.eq.s32.totalorder %s34, 1
      %p309 = por %p307, %p308
      %p311 = scmp.ne.s32.totalorder %s296, %s310
      %p312 = scmp.eq.s32.totalorder %s34, 0
      %p313 = por %p311, %p312
      %s315 = sadd.s32 %s314, 1
      %p318 = scmp.eq.s32.totalorder %s28, 1
      %p319 = scmp.ne.s32.totalorder %s314, %s316
      %p320 = scmp.eq.s32.totalorder %s28, 0
      %p321 = por %p319, %p320
      %p322 = scmp.ne.s32.totalorder %s314, %s316
      %p323 = scmp.eq.s32.totalorder %s33, 1
      %p324 = por %p322, %p323
      %p325 = scmp.ne.s32.totalorder %s316, %s317
      %p326 = scmp.eq.s32.totalorder %s33, 0
      %p327 = por %p325, %p326
      %p328 = scmp.ne.s32.totalorder %s316, %s317
      %p329 = scmp.eq.s32.totalorder %s34, 1
      %p330 = por %p328, %p329
      %p332 = scmp.ne.s32.totalorder %s317, %s331
      %p333 = scmp.eq.s32.totalorder %s34, 0
      %p334 = por %p332, %p333
      %s336 = sadd.s32 %s335, 1
      %p339 = scmp.eq.s32.totalorder %s28, 1
      %p340 = scmp.ne.s32.totalorder %s335, %s337
      %p341 = scmp.eq.s32.totalorder %s28, 0
      %p342 = por %p340, %p341
      %p343 = scmp.ne.s32.totalorder %s335, %s337
      %p344 = scmp.eq.s32.totalorder %s33, 1
      %p345 = por %p343, %p344
      %p346 = scmp.ne.s32.totalorder %s337, %s338
      %p347 = scmp.eq.s32.totalorder %s33, 0
      %p348 = por %p346, %p347
      %p349 = scmp.ne.s32.totalorder %s337, %s338
      %p350 = scmp.eq.s32.totalorder %s34, 1
      %p351 = por %p349, %p350
      %p353 = scmp.ne.s32.totalorder %s338, %s352
      %p354 = scmp.eq.s32.totalorder %s34, 0
      %p355 = por %p353, %p354
      %s357 = sadd.s32 %s356, 1
      %p360 = scmp.eq.s32.totalorder %s28, 1
      %p361 = scmp.ne.s32.totalorder %s356, %s358
      %p362 = scmp.eq.s32.totalorder %s28, 0
      %p363 = por %p361, %p362
      %p364 = scmp.ne.s32.totalorder %s356, %s358
      %p365 = scmp.eq.s32.totalorder %s33, 1
      %p366 = por %p364, %p365
      %p367 = scmp.ne.s32.totalorder %s358, %s359
      %p368 = scmp.eq.s32.totalorder %s33, 0
      %p369 = por %p367, %p368
      %p370 = scmp.ne.s32.totalorder %s358, %s359
      %p371 = scmp.eq.s32.totalorder %s34, 1
      %p372 = por %p370, %p371
      %p374 = scmp.ne.s32.totalorder %s359, %s373
      %p375 = scmp.eq.s32.totalorder %s34, 0
      %p376 = por %p374, %p375
      %s378 = sadd.s32 %s377, 1
      %p381 = scmp.eq.s32.totalorder %s28, 1
      %p382 = scmp.ne.s32.totalorder %s377, %s379
      %p383 = scmp.eq.s32.totalorder %s28, 0
      %p384 = por %p382, %p383
      %p385 = scmp.ne.s32.totalorder %s377, %s379
      %p386 = scmp.eq.s32.totalorder %s33, 1
      %p387 = por %p385, %p386
      %p388 = scmp.ne.s32.totalorder %s379, %s380
      %p389 = scmp.eq.s32.totalorder %s33, 0
      %p390 = por %p388, %p389
      %p391 = scmp.ne.s32.totalorder %s379, %s380
      %p392 = scmp.eq.s32.totalorder %s34, 1
      %p393 = por %p391, %p392
      %p395 = scmp.ne.s32.totalorder %s380, %s394
      %p396 = scmp.eq.s32.totalorder %s34, 0
      %p397 = por %p395, %p396
      %s399 = sadd.s32 %s398, 1
      %p402 = scmp.eq.s32.totalorder %s28, 1
      %p403 = scmp.ne.s32.totalorder %s398, %s400
      %p404 = scmp.eq.s32.totalorder %s28, 0
      %p405 = por %p403, %p404
      %p406 = scmp.ne.s32.totalorder %s398, %s400
      %p407 = scmp.eq.s32.totalorder %s33, 1
      %p408 = por %p406, %p407
      %p409 = scmp.ne.s32.totalorder %s400, %s401
      %p410 = scmp.eq.s32.totalorder %s33, 0
      %p411 = por %p409, %p410
      %p412 = scmp.ne.s32.totalorder %s400, %s401
      %p413 = scmp.eq.s32.totalorder %s34, 1
      %p414 = por %p412, %p413
      %p416 = scmp.ne.s32.totalorder %s401, %s415
      %p417 = scmp.eq.s32.totalorder %s34, 0
      %p418 = por %p416, %p417
      %s420 = sadd.s32 %s419, 1
      %p423 = scmp.eq.s32.totalorder %s28, 1
      %p424 = scmp.ne.s32.totalorder %s419, %s421
      %p425 = scmp.eq.s32.totalorder %s28, 0
      %p426 = por %p424, %p425
      %p427 = scmp.ne.s32.totalorder %s419, %s421
      %p428 = scmp.eq.s32.totalorder %s33, 1
      %p429 = por %p427, %p428
      %p430 = scmp.ne.s32.totalorder %s421, %s422
      %p431 = scmp.eq.s32.totalorder %s33, 0
      %p432 = por %p430, %p431
      %p433 = scmp.ne.s32.totalorder %s421, %s422
      %p434 = scmp.eq.s32.totalorder %s34, 1
      %p435 = por %p433, %p434
      %p437 = scmp.ne.s32.totalorder %s422, %s436
      %p438 = scmp.eq.s32.totalorder %s34, 0
      %p439 = por %p437, %p438
      %s440 = ssub.s32 %s28, %s35
      %p441 = scmp.eq.s32.totalorder %s440, 0
      %s443 = sadd.s32 %s442, 1
      %s444 = scalar_select %p441, %s442, %s443
      %p447 = pneg %p441
      %p448 = scmp.eq.s32.totalorder %s28, 1
      %p449 = por %p447, %p448
      %p450 = scmp.ne.s32.totalorder %s442, %s445
      %p451 = scmp.eq.s32.totalorder %s28, 0
      %p452 = por %p450, %p451
      %p453 = scmp.ne.s32.totalorder %s442, %s445
      %p454 = scmp.eq.s32.totalorder %s33, 1
      %p455 = por %p453, %p454
      %p456 = scmp.ne.s32.totalorder %s445, %s446
      %p457 = scmp.eq.s32.totalorder %s33, 0
      %p458 = por %p456, %p457
      %p459 = scmp.ne.s32.totalorder %s445, %s446
      %p460 = scmp.eq.s32.totalorder %s34, 1
      %p461 = por %p459, %p460
      %p463 = scmp.ne.s32.totalorder %s446, %s462
      %p464 = scmp.eq.s32.totalorder %s34, 0
      %p465 = por %p463, %p464
      %p466 = scmp.le.s32.totalorder 1, %s28
      %p467 = scmp.lt.s32.totalorder %s28, 3
      %p468 = pnand %p466, %p467
      %p469 = pneg %p468
      // Predicated region
      $region9: #{tpu_custom_call.1} parent=5 // pred_check
        _
      $region10: #{tpu_custom_call.1} parent=5 // pred_check_branch
        %471 = sbr.rel (%p468) target = $region12
      $region11: #{tpu_custom_call.1} parent=5 // pred_region
        %s472 = ssub.s32 %s28, 1
        // Predicated region
        $region13: #{tpu_custom_call.1} parent=11 // pred_check
          %p473 = pneg %p75
        $region14: #{tpu_custom_call.1} parent=11 // pred_check_branch
          %475 = sbr.rel (%p473) target = $region16
        $region15: #{tpu_custom_call.1} parent=11 // pred_region
          _
        $region16: #{tpu_custom_call.1} parent=11 // pred_fallthru
          _
        // Predicated region
        $region17: #{tpu_custom_call.1} parent=11 // pred_check
          %p476 = pneg %p96
        $region18: #{tpu_custom_call.1} parent=11 // pred_check_branch
          %478 = sbr.rel (%p476) target = $region20
        $region19: #{tpu_custom_call.1} parent=11 // pred_region
          _
        $region20: #{tpu_custom_call.1} parent=11 // pred_fallthru
          _
        // Predicated region
        $region21: #{tpu_custom_call.1} parent=11 // pred_check
          %p479 = pneg %p117
        $region22: #{tpu_custom_call.1} parent=11 // pred_check_branch
          %481 = sbr.rel (%p479) target = $region24
        $region23: #{tpu_custom_call.1} parent=11 // pred_region
          _
        $region24: #{tpu_custom_call.1} parent=11 // pred_fallthru
          _
        // Predicated region
        $region25: #{tpu_custom_call.1} parent=11 // pred_check
          %p482 = pneg %p138
        $region26: #{tpu_custom_call.1} parent=11 // pred_check_branch
          %484 = sbr.rel (%p482) target = $region28
        $region27: #{tpu_custom_call.1} parent=11 // pred_region
          _
        $region28: #{tpu_custom_call.1} parent=11 // pred_fallthru
          _
        // Predicated region
        $region29: #{tpu_custom_call.1} parent=11 // pred_check
          %p485 = pneg %p159
        $region30: #{tpu_custom_call.1} parent=11 // pred_check_branch
          %487 = sbr.rel (%p485) target = $region32
        $region31: #{tpu_custom_call.1} parent=11 // pred_region
          _
        $region32: #{tpu_custom_call.1} parent=11 // pred_fallthru
          _
        // Predicated region
        $region33: #{tpu_custom_call.1} parent=11 // pred_check
          %p488 = pneg %p180
        $region34: #{tpu_custom_call.1} parent=11 // pred_check_branch
          %490 = sbr.rel (%p488) target = $region36
        $region35: #{tpu_custom_call.1} parent=11 // pred_region
          _
        $region36: #{tpu_custom_call.1} parent=11 // pred_fallthru
          _
        // Predicated region
        $region37: #{tpu_custom_call.1} parent=11 // pred_check
          %p491 = pneg %p201
        $region38: #{tpu_custom_call.1} parent=11 // pred_check_branch
          %493 = sbr.rel (%p491) target = $region40
        $region39: #{tpu_custom_call.1} parent=11 // pred_region
          _
        $region40: #{tpu_custom_call.1} parent=11 // pred_fallthru
          _
        // Predicated region
        $region41: #{tpu_custom_call.1} parent=11 // pred_check
          %p494 = pneg %p222
        $region42: #{tpu_custom_call.1} parent=11 // pred_check_branch
          %496 = sbr.rel (%p494) target = $region44
        $region43: #{tpu_custom_call.1} parent=11 // pred_region
          _
        $region44: #{tpu_custom_call.1} parent=11 // pred_fallthru
          _
        // Predicated region
        $region45: #{tpu_custom_call.1} parent=11 // pred_check
          %p497 = pneg %p243
        $region46: #{tpu_custom_call.1} parent=11 // pred_check_branch
          %499 = sbr.rel (%p497) target = $region48
        $region47: #{tpu_custom_call.1} parent=11 // pred_region
          _
        $region48: #{tpu_custom_call.1} parent=11 // pred_fallthru
          _
        // Predicated region
        $region49: #{tpu_custom_call.1} parent=11 // pred_check
          %p500 = pneg %p264
        $region50: #{tpu_custom_call.1} parent=11 // pred_check_branch
          %502 = sbr.rel (%p500) target = $region52
        $region51: #{tpu_custom_call.1} parent=11 // pred_region
          _
        $region52: #{tpu_custom_call.1} parent=11 // pred_fallthru
          _
        // Predicated region
        $region53: #{tpu_custom_call.1} parent=11 // pred_check
          %p503 = pneg %p285
        $region54: #{tpu_custom_call.1} parent=11 // pred_check_branch
          %505 = sbr.rel (%p503) target = $region56
        $region55: #{tpu_custom_call.1} parent=11 // pred_region
          _
        $region56: #{tpu_custom_call.1} parent=11 // pred_fallthru
          _
        // Predicated region
        $region57: #{tpu_custom_call.1} parent=11 // pred_check
          %p506 = pneg %p306
        $region58: #{tpu_custom_call.1} parent=11 // pred_check_branch
          %508 = sbr.rel (%p506) target = $region60
        $region59: #{tpu_custom_call.1} parent=11 // pred_region
          _
        $region60: #{tpu_custom_call.1} parent=11 // pred_fallthru
          _
        // Predicated region
        $region61: #{tpu_custom_call.1} parent=11 // pred_check
          %p509 = pneg %p327
        $region62: #{tpu_custom_call.1} parent=11 // pred_check_branch
          %511 = sbr.rel (%p509) target = $region64
        $region63: #{tpu_custom_call.1} parent=11 // pred_region
          _
        $region64: #{tpu_custom_call.1} parent=11 // pred_fallthru
          _
        // Predicated region
        $region65: #{tpu_custom_call.1} parent=11 // pred_check
          %p512 = pneg %p348
        $region66: #{tpu_custom_call.1} parent=11 // pred_check_branch
          %514 = sbr.rel (%p512) target = $region68
        $region67: #{tpu_custom_call.1} parent=11 // pred_region
          _
        $region68: #{tpu_custom_call.1} parent=11 // pred_fallthru
          _
        // Predicated region
        $region69: #{tpu_custom_call.1} parent=11 // pred_check
          %p515 = pneg %p369
        $region70: #{tpu_custom_call.1} parent=11 // pred_check_branch
          %517 = sbr.rel (%p515) target = $region72
        $region71: #{tpu_custom_call.1} parent=11 // pred_region
          _
        $region72: #{tpu_custom_call.1} parent=11 // pred_fallthru
          _
        // Predicated region
        $region73: #{tpu_custom_call.1} parent=11 // pred_check
          %p518 = pneg %p390
        $region74: #{tpu_custom_call.1} parent=11 // pred_check_branch
          %520 = sbr.rel (%p518) target = $region76
        $region75: #{tpu_custom_call.1} parent=11 // pred_region
          _
        $region76: #{tpu_custom_call.1} parent=11 // pred_fallthru
          _
        // Predicated region
        $region77: #{tpu_custom_call.1} parent=11 // pred_check
          %p521 = pneg %p411
        $region78: #{tpu_custom_call.1} parent=11 // pred_check_branch
          %523 = sbr.rel (%p521) target = $region80
        $region79: #{tpu_custom_call.1} parent=11 // pred_region
          _
        $region80: #{tpu_custom_call.1} parent=11 // pred_fallthru
          _
        // Predicated region
        $region81: #{tpu_custom_call.1} parent=11 // pred_check
          %p524 = pneg %p432
        $region82: #{tpu_custom_call.1} parent=11 // pred_check_branch
          %526 = sbr.rel (%p524) target = $region84
        $region83: #{tpu_custom_call.1} parent=11 // pred_region
          _
        $region84: #{tpu_custom_call.1} parent=11 // pred_fallthru
          _
      $region12: #{tpu_custom_call.1} parent=5 // pred_fallthru
        _
      %p527 = scmp.lt.s32.totalorder %s28, 2
      // Predicated region
      $region85: #{tpu_custom_call.1} parent=5 // pred_check
        %p528 = pneg %p527
      $region86: #{tpu_custom_call.1} parent=5 // pred_check_branch
        %530 = sbr.rel (%p528) target = $region88
      $region87: #{tpu_custom_call.1} parent=5 // pred_region
        // Predicated region
        $region89: #{tpu_custom_call.1} parent=87 // pred_check
          %p531 = pneg %p48
        $region90: #{tpu_custom_call.1} parent=87 // pred_check_branch
          %533 = sbr.rel (%p531) target = $region92
        $region91: #{tpu_custom_call.1} parent=87 // pred_region
          %p534 = scmp.lt.s32.totalorder %s28, 1
          %s535 = scalar_select %p534, %s28, 1
          %s536 = smul.addr %s535, 2
          %s537 = smul.addr %s536, 4
          %s538 = scalar_lea.vmem %s0, %s537
        $region92: #{tpu_custom_call.1} parent=87 // pred_fallthru
          _
      $region88: #{tpu_custom_call.1} parent=5 // pred_fallthru
        _
      %p539 = scmp.le.s32.totalorder 1, %s28
      %p540 = scmp.lt.s32.totalorder %s28, 3
      %p541 = pnand %p539, %p540
      %p542 = pneg %p541
      // Predicated region
      $region93: #{tpu_custom_call.1} parent=5 // pred_check
        _
      $region94: #{tpu_custom_call.1} parent=5 // pred_check_branch
        %544 = sbr.rel (%p541) target = $region96
      $region95: #{tpu_custom_call.1} parent=5 // pred_region
        %s545 = ssub.s32 %s28, 1
        %p546 = scmp.lt.s32.totalorder %s33, 1
        %s547 = scalar_select %p546, %s33, 1
        %s548 = smul.addr %s547, 2
        %s549 = smul.addr %s548, 4
        %s550 = scalar_lea.vmem %s0, %s549
        %p551 = pneg %p54
        %p552 = pneg %p51
        %p553 = pneg %p75
        %p554 = pneg %p72
        %p555 = pneg %p96
        %p556 = pneg %p93
        %p557 = pneg %p117
        %p558 = pneg %p114
        %p559 = pneg %p138
        %p560 = pneg %p135
        %p561 = pneg %p159
        %p562 = pneg %p156
        %p563 = pneg %p180
        %p564 = pneg %p177
        %p565 = pneg %p201
        %p566 = pneg %p198
        %p567 = pneg %p222
        %p568 = pneg %p219
        %p569 = pneg %p243
        %p570 = pneg %p240
        %p571 = pneg %p264
        %p572 = pneg %p261
        %p573 = pneg %p285
        %p574 = pneg %p282
        %p575 = pneg %p306
        %p576 = pneg %p303
        %p577 = pneg %p327
        %p578 = pneg %p324
        %p579 = pneg %p348
        %p580 = pneg %p345
        %p581 = pneg %p369
        %p582 = pneg %p366
        %p583 = pneg %p390
        %p584 = pneg %p387
        %p585 = pneg %p411
        %p586 = pneg %p408
        %p587 = pneg %p432
        %p588 = pneg %p429
        %p589 = pneg %p458
        %p590 = pneg %p455
        %s591 = sand.u32 %s445, 1
        %s592 = scalar_lea.sflag [#allocation5], %s591
        %s593 = sand.u32 %s445, 1
        %s594 = smul.addr %s593, 8
        %s595 = scalar_lea.vmem [#allocation4], %s594
        %p596 = scmp.lt.s32.totalorder %s33, 1
        %s597 = scalar_select %p596, %s33, 1
        %s598 = smul.addr %s597, 2
        %s599 = smul.addr %s598, 4
        %s600 = scalar_lea.vmem %s0, %s599
        %vm601 = vcmask 132096
        %602 = vst.msk [vmem:[#allocation2] sm:$0x3] %vm601, 0.0
        %vm603 = vcmask 271496
        %604 = vst.msk [vmem:[#allocation2 + $0x4] sm:$0x3] %vm603, 0.0
        %v605 = vld [vmem:[%s600] sm:$0xff]
        %v606 = vld [vmem:[%s4] sm:$0x3]
        %v607 = vld [vmem:[%s5] sm:$0x3]
        %609 = vset.pattern.permute.xlu0 0
        %610 = vperm.xlu0 %609, %v607
        %v611 = vpop.permute.xlu0 %610
        %614 = vst [vmem:[#allocation1] ss:$2 sm:$0xff] %v605
        %v615 = vld.sshfl [vmem:[#allocation1] sm:$0xff pattern:$0x75316420]
        %v616 = vld.sshfl [vmem:[#allocation1 + $0x8] sm:$0xff pattern:$0x75316420]
        %vm617 = vcmask 31744
        %v619 = vsel %vm617, %v606, 0
        %vm621 = vcmask 1043456
        %v622 = vsel %vm621, %v615, 0
        %v624 = vsel %vm621, %v616, 0
        %626 = vmatpush.msra.mxu0 0.0
        %627 = vmatpush.msra.mxu0 0.0
        %628 = vmatpush.msra.mxu0 0.0
        %629 = vmatpush.msra.mxu0 0.0
        %630 = vmatpush.msra.mxu0 0.0
        %631 = vmatpush.msra.mxu0 0.0
        %632 = vmatpush.msra.mxu0 0.0
        %633 = vmatpush.msra.mxu0 0.0
        %634 = vmatpush.msra.mxu0 0.0
        %635 = vmatpush.msra.mxu0 0.0
        %636 = vmatpush.msra.mxu0 0.0
        %637 = vmatpush.msra.mxu0 0.0
        %638 = vmatpush.msra.mxu0 0.0
        %639 = vmatpush.msra.mxu0 0.0
        %640 = vmatpush.msra.mxu0 0.0
        %641 = vmatpush.msra.mxu0 %v622
        %642 = vmatmul.f32.gmra.mxu0 %v619
        %v643 = vpop.f32.mrf.mxu0
        %v644 = vadd.f32 %v611, %v643
        %645 = vdwg.mxu0
        %646 = vmatpush.msra.mxu0 0.0
        %647 = vmatpush.msra.mxu0 0.0
        %648 = vmatpush.msra.mxu0 0.0
        %649 = vmatpush.msra.mxu0 0.0
        %650 = vmatpush.msra.mxu0 0.0
        %651 = vmatpush.msra.mxu0 0.0
        %652 = vmatpush.msra.mxu0 0.0
        %653 = vmatpush.msra.mxu0 0.0
        %654 = vmatpush.msra.mxu0 0.0
        %655 = vmatpush.msra.mxu0 0.0
        %656 = vmatpush.msra.mxu0 0.0
        %657 = vmatpush.msra.mxu0 0.0
        %658 = vmatpush.msra.mxu0 0.0
        %659 = vmatpush.msra.mxu0 0.0
        %660 = vmatpush.msra.mxu0 0.0
        %661 = vmatpush.msra.mxu0 %v624
        %662 = vmatmul.f32.gmra.mxu0 %v619
        %v663 = vpop.f32.mrf.mxu0
        %v664 = vadd.f32 %v611, %v663
        %665 = vdwg.mxu0
        %v666 = vmax.f32 %v644, 0.0
        %v667 = vmax.f32 %v664, 0.0
        %v670 = vrot.slane %v667, 6
        %vm671 = vcmask 1041408
        %v672 = vsel %vm671, %v666, %v670
        %673 = vrot.lane.b32.xlu0 %v672, 17
        %v674 = vpop.permute.xlu0 %673
        %v675 = vrot.slane %v674, 6
        %vm676 = vcmask 138240
        %v677 = vsel %vm676, %v675, %v674
        %vm679 = vcmask 1041544
        %vm680 = vcmask 1043458
        %vm681 = vmor %vm680, %vm679
        %vm682 = vcmask 136196
        %vm683 = vmor %vm682, %vm681
        %684 = vst.msk [vmem:[#allocation2] sm:$0x3f] %vm683, %v677
        %v685 = vld [vmem:[#allocation2] sm:$0xf]
        %v686 = vld [vmem:[%s1] sm:$0x3]
        %v688 = vperm.slane %v686, 0
        %v689 = vperm.slane %v686, 1
        %v690 = vrot.slane %v689, 6
        %v691 = vsel %vm671, %v688, %v690
        %v693 = vmul.f32 %v685, %v691
        %695 = vst [vmem:[#allocation1] ss:$4 sm:$0xff] %v693
        %v696 = vld.sshfl [vmem:[#allocation1] sm:$0xff pattern:$0x73625140]
        %v697 = vld.sshfl [vmem:[#allocation1 + $0x8] sm:$0xff pattern:$0x73625140]
        %700 = vst [vmem:[#allocation3] sm:$0x3] %v696
        %701 = vst [vmem:[#allocation3 + $0x8] sm:$0x3] %v697
        %v702 = vld [vmem:[#allocation2] sm:$0x3f]
        %s703 = scalar_lea.vmem %s1, 2
        %v704 = vld [vmem:[%s703] sm:$0x3]
        %v706 = vperm.slane %v704, 0
        %v707 = vperm.slane %v704, 1
        %v708 = vrot.slane %v707, 6
        %v709 = vsel %vm671, %v706, %v708
        %710 = vrot.lane.b32.xlu0 %v709, 1
        %v711 = vpop.permute.xlu0 %710
        %v712 = vrot.slane %v711, 6
        %vm713 = vcmask 7168
        %v714 = vsel %vm713, %v712, %v711
        %v716 = vmul.f32 %v702, %v714
        %s718 = scalar_lea.vmem [#allocation1], 1
        %719 = vst [vmem:[%s718] ss:$4 sm:$0xff] %v716
        %v720 = vld.sshfl [vmem:[#allocation1] sm:$0xff pattern:$0x73625140]
        %v721 = vld.sshfl [vmem:[#allocation1 + $0x8] sm:$0xff pattern:$0x73625140]
        %v722 = vld.sshfl [vmem:[#allocation1 + $0x10] sm:$0xff pattern:$0x73625140]
        %723 = vrot.lane.b32.xlu0 %v720, 127
        %v724 = vpop.permute.xlu0 %723
        %725 = vrot.lane.b32.xlu0 %v721, 127
        %v726 = vpop.permute.xlu0 %725
        %727 = vrot.lane.b32.xlu0 %v722, 127
        %v728 = vpop.permute.xlu0 %727
        %vm729 = vcmask 1039360
        %v730 = vsel %vm729, %v724, %v726
        %v731 = vsel %vm729, %v726, %v728
        %734 = vst [vmem:[#allocation3] sm:$0xc] %v730
        %735 = vst [vmem:[#allocation3 + $0x8] sm:$0xc] %v731
        %v736 = vld [vmem:[#allocation2] sm:$0x3f]
        %s737 = scalar_lea.vmem %s1, 4
        %v738 = vld [vmem:[%s737] sm:$0x3]
        %v740 = vperm.slane %v738, 0
        %v741 = vperm.slane %v738, 1
        %v742 = vrot.slane %v741, 6
        %v743 = vsel %vm671, %v740, %v742
        %744 = vrot.lane.b32.xlu0 %v743, 2
        %v745 = vpop.permute.xlu0 %744
        %v746 = vrot.slane %v745, 6
        %vm747 = vcmask 15360
        %v748 = vsel %vm747, %v746, %v745
        %v750 = vmul.f32 %v736, %v748
        %s752 = scalar_lea.vmem [#allocation1], 2
        %753 = vst [vmem:[%s752] ss:$4 sm:$0xff] %v750
        %v754 = vld.sshfl [vmem:[#allocation1] sm:$0xff pattern:$0x73625140]
        %v755 = vld.sshfl [vmem:[#allocation1 + $0x8] sm:$0xff pattern:$0x73625140]
        %v756 = vld.sshfl [vmem:[#allocation1 + $0x10] sm:$0xff pattern:$0x73625140]
        %757 = vrot.lane.b32.xlu0 %v754, 126
        %v758 = vpop.permute.xlu0 %757
        %759 = vrot.lane.b32.xlu0 %v755, 126
        %v760 = vpop.permute.xlu0 %759
        %761 = vrot.lane.b32.xlu0 %v756, 126
        %v762 = vpop.permute.xlu0 %761
        %vm763 = vcmask 1031168
        %v764 = vsel %vm763, %v758, %v760
        %v765 = vsel %vm763, %v760, %v762
        %768 = vst [vmem:[#allocation3] sm:$0x30] %v764
        %769 = vst [vmem:[#allocation3 + $0x8] sm:$0x30] %v765
        %v770 = vld [vmem:[#allocation2] sm:$0x3f]
        %s771 = scalar_lea.vmem %s1, 6
        %v772 = vld [vmem:[%s771] sm:$0x3]
        %v774 = vperm.slane %v772, 0
        %v775 = vperm.slane %v772, 1
        %v776 = vrot.slane %v775, 6
        %v777 = vsel %vm671, %v774, %v776
        %778 = vrot.lane.b32.xlu0 %v777, 16
        %v779 = vpop.permute.xlu0 %778
        %v780 = vrot.slane %v779, 6
        %vm781 = vcmask 130048
        %v782 = vsel %vm781, %v780, %v779
        %v784 = vmul.f32 %v770, %v782
        %s786 = scalar_lea.vmem [#allocation1], 3
        %787 = vst [vmem:[%s786] ss:$4 sm:$0xff] %v784
        %v788 = vld.sshfl [vmem:[#allocation1] sm:$0xff pattern:$0x73625140]
        %v789 = vld.sshfl [vmem:[#allocation1 + $0x8] sm:$0xff pattern:$0x73625140]
        %v790 = vld.sshfl [vmem:[#allocation1 + $0x10] sm:$0xff pattern:$0x73625140]
        %791 = vrot.lane.b32.xlu0 %v788, 112
        %v792 = vpop.permute.xlu0 %791
        %793 = vrot.lane.b32.xlu0 %v789, 112
        %v794 = vpop.permute.xlu0 %793
        %795 = vrot.lane.b32.xlu0 %v790, 112
        %v796 = vpop.permute.xlu0 %795
        %vm797 = vcmask 916480
        %v798 = vsel %vm797, %v792, %v794
        %v799 = vsel %vm797, %v794, %v796
        %802 = vst [vmem:[#allocation3] sm:$0xc0] %v798
        %803 = vst [vmem:[#allocation3 + $0x8] sm:$0xc0] %v799
        %v804 = vld [vmem:[#allocation2] sm:$0x3f]
        %s805 = scalar_lea.vmem %s1, 8
        %v806 = vld [vmem:[%s805] sm:$0x3]
        %v808 = vperm.slane %v806, 0
        %v809 = vperm.slane %v806, 1
        %v810 = vrot.slane %v809, 6
        %v811 = vsel %vm671, %v808, %v810
        %812 = vrot.lane.b32.xlu0 %v811, 17
        %v813 = vpop.permute.xlu0 %812
        %v814 = vrot.slane %v813, 6
        %v815 = vsel %vm676, %v814, %v813
        %v817 = vmul.f32 %v804, %v815
        %819 = vst [vmem:[#allocation1] ss:$4 sm:$0xff] %v817
        %v820 = vld.sshfl [vmem:[#allocation1] sm:$0xff pattern:$0x73625140]
        %v821 = vld.sshfl [vmem:[#allocation1 + $0x8] sm:$0xff pattern:$0x73625140]
        %v822 = vld.sshfl [vmem:[#allocation1 + $0x10] sm:$0xff pattern:$0x73625140]
        %823 = vrot.lane.b32.xlu0 %v820, 111
        %v824 = vpop.permute.xlu0 %823
        %825 = vrot.lane.b32.xlu0 %v821, 111
        %v826 = vpop.permute.xlu0 %825
        %827 = vrot.lane.b32.xlu0 %v822, 111
        %v828 = vpop.permute.xlu0 %827
        %vm829 = vcmask 908288
        %v830 = vsel %vm829, %v824, %v826
        %v831 = vsel %vm829, %v826, %v828
        %834 = vst [vmem:[#allocation3 + $0x10] sm:$0x3] %v830
        %835 = vst [vmem:[#allocation3 + $0x18] sm:$0x3] %v831
        %v836 = vld [vmem:[#allocation2] sm:$0x3f]
        %s837 = scalar_lea.vmem %s1, 10
        %v838 = vld [vmem:[%s837] sm:$0x3]
        %v840 = vperm.slane %v838, 0
        %v841 = vperm.slane %v838, 1
        %v842 = vrot.slane %v841, 6
        %v843 = vsel %vm671, %v840, %v842
        %844 = vrot.lane.b32.xlu0 %v843, 18
        %v845 = vpop.permute.xlu0 %844
        %v846 = vrot.slane %v845, 6
        %vm847 = vcmask 146432
        %v848 = vsel %vm847, %v846, %v845
        %v850 = vmul.f32 %v836, %v848
        %s852 = scalar_lea.vmem [#allocation1], 1
        %853 = vst [vmem:[%s852] ss:$4 sm:$0xff] %v850
        %v854 = vld.sshfl [vmem:[#allocation1] sm:$0xff pattern:$0x73625140]
        %v855 = vld.sshfl [vmem:[#allocation1 + $0x8] sm:$0xff pattern:$0x73625140]
        %v856 = vld.sshfl [vmem:[#allocation1 + $0x10] sm:$0xff pattern:$0x73625140]
        %857 = vrot.lane.b32.xlu0 %v854, 110
        %v858 = vpop.permute.xlu0 %857
        %859 = vrot.lane.b32.xlu0 %v855, 110
        %v860 = vpop.permute.xlu0 %859
        %861 = vrot.lane.b32.xlu0 %v856, 110
        %v862 = vpop.permute.xlu0 %861
        %vm863 = vcmask 900096
        %v864 = vsel %vm863, %v858, %v860
        %v865 = vsel %vm863, %v860, %v862
        %868 = vst [vmem:[#allocation3 + $0x10] sm:$0xc] %v864
        %869 = vst [vmem:[#allocation3 + $0x18] sm:$0xc] %v865
        %v870 = vld [vmem:[#allocation2] sm:$0x3f]
        %s871 = scalar_lea.vmem %s1, 12
        %v872 = vld [vmem:[%s871] sm:$0x3]
        %v874 = vperm.slane %v872, 0
        %v875 = vperm.slane %v872, 1
        %v876 = vrot.slane %v875, 6
        %v877 = vsel %vm671, %v874, %v876
        %878 = vrot.lane.b32.xlu0 %v877, 32
        %v879 = vpop.permute.xlu0 %878
        %v880 = vrot.slane %v879, 6
        %vm881 = vcmask 261120
        %v882 = vsel %vm881, %v880, %v879
        %v884 = vmul.f32 %v870, %v882
        %s886 = scalar_lea.vmem [#allocation1], 2
        %887 = vst [vmem:[%s886] ss:$4 sm:$0xff] %v884
        %v888 = vld.sshfl [vmem:[#allocation1] sm:$0xff pattern:$0x73625140]
        %v889 = vld.sshfl [vmem:[#allocation1 + $0x8] sm:$0xff pattern:$0x73625140]
        %v890 = vld.sshfl [vmem:[#allocation1 + $0x10] sm:$0xff pattern:$0x73625140]
        %891 = vrot.lane.b32.xlu0 %v888, 96
        %v892 = vpop.permute.xlu0 %891
        %893 = vrot.lane.b32.xlu0 %v889, 96
        %v894 = vpop.permute.xlu0 %893
        %895 = vrot.lane.b32.xlu0 %v890, 96
        %v896 = vpop.permute.xlu0 %895
        %vm897 = vcmask 785408
        %v898 = vsel %vm897, %v892, %v894
        %v899 = vsel %vm897, %v894, %v896
        %902 = vst [vmem:[#allocation3 + $0x10] sm:$0x30] %v898
        %903 = vst [vmem:[#allocation3 + $0x18] sm:$0x30] %v899
        %v904 = vld [vmem:[#allocation2] sm:$0x3f]
        %s905 = scalar_lea.vmem %s1, 14
        %v906 = vld [vmem:[%s905] sm:$0x3]
        %v908 = vperm.slane %v906, 0
        %v909 = vperm.slane %v906, 1
        %v910 = vrot.slane %v909, 6
        %v911 = vsel %vm671, %v908, %v910
        %912 = vrot.lane.b32.xlu0 %v911, 33
        %v913 = vpop.permute.xlu0 %912
        %v914 = vrot.slane %v913, 6
        %vm915 = vcmask 269312
        %v916 = vsel %vm915, %v914, %v913
        %v918 = vmul.f32 %v904, %v916
        %s920 = scalar_lea.vmem [#allocation1], 3
        %921 = vst [vmem:[%s920] ss:$4 sm:$0xff] %v918
        %v922 = vld.sshfl [vmem:[#allocation1] sm:$0xff pattern:$0x73625140]
        %v923 = vld.sshfl [vmem:[#allocation1 + $0x8] sm:$0xff pattern:$0x73625140]
        %v924 = vld.sshfl [vmem:[#allocation1 + $0x10] sm:$0xff pattern:$0x73625140]
        %925 = vrot.lane.b32.xlu0 %v922, 95
        %v926 = vpop.permute.xlu0 %925
        %927 = vrot.lane.b32.xlu0 %v923, 95
        %v928 = vpop.permute.xlu0 %927
        %929 = vrot.lane.b32.xlu0 %v924, 95
        %v930 = vpop.permute.xlu0 %929
        %vm931 = vcmask 777216
        %v932 = vsel %vm931, %v926, %v928
        %v933 = vsel %vm931, %v928, %v930
        %936 = vst [vmem:[#allocation3 + $0x10] sm:$0xc0] %v932
        %937 = vst [vmem:[#allocation3 + $0x18] sm:$0xc0] %v933
        %v938 = vld [vmem:[#allocation2] sm:$0x3f]
        %s939 = scalar_lea.vmem %s1, 16
        %v940 = vld [vmem:[%s939] sm:$0x3]
        %v942 = vperm.slane %v940, 0
        %v943 = vperm.slane %v940, 1
        %v944 = vrot.slane %v943, 6
        %v945 = vsel %vm671, %v942, %v944
        %946 = vrot.lane.b32.xlu0 %v945, 34
        %v947 = vpop.permute.xlu0 %946
        %v948 = vrot.slane %v947, 6
        %vm949 = vcmask 277504
        %v950 = vsel %vm949, %v948, %v947
        %v952 = vmul.f32 %v938, %v950
        %954 = vst [vmem:[#allocation1] ss:$4 sm:$0xff] %v952
        %v955 = vld.sshfl [vmem:[#allocation1] sm:$0xff pattern:$0x73625140]
        %v956 = vld.sshfl [vmem:[#allocation1 + $0x8] sm:$0xff pattern:$0x73625140]
        %v957 = vld.sshfl [vmem:[#allocation1 + $0x10] sm:$0xff pattern:$0x73625140]
        %958 = vrot.lane.b32.xlu0 %v955, 94
        %v959 = vpop.permute.xlu0 %958
        %960 = vrot.lane.b32.xlu0 %v956, 94
        %v961 = vpop.permute.xlu0 %960
        %962 = vrot.lane.b32.xlu0 %v957, 94
        %v963 = vpop.permute.xlu0 %962
        %vm964 = vcmask 769024
        %v965 = vsel %vm964, %v959, %v961
        %v966 = vsel %vm964, %v961, %v963
        %969 = vst [vmem:[#allocation3 + $0x20] sm:$0x3] %v965
        %970 = vst [vmem:[#allocation3 + $0x28] sm:$0x3] %v966
        %v971 = vld [vmem:[%s8] sm:$0x3]
        %v972 = vld [vmem:[#allocation3] sm:$0xff]
        %v973 = vld [vmem:[#allocation3 + $0x8] sm:$0xff]
        %v974 = vld [vmem:[#allocation3 + $0x10] sm:$0xff]
        %v975 = vld [vmem:[#allocation3 + $0x18] sm:$0xff]
        %v976 = vld [vmem:[#allocation3 + $0x20] sm:$0x3]
        %v977 = vld [vmem:[#allocation3 + $0x28] sm:$0x3]
        %v978 = vld [vmem:[%s9] sm:$0x3]
        %980 = vset.pattern.permute.xlu0 0
        %981 = vperm.xlu0 %980, %v978
        %v982 = vpop.permute.xlu0 %981
        %v985 = vsel %vm847, %v971, 0
        %v988 = vsel %vm671, %v976, 0
        %v991 = vsel %vm671, %v977, 0
        %993 = vmatpush.msra.mxu0 0.0
        %994 = vmatpush.msra.mxu0 0.0
        %995 = vmatpush.msra.mxu0 0.0
        %996 = vmatpush.msra.mxu0 0.0
        %997 = vmatpush.msra.mxu0 0.0
        %998 = vmatpush.msra.mxu0 0.0
        %999 = vmatpush.msra.mxu0 0.0
        %1000 = vmatpush.msra.mxu0 0.0
        %1001 = vmatpush.msra.mxu0 0.0
        %1002 = vmatpush.msra.mxu0 0.0
        %1003 = vmatpush.msra.mxu0 0.0
        %1004 = vmatpush.msra.mxu0 0.0
        %1005 = vmatpush.msra.mxu0 0.0
        %1006 = vmatpush.msra.mxu0 %v988
        %1007 = vmatpush.msra.mxu0 %v974
        %1008 = vmatpush.msra.mxu0 %v972
        %1009 = vmatmul.f32.gmra.mxu0 %v985
        %v1010 = vpop.f32.mrf.mxu0
        %v1011 = vadd.f32 %v982, %v1010
        %1012 = vdwg.mxu0
        %1013 = vmatpush.msra.mxu0 0.0
        %1014 = vmatpush.msra.mxu0 0.0
        %1015 = vmatpush.msra.mxu0 0.0
        %1016 = vmatpush.msra.mxu0 0.0
        %1017 = vmatpush.msra.mxu0 0.0
        %1018 = vmatpush.msra.mxu0 0.0
        %1019 = vmatpush.msra.mxu0 0.0
        %1020 = vmatpush.msra.mxu0 0.0
        %1021 = vmatpush.msra.mxu0 0.0
        %1022 = vmatpush.msra.mxu0 0.0
        %1023 = vmatpush.msra.mxu0 0.0
        %1024 = vmatpush.msra.mxu0 0.0
        %1025 = vmatpush.msra.mxu0 0.0
        %1026 = vmatpush.msra.mxu0 %v991
        %1027 = vmatpush.msra.mxu0 %v975
        %1028 = vmatpush.msra.mxu0 %v973
        %1029 = vmatmul.f32.gmra.mxu0 %v985
        %v1030 = vpop.f32.mrf.mxu0
        %v1031 = vadd.f32 %v982, %v1030
        %1032 = vdwg.mxu0
        %v1033 = vmax.f32 %v1011, 0.0
        %v1034 = vmax.f32 %v1031, 0.0
        %v1035 = vld [vmem:[%s6] sm:$0x3]
        %v1036 = vld [vmem:[%s7] sm:$0x3]
        %1038 = vset.pattern.permute.xlu0 0
        %1039 = vperm.xlu0 %1038, %v1036
        %v1040 = vpop.permute.xlu0 %1039
        %1042 = vst [vmem:[#allocation1] ss:$2 sm:$0xff] %v605
        %v1043 = vld.sshfl [vmem:[#allocation1] sm:$0xff pattern:$0x75316420]
        %v1044 = vld.sshfl [vmem:[#allocation1 + $0x8] sm:$0xff pattern:$0x75316420]
        %v1046 = vsel %vm617, %v1035, 0
        %v1048 = vsel %vm621, %v1043, 0
        %v1050 = vsel %vm621, %v1044, 0
        %1052 = vmatpush.msra.mxu0 0.0
        %1053 = vmatpush.msra.mxu0 0.0
        %1054 = vmatpush.msra.mxu0 0.0
        %1055 = vmatpush.msra.mxu0 0.0
        %1056 = vmatpush.msra.mxu0 0.0
        %1057 = vmatpush.msra.mxu0 0.0
        %1058 = vmatpush.msra.mxu0 0.0
        %1059 = vmatpush.msra.mxu0 0.0
        %1060 = vmatpush.msra.mxu0 0.0
        %1061 = vmatpush.msra.mxu0 0.0
        %1062 = vmatpush.msra.mxu0 0.0
        %1063 = vmatpush.msra.mxu0 0.0
        %1064 = vmatpush.msra.mxu0 0.0
        %1065 = vmatpush.msra.mxu0 0.0
        %1066 = vmatpush.msra.mxu0 0.0
        %1067 = vmatpush.msra.mxu0 %v1048
        %1068 = vmatmul.f32.gmra.mxu0 %v1046
        %v1069 = vpop.f32.mrf.mxu0
        %v1070 = vadd.f32 %v1040, %v1069
        %1071 = vdwg.mxu0
        %1072 = vmatpush.msra.mxu0 0.0
        %1073 = vmatpush.msra.mxu0 0.0
        %1074 = vmatpush.msra.mxu0 0.0
        %1075 = vmatpush.msra.mxu0 0.0
        %1076 = vmatpush.msra.mxu0 0.0
        %1077 = vmatpush.msra.mxu0 0.0
        %1078 = vmatpush.msra.mxu0 0.0
        %1079 = vmatpush.msra.mxu0 0.0
        %1080 = vmatpush.msra.mxu0 0.0
        %1081 = vmatpush.msra.mxu0 0.0
        %1082 = vmatpush.msra.mxu0 0.0
        %1083 = vmatpush.msra.mxu0 0.0
        %1084 = vmatpush.msra.mxu0 0.0
        %1085 = vmatpush.msra.mxu0 0.0
        %1086 = vmatpush.msra.mxu0 0.0
        %1087 = vmatpush.msra.mxu0 %v1050
        %1088 = vmatmul.f32.gmra.mxu0 %v1046
        %v1089 = vpop.f32.mrf.mxu0
        %v1090 = vadd.f32 %v1040, %v1089
        %1091 = vdwg.mxu0
        %v1092 = vmax.f32 %v1070, 0.0
        %v1093 = vmax.f32 %v1090, 0.0
        %v1094 = vld [vmem:[%s11] sm:$0x3]
        %1096 = vset.pattern.permute.xlu0 0
        %1097 = vperm.xlu0 %1096, %v1094
        %v1098 = vpop.permute.xlu0 %1097
        %v1100 = vadd.f32 %v1098, 0.0
        %v1101 = vld [vmem:[%s2] sm:$0xff]
        %v1102 = vld [vmem:[%s2 + $0x8] sm:$0xff]
        %v1103 = vld [vmem:[%s2 + $0x10] sm:$0xff]
        %v1104 = vld [vmem:[%s2 + $0x18] sm:$0xff]
        %v1105 = vld [vmem:[%s2 + $0x20] sm:$0xff]
        %v1106 = vld [vmem:[%s2 + $0x28] sm:$0xff]
        %v1107 = vld [vmem:[%s2 + $0x30] sm:$0xff]
        %v1108 = vld [vmem:[%s2 + $0x38] sm:$0xff]
        %v1109 = vld [vmem:[%s2 + $0x40] sm:$0xff]
        %v1110 = vld [vmem:[%s2 + $0x48] sm:$0xff]
        %v1111 = vld [vmem:[%s2 + $0x50] sm:$0xff]
        %v1112 = vld [vmem:[%s2 + $0x58] sm:$0xff]
        %v1113 = vld [vmem:[%s2 + $0x60] sm:$0xff]
        %v1114 = vld [vmem:[%s2 + $0x68] sm:$0xff]
        %v1115 = vld [vmem:[%s2 + $0x70] sm:$0xff]
        %v1116 = vld [vmem:[%s2 + $0x78] sm:$0xff]
        %v1117 = vld [vmem:[%s2 + $0x80] sm:$0xff]
        %v1118 = vld [vmem:[%s2 + $0x88] sm:$0xff]
        %v1119 = vld [vmem:[%s2 + $0x90] sm:$0xff]
        %v1120 = vld [vmem:[%s2 + $0x98] sm:$0xff]
        %v1121 = vld [vmem:[%s2 + $0xa0] sm:$0xff]
        %v1122 = vld [vmem:[%s2 + $0xa8] sm:$0xff]
        %v1123 = vld [vmem:[%s2 + $0xb0] sm:$0xff]
        %v1124 = vld [vmem:[%s2 + $0xb8] sm:$0xff]
        %v1125 = vld [vmem:[%s2 + $0xc0] sm:$0xff]
        %v1126 = vld [vmem:[%s2 + $0xc8] sm:$0xff]
        %v1127 = vld [vmem:[%s2 + $0xd0] sm:$0xff]
        %v1128 = vld [vmem:[%s2 + $0xd8] sm:$0xff]
        %v1129 = vld [vmem:[%s2 + $0xe0] sm:$0xff]
        %v1130 = vld [vmem:[%s2 + $0xe8] sm:$0xff]
        %v1131 = vld [vmem:[%s2 + $0xf0] sm:$0xff]
        %v1132 = vld [vmem:[%s2 + $0xf8] sm:$0xff]
        %1133 = vmatpush.msra.mxu0 %v1116
        %1134 = vmatpush.msra.mxu0 %v1115
        %1135 = vmatpush.msra.mxu0 %v1114
        %1136 = vmatpush.msra.mxu0 %v1113
        %1137 = vmatpush.msra.mxu0 %v1112
        %1138 = vmatpush.msra.mxu0 %v1111
        %1139 = vmatpush.msra.mxu0 %v1110
        %1140 = vmatpush.msra.mxu0 %v1109
        %1141 = vmatpush.msra.mxu0 %v1108
        %1142 = vmatpush.msra.mxu0 %v1107
        %1143 = vmatpush.msra.mxu0 %v1106
        %1144 = vmatpush.msra.mxu0 %v1105
        %1145 = vmatpush.msra.mxu0 %v1104
        %1146 = vmatpush.msra.mxu0 %v1103
        %1147 = vmatpush.msra.mxu0 %v1102
        %1148 = vmatpush.msra.mxu0 %v1101
        %1149 = vmatmul.f32.gmra.mxu0 %v1092
        %v1150 = vpop.f32.mrf.mxu0
        %v1151 = vadd.f32 0.0, %v1150
        %1152 = vdwg.mxu0
        %1153 = vmatpush.msra.mxu0 %v1132
        %1154 = vmatpush.msra.mxu0 %v1131
        %1155 = vmatpush.msra.mxu0 %v1130
        %1156 = vmatpush.msra.mxu0 %v1129
        %1157 = vmatpush.msra.mxu0 %v1128
        %1158 = vmatpush.msra.mxu0 %v1127
        %1159 = vmatpush.msra.mxu0 %v1126
        %1160 = vmatpush.msra.mxu0 %v1125
        %1161 = vmatpush.msra.mxu0 %v1124
        %1162 = vmatpush.msra.mxu0 %v1123
        %1163 = vmatpush.msra.mxu0 %v1122
        %1164 = vmatpush.msra.mxu0 %v1121
        %1165 = vmatpush.msra.mxu0 %v1120
        %1166 = vmatpush.msra.mxu0 %v1119
        %1167 = vmatpush.msra.mxu0 %v1118
        %1168 = vmatpush.msra.mxu0 %v1117
        %1169 = vmatmul.f32.gmra.mxu0 %v1093
        %v1170 = vpop.f32.mrf.mxu0
        %v1171 = vadd.f32 %v1151, %v1170
        %1172 = vdwg.mxu0
        %v1173 = vld [vmem:[%s10] sm:$0x3]
        %v1175 = vsel %vm747, %v1173, 0
        %v1178 = vsel %vm671, %v1171, 0
        %1180 = vmatpush.msra.mxu0 0.0
        %1181 = vmatpush.msra.mxu0 0.0
        %1182 = vmatpush.msra.mxu0 0.0
        %1183 = vmatpush.msra.mxu0 0.0
        %1184 = vmatpush.msra.mxu0 0.0
        %1185 = vmatpush.msra.mxu0 0.0
        %1186 = vmatpush.msra.mxu0 0.0
        %1187 = vmatpush.msra.mxu0 0.0
        %1188 = vmatpush.msra.mxu0 0.0
        %1189 = vmatpush.msra.mxu0 0.0
        %1190 = vmatpush.msra.mxu0 0.0
        %1191 = vmatpush.msra.mxu0 0.0
        %1192 = vmatpush.msra.mxu0 0.0
        %1193 = vmatpush.msra.mxu0 0.0
        %1194 = vmatpush.msra.mxu0 0.0
        %1195 = vmatpush.msra.mxu0 %v1178
        %1196 = vmatmul.f32.gmra.mxu0 %v1175
        %v1197 = vpop.f32.mrf.mxu0
        %v1198 = vadd.f32 0.0, %v1197
        %1199 = vdwg.mxu0
        %v1200 = vadd.f32 %v1100, %v1198
        %s1201 = scalar_lea.vmem %s2, 256
        %v1202 = vld [vmem:[%s1201] sm:$0xff]
        %v1203 = vld [vmem:[%s1201 + $0x8] sm:$0xff]
        %v1204 = vld [vmem:[%s1201 + $0x10] sm:$0xff]
        %v1205 = vld [vmem:[%s1201 + $0x18] sm:$0xff]
        %v1206 = vld [vmem:[%s1201 + $0x20] sm:$0xff]
        %v1207 = vld [vmem:[%s1201 + $0x28] sm:$0xff]
        %v1208 = vld [vmem:[%s1201 + $0x30] sm:$0xff]
        %v1209 = vld [vmem:[%s1201 + $0x38] sm:$0xff]
        %v1210 = vld [vmem:[%s1201 + $0x40] sm:$0xff]
        %v1211 = vld [vmem:[%s1201 + $0x48] sm:$0xff]
        %v1212 = vld [vmem:[%s1201 + $0x50] sm:$0xff]
        %v1213 = vld [vmem:[%s1201 + $0x58] sm:$0xff]
        %v1214 = vld [vmem:[%s1201 + $0x60] sm:$0xff]
        %v1215 = vld [vmem:[%s1201 + $0x68] sm:$0xff]
        %v1216 = vld [vmem:[%s1201 + $0x70] sm:$0xff]
        %v1217 = vld [vmem:[%s1201 + $0x78] sm:$0xff]
        %v1218 = vld [vmem:[%s1201 + $0x80] sm:$0xff]
        %v1219 = vld [vmem:[%s1201 + $0x88] sm:$0xff]
        %v1220 = vld [vmem:[%s1201 + $0x90] sm:$0xff]
        %v1221 = vld [vmem:[%s1201 + $0x98] sm:$0xff]
        %v1222 = vld [vmem:[%s1201 + $0xa0] sm:$0xff]
        %v1223 = vld [vmem:[%s1201 + $0xa8] sm:$0xff]
        %v1224 = vld [vmem:[%s1201 + $0xb0] sm:$0xff]
        %v1225 = vld [vmem:[%s1201 + $0xb8] sm:$0xff]
        %v1226 = vld [vmem:[%s1201 + $0xc0] sm:$0xff]
        %v1227 = vld [vmem:[%s1201 + $0xc8] sm:$0xff]
        %v1228 = vld [vmem:[%s1201 + $0xd0] sm:$0xff]
        %v1229 = vld [vmem:[%s1201 + $0xd8] sm:$0xff]
        %v1230 = vld [vmem:[%s1201 + $0xe0] sm:$0xff]
        %v1231 = vld [vmem:[%s1201 + $0xe8] sm:$0xff]
        %v1232 = vld [vmem:[%s1201 + $0xf0] sm:$0xff]
        %v1233 = vld [vmem:[%s1201 + $0xf8] sm:$0xff]
        %1234 = vmatpush.msra.mxu0 %v1217
        %1235 = vmatpush.msra.mxu0 %v1216
        %1236 = vmatpush.msra.mxu0 %v1215
        %1237 = vmatpush.msra.mxu0 %v1214
        %1238 = vmatpush.msra.mxu0 %v1213
        %1239 = vmatpush.msra.mxu0 %v1212
        %1240 = vmatpush.msra.mxu0 %v1211
        %1241 = vmatpush.msra.mxu0 %v1210
        %1242 = vmatpush.msra.mxu0 %v1209
        %1243 = vmatpush.msra.mxu0 %v1208
        %1244 = vmatpush.msra.mxu0 %v1207
        %1245 = vmatpush.msra.mxu0 %v1206
        %1246 = vmatpush.msra.mxu0 %v1205
        %1247 = vmatpush.msra.mxu0 %v1204
        %1248 = vmatpush.msra.mxu0 %v1203
        %1249 = vmatpush.msra.mxu0 %v1202
        %1250 = vmatmul.f32.gmra.mxu0 %v1092
        %v1251 = vpop.f32.mrf.mxu0
        %v1252 = vadd.f32 0.0, %v1251
        %1253 = vdwg.mxu0
        %1254 = vmatpush.msra.mxu0 %v1233
        %1255 = vmatpush.msra.mxu0 %v1232
        %1256 = vmatpush.msra.mxu0 %v1231
        %1257 = vmatpush.msra.mxu0 %v1230
        %1258 = vmatpush.msra.mxu0 %v1229
        %1259 = vmatpush.msra.mxu0 %v1228
        %1260 = vmatpush.msra.mxu0 %v1227
        %1261 = vmatpush.msra.mxu0 %v1226
        %1262 = vmatpush.msra.mxu0 %v1225
        %1263 = vmatpush.msra.mxu0 %v1224
        %1264 = vmatpush.msra.mxu0 %v1223
        %1265 = vmatpush.msra.mxu0 %v1222
        %1266 = vmatpush.msra.mxu0 %v1221
        %1267 = vmatpush.msra.mxu0 %v1220
        %1268 = vmatpush.msra.mxu0 %v1219
        %1269 = vmatpush.msra.mxu0 %v1218
        %1270 = vmatmul.f32.gmra.mxu0 %v1093
        %v1271 = vpop.f32.mrf.mxu0
        %v1272 = vadd.f32 %v1252, %v1271
        %1273 = vdwg.mxu0
        %s1274 = scalar_lea.vmem %s10, 2
        %v1275 = vld [vmem:[%s1274] sm:$0x3]
        %v1277 = vsel %vm747, %v1275, 0
        %v1280 = vsel %vm671, %v1272, 0
        %1282 = vmatpush.msra.mxu0 0.0
        %1283 = vmatpush.msra.mxu0 0.0
        %1284 = vmatpush.msra.mxu0 0.0
        %1285 = vmatpush.msra.mxu0 0.0
        %1286 = vmatpush.msra.mxu0 0.0
        %1287 = vmatpush.msra.mxu0 0.0
        %1288 = vmatpush.msra.mxu0 0.0
        %1289 = vmatpush.msra.mxu0 0.0
        %1290 = vmatpush.msra.mxu0 0.0
        %1291 = vmatpush.msra.mxu0 0.0
        %1292 = vmatpush.msra.mxu0 0.0
        %1293 = vmatpush.msra.mxu0 0.0
        %1294 = vmatpush.msra.mxu0 0.0
        %1295 = vmatpush.msra.mxu0 0.0
        %1296 = vmatpush.msra.mxu0 0.0
        %1297 = vmatpush.msra.mxu0 %v1280
        %1298 = vmatmul.f32.gmra.mxu0 %v1277
        %v1299 = vpop.f32.mrf.mxu0
        %v1300 = vadd.f32 0.0, %v1299
        %1301 = vdwg.mxu0
        %v1302 = vadd.f32 %v1200, %v1300
        %s1303 = scalar_lea.vmem %s2, 512
        %v1304 = vld [vmem:[%s1303] sm:$0xff]
        %v1305 = vld [vmem:[%s1303 + $0x8] sm:$0xff]
        %v1306 = vld [vmem:[%s1303 + $0x10] sm:$0xff]
        %v1307 = vld [vmem:[%s1303 + $0x18] sm:$0xff]
        %v1308 = vld [vmem:[%s1303 + $0x20] sm:$0xff]
        %v1309 = vld [vmem:[%s1303 + $0x28] sm:$0xff]
        %v1310 = vld [vmem:[%s1303 + $0x30] sm:$0xff]
        %v1311 = vld [vmem:[%s1303 + $0x38] sm:$0xff]
        %v1312 = vld [vmem:[%s1303 + $0x40] sm:$0xff]
        %v1313 = vld [vmem:[%s1303 + $0x48] sm:$0xff]
        %v1314 = vld [vmem:[%s1303 + $0x50] sm:$0xff]
        %v1315 = vld [vmem:[%s1303 + $0x58] sm:$0xff]
        %v1316 = vld [vmem:[%s1303 + $0x60] sm:$0xff]
        %v1317 = vld [vmem:[%s1303 + $0x68] sm:$0xff]
        %v1318 = vld [vmem:[%s1303 + $0x70] sm:$0xff]
        %v1319 = vld [vmem:[%s1303 + $0x78] sm:$0xff]
        %v1320 = vld [vmem:[%s1303 + $0x80] sm:$0xff]
        %v1321 = vld [vmem:[%s1303 + $0x88] sm:$0xff]
        %v1322 = vld [vmem:[%s1303 + $0x90] sm:$0xff]
        %v1323 = vld [vmem:[%s1303 + $0x98] sm:$0xff]
        %v1324 = vld [vmem:[%s1303 + $0xa0] sm:$0xff]
        %v1325 = vld [vmem:[%s1303 + $0xa8] sm:$0xff]
        %v1326 = vld [vmem:[%s1303 + $0xb0] sm:$0xff]
        %v1327 = vld [vmem:[%s1303 + $0xb8] sm:$0xff]
        %v1328 = vld [vmem:[%s1303 + $0xc0] sm:$0xff]
        %v1329 = vld [vmem:[%s1303 + $0xc8] sm:$0xff]
        %v1330 = vld [vmem:[%s1303 + $0xd0] sm:$0xff]
        %v1331 = vld [vmem:[%s1303 + $0xd8] sm:$0xff]
        %v1332 = vld [vmem:[%s1303 + $0xe0] sm:$0xff]
        %v1333 = vld [vmem:[%s1303 + $0xe8] sm:$0xff]
        %v1334 = vld [vmem:[%s1303 + $0xf0] sm:$0xff]
        %v1335 = vld [vmem:[%s1303 + $0xf8] sm:$0xff]
        %1336 = vmatpush.msra.mxu0 %v1319
        %1337 = vmatpush.msra.mxu0 %v1318
        %1338 = vmatpush.msra.mxu0 %v1317
        %1339 = vmatpush.msra.mxu0 %v1316
        %1340 = vmatpush.msra.mxu0 %v1315
        %1341 = vmatpush.msra.mxu0 %v1314
        %1342 = vmatpush.msra.mxu0 %v1313
        %1343 = vmatpush.msra.mxu0 %v1312
        %1344 = vmatpush.msra.mxu0 %v1311
        %1345 = vmatpush.msra.mxu0 %v1310
        %1346 = vmatpush.msra.mxu0 %v1309
        %1347 = vmatpush.msra.mxu0 %v1308
        %1348 = vmatpush.msra.mxu0 %v1307
        %1349 = vmatpush.msra.mxu0 %v1306
        %1350 = vmatpush.msra.mxu0 %v1305
        %1351 = vmatpush.msra.mxu0 %v1304
        %1352 = vmatmul.f32.gmra.mxu0 %v1092
        %v1353 = vpop.f32.mrf.mxu0
        %v1354 = vadd.f32 0.0, %v1353
        %1355 = vdwg.mxu0
        %1356 = vmatpush.msra.mxu0 %v1335
        %1357 = vmatpush.msra.mxu0 %v1334
        %1358 = vmatpush.msra.mxu0 %v1333
        %1359 = vmatpush.msra.mxu0 %v1332
        %1360 = vmatpush.msra.mxu0 %v1331
        %1361 = vmatpush.msra.mxu0 %v1330
        %1362 = vmatpush.msra.mxu0 %v1329
        %1363 = vmatpush.msra.mxu0 %v1328
        %1364 = vmatpush.msra.mxu0 %v1327
        %1365 = vmatpush.msra.mxu0 %v1326
        %1366 = vmatpush.msra.mxu0 %v1325
        %1367 = vmatpush.msra.mxu0 %v1324
        %1368 = vmatpush.msra.mxu0 %v1323
        %1369 = vmatpush.msra.mxu0 %v1322
        %1370 = vmatpush.msra.mxu0 %v1321
        %1371 = vmatpush.msra.mxu0 %v1320
        %1372 = vmatmul.f32.gmra.mxu0 %v1093
        %v1373 = vpop.f32.mrf.mxu0
        %v1374 = vadd.f32 %v1354, %v1373
        %1375 = vdwg.mxu0
        %s1376 = scalar_lea.vmem %s10, 4
        %v1377 = vld [vmem:[%s1376] sm:$0x3]
        %v1379 = vsel %vm747, %v1377, 0
        %v1382 = vsel %vm671, %v1374, 0
        %1384 = vmatpush.msra.mxu0 0.0
        %1385 = vmatpush.msra.mxu0 0.0
        %1386 = vmatpush.msra.mxu0 0.0
        %1387 = vmatpush.msra.mxu0 0.0
        %1388 = vmatpush.msra.mxu0 0.0
        %1389 = vmatpush.msra.mxu0 0.0
        %1390 = vmatpush.msra.mxu0 0.0
        %1391 = vmatpush.msra.mxu0 0.0
        %1392 = vmatpush.msra.mxu0 0.0
        %1393 = vmatpush.msra.mxu0 0.0
        %1394 = vmatpush.msra.mxu0 0.0
        %1395 = vmatpush.msra.mxu0 0.0
        %1396 = vmatpush.msra.mxu0 0.0
        %1397 = vmatpush.msra.mxu0 0.0
        %1398 = vmatpush.msra.mxu0 0.0
        %1399 = vmatpush.msra.mxu0 %v1382
        %1400 = vmatmul.f32.gmra.mxu0 %v1379
        %v1401 = vpop.f32.mrf.mxu0
        %v1402 = vadd.f32 0.0, %v1401
        %1403 = vdwg.mxu0
        %v1404 = vadd.f32 %v1302, %v1402
        %s1405 = scalar_lea.vmem %s2, 768
        %v1406 = vld [vmem:[%s1405] sm:$0xff]
        %v1407 = vld [vmem:[%s1405 + $0x8] sm:$0xff]
        %v1408 = vld [vmem:[%s1405 + $0x10] sm:$0xff]
        %v1409 = vld [vmem:[%s1405 + $0x18] sm:$0xff]
        %v1410 = vld [vmem:[%s1405 + $0x20] sm:$0xff]
        %v1411 = vld [vmem:[%s1405 + $0x28] sm:$0xff]
        %v1412 = vld [vmem:[%s1405 + $0x30] sm:$0xff]
        %v1413 = vld [vmem:[%s1405 + $0x38] sm:$0xff]
        %v1414 = vld [vmem:[%s1405 + $0x40] sm:$0xff]
        %v1415 = vld [vmem:[%s1405 + $0x48] sm:$0xff]
        %v1416 = vld [vmem:[%s1405 + $0x50] sm:$0xff]
        %v1417 = vld [vmem:[%s1405 + $0x58] sm:$0xff]
        %v1418 = vld [vmem:[%s1405 + $0x60] sm:$0xff]
        %v1419 = vld [vmem:[%s1405 + $0x68] sm:$0xff]
        %v1420 = vld [vmem:[%s1405 + $0x70] sm:$0xff]
        %v1421 = vld [vmem:[%s1405 + $0x78] sm:$0xff]
        %v1422 = vld [vmem:[%s1405 + $0x80] sm:$0xff]
        %v1423 = vld [vmem:[%s1405 + $0x88] sm:$0xff]
        %v1424 = vld [vmem:[%s1405 + $0x90] sm:$0xff]
        %v1425 = vld [vmem:[%s1405 + $0x98] sm:$0xff]
        %v1426 = vld [vmem:[%s1405 + $0xa0] sm:$0xff]
        %v1427 = vld [vmem:[%s1405 + $0xa8] sm:$0xff]
        %v1428 = vld [vmem:[%s1405 + $0xb0] sm:$0xff]
        %v1429 = vld [vmem:[%s1405 + $0xb8] sm:$0xff]
        %v1430 = vld [vmem:[%s1405 + $0xc0] sm:$0xff]
        %v1431 = vld [vmem:[%s1405 + $0xc8] sm:$0xff]
        %v1432 = vld [vmem:[%s1405 + $0xd0] sm:$0xff]
        %v1433 = vld [vmem:[%s1405 + $0xd8] sm:$0xff]
        %v1434 = vld [vmem:[%s1405 + $0xe0] sm:$0xff]
        %v1435 = vld [vmem:[%s1405 + $0xe8] sm:$0xff]
        %v1436 = vld [vmem:[%s1405 + $0xf0] sm:$0xff]
        %v1437 = vld [vmem:[%s1405 + $0xf8] sm:$0xff]
        %1438 = vmatpush.msra.mxu0 %v1421
        %1439 = vmatpush.msra.mxu0 %v1420
        %1440 = vmatpush.msra.mxu0 %v1419
        %1441 = vmatpush.msra.mxu0 %v1418
        %1442 = vmatpush.msra.mxu0 %v1417
        %1443 = vmatpush.msra.mxu0 %v1416
        %1444 = vmatpush.msra.mxu0 %v1415
        %1445 = vmatpush.msra.mxu0 %v1414
        %1446 = vmatpush.msra.mxu0 %v1413
        %1447 = vmatpush.msra.mxu0 %v1412
        %1448 = vmatpush.msra.mxu0 %v1411
        %1449 = vmatpush.msra.mxu0 %v1410
        %1450 = vmatpush.msra.mxu0 %v1409
        %1451 = vmatpush.msra.mxu0 %v1408
        %1452 = vmatpush.msra.mxu0 %v1407
        %1453 = vmatpush.msra.mxu0 %v1406
        %1454 = vmatmul.f32.gmra.mxu0 %v1092
        %v1455 = vpop.f32.mrf.mxu0
        %v1456 = vadd.f32 0.0, %v1455
        %1457 = vdwg.mxu0
        %1458 = vmatpush.msra.mxu0 %v1437
        %1459 = vmatpush.msra.mxu0 %v1436
        %1460 = vmatpush.msra.mxu0 %v1435
        %1461 = vmatpush.msra.mxu0 %v1434
        %1462 = vmatpush.msra.mxu0 %v1433
        %1463 = vmatpush.msra.mxu0 %v1432
        %1464 = vmatpush.msra.mxu0 %v1431
        %1465 = vmatpush.msra.mxu0 %v1430
        %1466 = vmatpush.msra.mxu0 %v1429
        %1467 = vmatpush.msra.mxu0 %v1428
        %1468 = vmatpush.msra.mxu0 %v1427
        %1469 = vmatpush.msra.mxu0 %v1426
        %1470 = vmatpush.msra.mxu0 %v1425
        %1471 = vmatpush.msra.mxu0 %v1424
        %1472 = vmatpush.msra.mxu0 %v1423
        %1473 = vmatpush.msra.mxu0 %v1422
        %1474 = vmatmul.f32.gmra.mxu0 %v1093
        %v1475 = vpop.f32.mrf.mxu0
        %v1476 = vadd.f32 %v1456, %v1475
        %1477 = vdwg.mxu0
        %s1478 = scalar_lea.vmem %s10, 6
        %v1479 = vld [vmem:[%s1478] sm:$0x3]
        %v1481 = vsel %vm747, %v1479, 0
        %v1484 = vsel %vm671, %v1476, 0
        %1486 = vmatpush.msra.mxu0 0.0
        %1487 = vmatpush.msra.mxu0 0.0
        %1488 = vmatpush.msra.mxu0 0.0
        %1489 = vmatpush.msra.mxu0 0.0
        %1490 = vmatpush.msra.mxu0 0.0
        %1491 = vmatpush.msra.mxu0 0.0
        %1492 = vmatpush.msra.mxu0 0.0
        %1493 = vmatpush.msra.mxu0 0.0
        %1494 = vmatpush.msra.mxu0 0.0
        %1495 = vmatpush.msra.mxu0 0.0
        %1496 = vmatpush.msra.mxu0 0.0
        %1497 = vmatpush.msra.mxu0 0.0
        %1498 = vmatpush.msra.mxu0 0.0
        %1499 = vmatpush.msra.mxu0 0.0
        %1500 = vmatpush.msra.mxu0 0.0
        %1501 = vmatpush.msra.mxu0 %v1484
        %1502 = vmatmul.f32.gmra.mxu0 %v1481
        %v1503 = vpop.f32.mrf.mxu0
        %v1504 = vadd.f32 0.0, %v1503
        %1505 = vdwg.mxu0
        %v1506 = vadd.f32 %v1404, %v1504
        %s1507 = scalar_lea.vmem %s2, 1024
        %v1508 = vld [vmem:[%s1507] sm:$0xff]
        %v1509 = vld [vmem:[%s1507 + $0x8] sm:$0xff]
        %v1510 = vld [vmem:[%s1507 + $0x10] sm:$0xff]
        %v1511 = vld [vmem:[%s1507 + $0x18] sm:$0xff]
        %v1512 = vld [vmem:[%s1507 + $0x20] sm:$0xff]
        %v1513 = vld [vmem:[%s1507 + $0x28] sm:$0xff]
        %v1514 = vld [vmem:[%s1507 + $0x30] sm:$0xff]
        %v1515 = vld [vmem:[%s1507 + $0x38] sm:$0xff]
        %v1516 = vld [vmem:[%s1507 + $0x40] sm:$0xff]
        %v1517 = vld [vmem:[%s1507 + $0x48] sm:$0xff]
        %v1518 = vld [vmem:[%s1507 + $0x50] sm:$0xff]
        %v1519 = vld [vmem:[%s1507 + $0x58] sm:$0xff]
        %v1520 = vld [vmem:[%s1507 + $0x60] sm:$0xff]
        %v1521 = vld [vmem:[%s1507 + $0x68] sm:$0xff]
        %v1522 = vld [vmem:[%s1507 + $0x70] sm:$0xff]
        %v1523 = vld [vmem:[%s1507 + $0x78] sm:$0xff]
        %v1524 = vld [vmem:[%s1507 + $0x80] sm:$0xff]
        %v1525 = vld [vmem:[%s1507 + $0x88] sm:$0xff]
        %v1526 = vld [vmem:[%s1507 + $0x90] sm:$0xff]
        %v1527 = vld [vmem:[%s1507 + $0x98] sm:$0xff]
        %v1528 = vld [vmem:[%s1507 + $0xa0] sm:$0xff]
        %v1529 = vld [vmem:[%s1507 + $0xa8] sm:$0xff]
        %v1530 = vld [vmem:[%s1507 + $0xb0] sm:$0xff]
        %v1531 = vld [vmem:[%s1507 + $0xb8] sm:$0xff]
        %v1532 = vld [vmem:[%s1507 + $0xc0] sm:$0xff]
        %v1533 = vld [vmem:[%s1507 + $0xc8] sm:$0xff]
        %v1534 = vld [vmem:[%s1507 + $0xd0] sm:$0xff]
        %v1535 = vld [vmem:[%s1507 + $0xd8] sm:$0xff]
        %v1536 = vld [vmem:[%s1507 + $0xe0] sm:$0xff]
        %v1537 = vld [vmem:[%s1507 + $0xe8] sm:$0xff]
        %v1538 = vld [vmem:[%s1507 + $0xf0] sm:$0xff]
        %v1539 = vld [vmem:[%s1507 + $0xf8] sm:$0xff]
        %1540 = vmatpush.msra.mxu0 %v1523
        %1541 = vmatpush.msra.mxu0 %v1522
        %1542 = vmatpush.msra.mxu0 %v1521
        %1543 = vmatpush.msra.mxu0 %v1520
        %1544 = vmatpush.msra.mxu0 %v1519
        %1545 = vmatpush.msra.mxu0 %v1518
        %1546 = vmatpush.msra.mxu0 %v1517
        %1547 = vmatpush.msra.mxu0 %v1516
        %1548 = vmatpush.msra.mxu0 %v1515
        %1549 = vmatpush.msra.mxu0 %v1514
        %1550 = vmatpush.msra.mxu0 %v1513
        %1551 = vmatpush.msra.mxu0 %v1512
        %1552 = vmatpush.msra.mxu0 %v1511
        %1553 = vmatpush.msra.mxu0 %v1510
        %1554 = vmatpush.msra.mxu0 %v1509
        %1555 = vmatpush.msra.mxu0 %v1508
        %1556 = vmatmul.f32.gmra.mxu0 %v1092
        %v1557 = vpop.f32.mrf.mxu0
        %v1558 = vadd.f32 0.0, %v1557
        %1559 = vdwg.mxu0
        %1560 = vmatpush.msra.mxu0 %v1539
        %1561 = vmatpush.msra.mxu0 %v1538
        %1562 = vmatpush.msra.mxu0 %v1537
        %1563 = vmatpush.msra.mxu0 %v1536
        %1564 = vmatpush.msra.mxu0 %v1535
        %1565 = vmatpush.msra.mxu0 %v1534
        %1566 = vmatpush.msra.mxu0 %v1533
        %1567 = vmatpush.msra.mxu0 %v1532
        %1568 = vmatpush.msra.mxu0 %v1531
        %1569 = vmatpush.msra.mxu0 %v1530
        %1570 = vmatpush.msra.mxu0 %v1529
        %1571 = vmatpush.msra.mxu0 %v1528
        %1572 = vmatpush.msra.mxu0 %v1527
        %1573 = vmatpush.msra.mxu0 %v1526
        %1574 = vmatpush.msra.mxu0 %v1525
        %1575 = vmatpush.msra.mxu0 %v1524
        %1576 = vmatmul.f32.gmra.mxu0 %v1093
        %v1577 = vpop.f32.mrf.mxu0
        %v1578 = vadd.f32 %v1558, %v1577
        %1579 = vdwg.mxu0
        %s1580 = scalar_lea.vmem %s10, 8
        %v1581 = vld [vmem:[%s1580] sm:$0x3]
        %v1583 = vsel %vm747, %v1581, 0
        %v1586 = vsel %vm671, %v1578, 0
        %1588 = vmatpush.msra.mxu0 0.0
        %1589 = vmatpush.msra.mxu0 0.0
        %1590 = vmatpush.msra.mxu0 0.0
        %1591 = vmatpush.msra.mxu0 0.0
        %1592 = vmatpush.msra.mxu0 0.0
        %1593 = vmatpush.msra.mxu0 0.0
        %1594 = vmatpush.msra.mxu0 0.0
        %1595 = vmatpush.msra.mxu0 0.0
        %1596 = vmatpush.msra.mxu0 0.0
        %1597 = vmatpush.msra.mxu0 0.0
        %1598 = vmatpush.msra.mxu0 0.0
        %1599 = vmatpush.msra.mxu0 0.0
        %1600 = vmatpush.msra.mxu0 0.0
        %1601 = vmatpush.msra.mxu0 0.0
        %1602 = vmatpush.msra.mxu0 0.0
        %1603 = vmatpush.msra.mxu0 %v1586
        %1604 = vmatmul.f32.gmra.mxu0 %v1583
        %v1605 = vpop.f32.mrf.mxu0
        %v1606 = vadd.f32 0.0, %v1605
        %1607 = vdwg.mxu0
        %v1608 = vadd.f32 %v1506, %v1606
        %s1609 = scalar_lea.vmem %s2, 1280
        %v1610 = vld [vmem:[%s1609] sm:$0xff]
        %v1611 = vld [vmem:[%s1609 + $0x8] sm:$0xff]
        %v1612 = vld [vmem:[%s1609 + $0x10] sm:$0xff]
        %v1613 = vld [vmem:[%s1609 + $0x18] sm:$0xff]
        %v1614 = vld [vmem:[%s1609 + $0x20] sm:$0xff]
        %v1615 = vld [vmem:[%s1609 + $0x28] sm:$0xff]
        %v1616 = vld [vmem:[%s1609 + $0x30] sm:$0xff]
        %v1617 = vld [vmem:[%s1609 + $0x38] sm:$0xff]
        %v1618 = vld [vmem:[%s1609 + $0x40] sm:$0xff]
        %v1619 = vld [vmem:[%s1609 + $0x48] sm:$0xff]
        %v1620 = vld [vmem:[%s1609 + $0x50] sm:$0xff]
        %v1621 = vld [vmem:[%s1609 + $0x58] sm:$0xff]
        %v1622 = vld [vmem:[%s1609 + $0x60] sm:$0xff]
        %v1623 = vld [vmem:[%s1609 + $0x68] sm:$0xff]
        %v1624 = vld [vmem:[%s1609 + $0x70] sm:$0xff]
        %v1625 = vld [vmem:[%s1609 + $0x78] sm:$0xff]
        %v1626 = vld [vmem:[%s1609 + $0x80] sm:$0xff]
        %v1627 = vld [vmem:[%s1609 + $0x88] sm:$0xff]
        %v1628 = vld [vmem:[%s1609 + $0x90] sm:$0xff]
        %v1629 = vld [vmem:[%s1609 + $0x98] sm:$0xff]
        %v1630 = vld [vmem:[%s1609 + $0xa0] sm:$0xff]
        %v1631 = vld [vmem:[%s1609 + $0xa8] sm:$0xff]
        %v1632 = vld [vmem:[%s1609 + $0xb0] sm:$0xff]
        %v1633 = vld [vmem:[%s1609 + $0xb8] sm:$0xff]
        %v1634 = vld [vmem:[%s1609 + $0xc0] sm:$0xff]
        %v1635 = vld [vmem:[%s1609 + $0xc8] sm:$0xff]
        %v1636 = vld [vmem:[%s1609 + $0xd0] sm:$0xff]
        %v1637 = vld [vmem:[%s1609 + $0xd8] sm:$0xff]
        %v1638 = vld [vmem:[%s1609 + $0xe0] sm:$0xff]
        %v1639 = vld [vmem:[%s1609 + $0xe8] sm:$0xff]
        %v1640 = vld [vmem:[%s1609 + $0xf0] sm:$0xff]
        %v1641 = vld [vmem:[%s1609 + $0xf8] sm:$0xff]
        %1642 = vmatpush.msra.mxu0 %v1625
        %1643 = vmatpush.msra.mxu0 %v1624
        %1644 = vmatpush.msra.mxu0 %v1623
        %1645 = vmatpush.msra.mxu0 %v1622
        %1646 = vmatpush.msra.mxu0 %v1621
        %1647 = vmatpush.msra.mxu0 %v1620
        %1648 = vmatpush.msra.mxu0 %v1619
        %1649 = vmatpush.msra.mxu0 %v1618
        %1650 = vmatpush.msra.mxu0 %v1617
        %1651 = vmatpush.msra.mxu0 %v1616
        %1652 = vmatpush.msra.mxu0 %v1615
        %1653 = vmatpush.msra.mxu0 %v1614
        %1654 = vmatpush.msra.mxu0 %v1613
        %1655 = vmatpush.msra.mxu0 %v1612
        %1656 = vmatpush.msra.mxu0 %v1611
        %1657 = vmatpush.msra.mxu0 %v1610
        %1658 = vmatmul.f32.gmra.mxu0 %v1092
        %v1659 = vpop.f32.mrf.mxu0
        %v1660 = vadd.f32 0.0, %v1659
        %1661 = vdwg.mxu0
        %1662 = vmatpush.msra.mxu0 %v1641
        %1663 = vmatpush.msra.mxu0 %v1640
        %1664 = vmatpush.msra.mxu0 %v1639
        %1665 = vmatpush.msra.mxu0 %v1638
        %1666 = vmatpush.msra.mxu0 %v1637
        %1667 = vmatpush.msra.mxu0 %v1636
        %1668 = vmatpush.msra.mxu0 %v1635
        %1669 = vmatpush.msra.mxu0 %v1634
        %1670 = vmatpush.msra.mxu0 %v1633
        %1671 = vmatpush.msra.mxu0 %v1632
        %1672 = vmatpush.msra.mxu0 %v1631
        %1673 = vmatpush.msra.mxu0 %v1630
        %1674 = vmatpush.msra.mxu0 %v1629
        %1675 = vmatpush.msra.mxu0 %v1628
        %1676 = vmatpush.msra.mxu0 %v1627
        %1677 = vmatpush.msra.mxu0 %v1626
        %1678 = vmatmul.f32.gmra.mxu0 %v1093
        %v1679 = vpop.f32.mrf.mxu0
        %v1680 = vadd.f32 %v1660, %v1679
        %1681 = vdwg.mxu0
        %s1682 = scalar_lea.vmem %s10, 10
        %v1683 = vld [vmem:[%s1682] sm:$0x3]
        %v1685 = vsel %vm747, %v1683, 0
        %v1688 = vsel %vm671, %v1680, 0
        %1690 = vmatpush.msra.mxu0 0.0
        %1691 = vmatpush.msra.mxu0 0.0
        %1692 = vmatpush.msra.mxu0 0.0
        %1693 = vmatpush.msra.mxu0 0.0
        %1694 = vmatpush.msra.mxu0 0.0
        %1695 = vmatpush.msra.mxu0 0.0
        %1696 = vmatpush.msra.mxu0 0.0
        %1697 = vmatpush.msra.mxu0 0.0
        %1698 = vmatpush.msra.mxu0 0.0
        %1699 = vmatpush.msra.mxu0 0.0
        %1700 = vmatpush.msra.mxu0 0.0
        %1701 = vmatpush.msra.mxu0 0.0
        %1702 = vmatpush.msra.mxu0 0.0
        %1703 = vmatpush.msra.mxu0 0.0
        %1704 = vmatpush.msra.mxu0 0.0
        %1705 = vmatpush.msra.mxu0 %v1688
        %1706 = vmatmul.f32.gmra.mxu0 %v1685
        %v1707 = vpop.f32.mrf.mxu0
        %v1708 = vadd.f32 0.0, %v1707
        %1709 = vdwg.mxu0
        %v1710 = vadd.f32 %v1608, %v1708
        %s1711 = scalar_lea.vmem %s2, 1536
        %v1712 = vld [vmem:[%s1711] sm:$0xff]
        %v1713 = vld [vmem:[%s1711 + $0x8] sm:$0xff]
        %v1714 = vld [vmem:[%s1711 + $0x10] sm:$0xff]
        %v1715 = vld [vmem:[%s1711 + $0x18] sm:$0xff]
        %v1716 = vld [vmem:[%s1711 + $0x20] sm:$0xff]
        %v1717 = vld [vmem:[%s1711 + $0x28] sm:$0xff]
        %v1718 = vld [vmem:[%s1711 + $0x30] sm:$0xff]
        %v1719 = vld [vmem:[%s1711 + $0x38] sm:$0xff]
        %v1720 = vld [vmem:[%s1711 + $0x40] sm:$0xff]
        %v1721 = vld [vmem:[%s1711 + $0x48] sm:$0xff]
        %v1722 = vld [vmem:[%s1711 + $0x50] sm:$0xff]
        %v1723 = vld [vmem:[%s1711 + $0x58] sm:$0xff]
        %v1724 = vld [vmem:[%s1711 + $0x60] sm:$0xff]
        %v1725 = vld [vmem:[%s1711 + $0x68] sm:$0xff]
        %v1726 = vld [vmem:[%s1711 + $0x70] sm:$0xff]
        %v1727 = vld [vmem:[%s1711 + $0x78] sm:$0xff]
        %v1728 = vld [vmem:[%s1711 + $0x80] sm:$0xff]
        %v1729 = vld [vmem:[%s1711 + $0x88] sm:$0xff]
        %v1730 = vld [vmem:[%s1711 + $0x90] sm:$0xff]
        %v1731 = vld [vmem:[%s1711 + $0x98] sm:$0xff]
        %v1732 = vld [vmem:[%s1711 + $0xa0] sm:$0xff]
        %v1733 = vld [vmem:[%s1711 + $0xa8] sm:$0xff]
        %v1734 = vld [vmem:[%s1711 + $0xb0] sm:$0xff]
        %v1735 = vld [vmem:[%s1711 + $0xb8] sm:$0xff]
        %v1736 = vld [vmem:[%s1711 + $0xc0] sm:$0xff]
        %v1737 = vld [vmem:[%s1711 + $0xc8] sm:$0xff]
        %v1738 = vld [vmem:[%s1711 + $0xd0] sm:$0xff]
        %v1739 = vld [vmem:[%s1711 + $0xd8] sm:$0xff]
        %v1740 = vld [vmem:[%s1711 + $0xe0] sm:$0xff]
        %v1741 = vld [vmem:[%s1711 + $0xe8] sm:$0xff]
        %v1742 = vld [vmem:[%s1711 + $0xf0] sm:$0xff]
        %v1743 = vld [vmem:[%s1711 + $0xf8] sm:$0xff]
        %1744 = vmatpush.msra.mxu0 %v1727
        %1745 = vmatpush.msra.mxu0 %v1726
        %1746 = vmatpush.msra.mxu0 %v1725
        %1747 = vmatpush.msra.mxu0 %v1724
        %1748 = vmatpush.msra.mxu0 %v1723
        %1749 = vmatpush.msra.mxu0 %v1722
        %1750 = vmatpush.msra.mxu0 %v1721
        %1751 = vmatpush.msra.mxu0 %v1720
        %1752 = vmatpush.msra.mxu0 %v1719
        %1753 = vmatpush.msra.mxu0 %v1718
        %1754 = vmatpush.msra.mxu0 %v1717
        %1755 = vmatpush.msra.mxu0 %v1716
        %1756 = vmatpush.msra.mxu0 %v1715
        %1757 = vmatpush.msra.mxu0 %v1714
        %1758 = vmatpush.msra.mxu0 %v1713
        %1759 = vmatpush.msra.mxu0 %v1712
        %1760 = vmatmul.f32.gmra.mxu0 %v1092
        %v1761 = vpop.f32.mrf.mxu0
        %v1762 = vadd.f32 0.0, %v1761
        %1763 = vdwg.mxu0
        %1764 = vmatpush.msra.mxu0 %v1743
        %1765 = vmatpush.msra.mxu0 %v1742
        %1766 = vmatpush.msra.mxu0 %v1741
        %1767 = vmatpush.msra.mxu0 %v1740
        %1768 = vmatpush.msra.mxu0 %v1739
        %1769 = vmatpush.msra.mxu0 %v1738
        %1770 = vmatpush.msra.mxu0 %v1737
        %1771 = vmatpush.msra.mxu0 %v1736
        %1772 = vmatpush.msra.mxu0 %v1735
        %1773 = vmatpush.msra.mxu0 %v1734
        %1774 = vmatpush.msra.mxu0 %v1733
        %1775 = vmatpush.msra.mxu0 %v1732
        %1776 = vmatpush.msra.mxu0 %v1731
        %1777 = vmatpush.msra.mxu0 %v1730
        %1778 = vmatpush.msra.mxu0 %v1729
        %1779 = vmatpush.msra.mxu0 %v1728
        %1780 = vmatmul.f32.gmra.mxu0 %v1093
        %v1781 = vpop.f32.mrf.mxu0
        %v1782 = vadd.f32 %v1762, %v1781
        %1783 = vdwg.mxu0
        %s1784 = scalar_lea.vmem %s10, 12
        %v1785 = vld [vmem:[%s1784] sm:$0x3]
        %v1787 = vsel %vm747, %v1785, 0
        %v1790 = vsel %vm671, %v1782, 0
        %1792 = vmatpush.msra.mxu0 0.0
        %1793 = vmatpush.msra.mxu0 0.0
        %1794 = vmatpush.msra.mxu0 0.0
        %1795 = vmatpush.msra.mxu0 0.0
        %1796 = vmatpush.msra.mxu0 0.0
        %1797 = vmatpush.msra.mxu0 0.0
        %1798 = vmatpush.msra.mxu0 0.0
        %1799 = vmatpush.msra.mxu0 0.0
        %1800 = vmatpush.msra.mxu0 0.0
        %1801 = vmatpush.msra.mxu0 0.0
        %1802 = vmatpush.msra.mxu0 0.0
        %1803 = vmatpush.msra.mxu0 0.0
        %1804 = vmatpush.msra.mxu0 0.0
        %1805 = vmatpush.msra.mxu0 0.0
        %1806 = vmatpush.msra.mxu0 0.0
        %1807 = vmatpush.msra.mxu0 %v1790
        %1808 = vmatmul.f32.gmra.mxu0 %v1787
        %v1809 = vpop.f32.mrf.mxu0
        %v1810 = vadd.f32 0.0, %v1809
        %1811 = vdwg.mxu0
        %v1812 = vadd.f32 %v1710, %v1810
        %s1813 = scalar_lea.vmem %s2, 1792
        %v1814 = vld [vmem:[%s1813] sm:$0xff]
        %v1815 = vld [vmem:[%s1813 + $0x8] sm:$0xff]
        %v1816 = vld [vmem:[%s1813 + $0x10] sm:$0xff]
        %v1817 = vld [vmem:[%s1813 + $0x18] sm:$0xff]
        %v1818 = vld [vmem:[%s1813 + $0x20] sm:$0xff]
        %v1819 = vld [vmem:[%s1813 + $0x28] sm:$0xff]
        %v1820 = vld [vmem:[%s1813 + $0x30] sm:$0xff]
        %v1821 = vld [vmem:[%s1813 + $0x38] sm:$0xff]
        %v1822 = vld [vmem:[%s1813 + $0x40] sm:$0xff]
        %v1823 = vld [vmem:[%s1813 + $0x48] sm:$0xff]
        %v1824 = vld [vmem:[%s1813 + $0x50] sm:$0xff]
        %v1825 = vld [vmem:[%s1813 + $0x58] sm:$0xff]
        %v1826 = vld [vmem:[%s1813 + $0x60] sm:$0xff]
        %v1827 = vld [vmem:[%s1813 + $0x68] sm:$0xff]
        %v1828 = vld [vmem:[%s1813 + $0x70] sm:$0xff]
        %v1829 = vld [vmem:[%s1813 + $0x78] sm:$0xff]
        %v1830 = vld [vmem:[%s1813 + $0x80] sm:$0xff]
        %v1831 = vld [vmem:[%s1813 + $0x88] sm:$0xff]
        %v1832 = vld [vmem:[%s1813 + $0x90] sm:$0xff]
        %v1833 = vld [vmem:[%s1813 + $0x98] sm:$0xff]
        %v1834 = vld [vmem:[%s1813 + $0xa0] sm:$0xff]
        %v1835 = vld [vmem:[%s1813 + $0xa8] sm:$0xff]
        %v1836 = vld [vmem:[%s1813 + $0xb0] sm:$0xff]
        %v1837 = vld [vmem:[%s1813 + $0xb8] sm:$0xff]
        %v1838 = vld [vmem:[%s1813 + $0xc0] sm:$0xff]
        %v1839 = vld [vmem:[%s1813 + $0xc8] sm:$0xff]
        %v1840 = vld [vmem:[%s1813 + $0xd0] sm:$0xff]
        %v1841 = vld [vmem:[%s1813 + $0xd8] sm:$0xff]
        %v1842 = vld [vmem:[%s1813 + $0xe0] sm:$0xff]
        %v1843 = vld [vmem:[%s1813 + $0xe8] sm:$0xff]
        %v1844 = vld [vmem:[%s1813 + $0xf0] sm:$0xff]
        %v1845 = vld [vmem:[%s1813 + $0xf8] sm:$0xff]
        %1846 = vmatpush.msra.mxu0 %v1829
        %1847 = vmatpush.msra.mxu0 %v1828
        %1848 = vmatpush.msra.mxu0 %v1827
        %1849 = vmatpush.msra.mxu0 %v1826
        %1850 = vmatpush.msra.mxu0 %v1825
        %1851 = vmatpush.msra.mxu0 %v1824
        %1852 = vmatpush.msra.mxu0 %v1823
        %1853 = vmatpush.msra.mxu0 %v1822
        %1854 = vmatpush.msra.mxu0 %v1821
        %1855 = vmatpush.msra.mxu0 %v1820
        %1856 = vmatpush.msra.mxu0 %v1819
        %1857 = vmatpush.msra.mxu0 %v1818
        %1858 = vmatpush.msra.mxu0 %v1817
        %1859 = vmatpush.msra.mxu0 %v1816
        %1860 = vmatpush.msra.mxu0 %v1815
        %1861 = vmatpush.msra.mxu0 %v1814
        %1862 = vmatmul.f32.gmra.mxu0 %v1092
        %v1863 = vpop.f32.mrf.mxu0
        %v1864 = vadd.f32 0.0, %v1863
        %1865 = vdwg.mxu0
        %1866 = vmatpush.msra.mxu0 %v1845
        %1867 = vmatpush.msra.mxu0 %v1844
        %1868 = vmatpush.msra.mxu0 %v1843
        %1869 = vmatpush.msra.mxu0 %v1842
        %1870 = vmatpush.msra.mxu0 %v1841
        %1871 = vmatpush.msra.mxu0 %v1840
        %1872 = vmatpush.msra.mxu0 %v1839
        %1873 = vmatpush.msra.mxu0 %v1838
        %1874 = vmatpush.msra.mxu0 %v1837
        %1875 = vmatpush.msra.mxu0 %v1836
        %1876 = vmatpush.msra.mxu0 %v1835
        %1877 = vmatpush.msra.mxu0 %v1834
        %1878 = vmatpush.msra.mxu0 %v1833
        %1879 = vmatpush.msra.mxu0 %v1832
        %1880 = vmatpush.msra.mxu0 %v1831
        %1881 = vmatpush.msra.mxu0 %v1830
        %1882 = vmatmul.f32.gmra.mxu0 %v1093
        %v1883 = vpop.f32.mrf.mxu0
        %v1884 = vadd.f32 %v1864, %v1883
        %1885 = vdwg.mxu0
        %s1886 = scalar_lea.vmem %s10, 14
        %v1887 = vld [vmem:[%s1886] sm:$0x3]
        %v1889 = vsel %vm747, %v1887, 0
        %v1892 = vsel %vm671, %v1884, 0
        %1894 = vmatpush.msra.mxu0 0.0
        %1895 = vmatpush.msra.mxu0 0.0
        %1896 = vmatpush.msra.mxu0 0.0
        %1897 = vmatpush.msra.mxu0 0.0
        %1898 = vmatpush.msra.mxu0 0.0
        %1899 = vmatpush.msra.mxu0 0.0
        %1900 = vmatpush.msra.mxu0 0.0
        %1901 = vmatpush.msra.mxu0 0.0
        %1902 = vmatpush.msra.mxu0 0.0
        %1903 = vmatpush.msra.mxu0 0.0
        %1904 = vmatpush.msra.mxu0 0.0
        %1905 = vmatpush.msra.mxu0 0.0
        %1906 = vmatpush.msra.mxu0 0.0
        %1907 = vmatpush.msra.mxu0 0.0
        %1908 = vmatpush.msra.mxu0 0.0
        %1909 = vmatpush.msra.mxu0 %v1892
        %1910 = vmatmul.f32.gmra.mxu0 %v1889
        %v1911 = vpop.f32.mrf.mxu0
        %v1912 = vadd.f32 0.0, %v1911
        %1913 = vdwg.mxu0
        %v1914 = vadd.f32 %v1812, %v1912
        %s1915 = scalar_lea.vmem %s2, 2048
        %v1916 = vld [vmem:[%s1915] sm:$0xff]
        %v1917 = vld [vmem:[%s1915 + $0x8] sm:$0xff]
        %v1918 = vld [vmem:[%s1915 + $0x10] sm:$0xff]
        %v1919 = vld [vmem:[%s1915 + $0x18] sm:$0xff]
        %v1920 = vld [vmem:[%s1915 + $0x20] sm:$0xff]
        %v1921 = vld [vmem:[%s1915 + $0x28] sm:$0xff]
        %v1922 = vld [vmem:[%s1915 + $0x30] sm:$0xff]
        %v1923 = vld [vmem:[%s1915 + $0x38] sm:$0xff]
        %v1924 = vld [vmem:[%s1915 + $0x40] sm:$0xff]
        %v1925 = vld [vmem:[%s1915 + $0x48] sm:$0xff]
        %v1926 = vld [vmem:[%s1915 + $0x50] sm:$0xff]
        %v1927 = vld [vmem:[%s1915 + $0x58] sm:$0xff]
        %v1928 = vld [vmem:[%s1915 + $0x60] sm:$0xff]
        %v1929 = vld [vmem:[%s1915 + $0x68] sm:$0xff]
        %v1930 = vld [vmem:[%s1915 + $0x70] sm:$0xff]
        %v1931 = vld [vmem:[%s1915 + $0x78] sm:$0xff]
        %v1932 = vld [vmem:[%s1915 + $0x80] sm:$0xff]
        %v1933 = vld [vmem:[%s1915 + $0x88] sm:$0xff]
        %v1934 = vld [vmem:[%s1915 + $0x90] sm:$0xff]
        %v1935 = vld [vmem:[%s1915 + $0x98] sm:$0xff]
        %v1936 = vld [vmem:[%s1915 + $0xa0] sm:$0xff]
        %v1937 = vld [vmem:[%s1915 + $0xa8] sm:$0xff]
        %v1938 = vld [vmem:[%s1915 + $0xb0] sm:$0xff]
        %v1939 = vld [vmem:[%s1915 + $0xb8] sm:$0xff]
        %v1940 = vld [vmem:[%s1915 + $0xc0] sm:$0xff]
        %v1941 = vld [vmem:[%s1915 + $0xc8] sm:$0xff]
        %v1942 = vld [vmem:[%s1915 + $0xd0] sm:$0xff]
        %v1943 = vld [vmem:[%s1915 + $0xd8] sm:$0xff]
        %v1944 = vld [vmem:[%s1915 + $0xe0] sm:$0xff]
        %v1945 = vld [vmem:[%s1915 + $0xe8] sm:$0xff]
        %v1946 = vld [vmem:[%s1915 + $0xf0] sm:$0xff]
        %v1947 = vld [vmem:[%s1915 + $0xf8] sm:$0xff]
        %1948 = vmatpush.msra.mxu0 %v1931
        %1949 = vmatpush.msra.mxu0 %v1930
        %1950 = vmatpush.msra.mxu0 %v1929
        %1951 = vmatpush.msra.mxu0 %v1928
        %1952 = vmatpush.msra.mxu0 %v1927
        %1953 = vmatpush.msra.mxu0 %v1926
        %1954 = vmatpush.msra.mxu0 %v1925
        %1955 = vmatpush.msra.mxu0 %v1924
        %1956 = vmatpush.msra.mxu0 %v1923
        %1957 = vmatpush.msra.mxu0 %v1922
        %1958 = vmatpush.msra.mxu0 %v1921
        %1959 = vmatpush.msra.mxu0 %v1920
        %1960 = vmatpush.msra.mxu0 %v1919
        %1961 = vmatpush.msra.mxu0 %v1918
        %1962 = vmatpush.msra.mxu0 %v1917
        %1963 = vmatpush.msra.mxu0 %v1916
        %1964 = vmatmul.f32.gmra.mxu0 %v1092
        %v1965 = vpop.f32.mrf.mxu0
        %v1966 = vadd.f32 0.0, %v1965
        %1967 = vdwg.mxu0
        %1968 = vmatpush.msra.mxu0 %v1947
        %1969 = vmatpush.msra.mxu0 %v1946
        %1970 = vmatpush.msra.mxu0 %v1945
        %1971 = vmatpush.msra.mxu0 %v1944
        %1972 = vmatpush.msra.mxu0 %v1943
        %1973 = vmatpush.msra.mxu0 %v1942
        %1974 = vmatpush.msra.mxu0 %v1941
        %1975 = vmatpush.msra.mxu0 %v1940
        %1976 = vmatpush.msra.mxu0 %v1939
        %1977 = vmatpush.msra.mxu0 %v1938
        %1978 = vmatpush.msra.mxu0 %v1937
        %1979 = vmatpush.msra.mxu0 %v1936
        %1980 = vmatpush.msra.mxu0 %v1935
        %1981 = vmatpush.msra.mxu0 %v1934
        %1982 = vmatpush.msra.mxu0 %v1933
        %1983 = vmatpush.msra.mxu0 %v1932
        %1984 = vmatmul.f32.gmra.mxu0 %v1093
        %v1985 = vpop.f32.mrf.mxu0
        %v1986 = vadd.f32 %v1966, %v1985
        %1987 = vdwg.mxu0
        %s1988 = scalar_lea.vmem %s10, 16
        %v1989 = vld [vmem:[%s1988] sm:$0x3]
        %v1991 = vsel %vm747, %v1989, 0
        %v1994 = vsel %vm671, %v1986, 0
        %1996 = vmatpush.msra.mxu0 0.0
        %1997 = vmatpush.msra.mxu0 0.0
        %1998 = vmatpush.msra.mxu0 0.0
        %1999 = vmatpush.msra.mxu0 0.0
        %2000 = vmatpush.msra.mxu0 0.0
        %2001 = vmatpush.msra.mxu0 0.0
        %2002 = vmatpush.msra.mxu0 0.0
        %2003 = vmatpush.msra.mxu0 0.0
        %2004 = vmatpush.msra.mxu0 0.0
        %2005 = vmatpush.msra.mxu0 0.0
        %2006 = vmatpush.msra.mxu0 0.0
        %2007 = vmatpush.msra.mxu0 0.0
        %2008 = vmatpush.msra.mxu0 0.0
        %2009 = vmatpush.msra.mxu0 0.0
        %2010 = vmatpush.msra.mxu0 0.0
        %2011 = vmatpush.msra.mxu0 %v1994
        %2012 = vmatmul.f32.gmra.mxu0 %v1991
        %v2013 = vpop.f32.mrf.mxu0
        %v2014 = vadd.f32 0.0, %v2013
        %2015 = vdwg.mxu0
        %v2016 = vadd.f32 %v1914, %v2014
        %v2017 = vld [vmem:[%s3] sm:$0xff]
        %v2018 = vld [vmem:[%s3 + $0x8] sm:$0xff]
        %v2019 = vld [vmem:[%s3 + $0x10] sm:$0xff]
        %v2020 = vld [vmem:[%s3 + $0x18] sm:$0xff]
        %v2022 = vsel %vm781, %v2016, 0
        %2024 = vmatpush.msra.mxu0 0.0
        %2025 = vmatpush.msra.mxu0 0.0
        %2026 = vmatpush.msra.mxu0 0.0
        %2027 = vmatpush.msra.mxu0 0.0
        %2028 = vmatpush.msra.mxu0 0.0
        %2029 = vmatpush.msra.mxu0 0.0
        %2030 = vmatpush.msra.mxu0 0.0
        %2031 = vmatpush.msra.mxu0 0.0
        %2032 = vmatpush.msra.mxu0 0.0
        %2033 = vmatpush.msra.mxu0 0.0
        %2034 = vmatpush.msra.mxu0 0.0
        %2035 = vmatpush.msra.mxu0 0.0
        %2036 = vmatpush.msra.mxu0 0.0
        %2037 = vmatpush.msra.mxu0 0.0
        %2038 = vmatpush.msra.mxu0 %v2019
        %2039 = vmatpush.msra.mxu0 %v2017
        %2040 = vmatmul.f32.gmra.mxu0 %v2022
        %v2041 = vpop.f32.mrf.mxu0
        %v2042 = vadd.f32 0.0, %v2041
        %2043 = vdwg.mxu0
        %2044 = vmatpush.msra.mxu0 0.0
        %2045 = vmatpush.msra.mxu0 0.0
        %2046 = vmatpush.msra.mxu0 0.0
        %2047 = vmatpush.msra.mxu0 0.0
        %2048 = vmatpush.msra.mxu0 0.0
        %2049 = vmatpush.msra.mxu0 0.0
        %2050 = vmatpush.msra.mxu0 0.0
        %2051 = vmatpush.msra.mxu0 0.0
        %2052 = vmatpush.msra.mxu0 0.0
        %2053 = vmatpush.msra.mxu0 0.0
        %2054 = vmatpush.msra.mxu0 0.0
        %2055 = vmatpush.msra.mxu0 0.0
        %2056 = vmatpush.msra.mxu0 0.0
        %2057 = vmatpush.msra.mxu0 0.0
        %2058 = vmatpush.msra.mxu0 %v2020
        %2059 = vmatpush.msra.mxu0 %v2018
        %2060 = vmatmul.f32.gmra.mxu0 %v2022
        %v2061 = vpop.f32.mrf.mxu0
        %v2062 = vadd.f32 0.0, %v2061
        %2063 = vdwg.mxu0
        %v2064 = vadd.f32 %v1092, %v2042
        %v2065 = vadd.f32 %v1093, %v2062
        %v2066 = vadd.f32 %v2064, 1e-08
        %v2067 = vadd.f32 %v2065, 1e-08
        %v2068 = vsub.f32 0.0, %v2066
        %v2069 = vsub.f32 0.0, %v2067
        %v2070 = vmul.f32 %v2068, 1.442695
        %v2071 = vpow.pop %v2070
        %v2072 = vmul.f32 %v2069, 1.442695
        %v2073 = vpow.pop %v2072
        %v2074 = vadd.f32 %v2071, 1.0
        %v2075 = vadd.f32 %v2073, 1.0
        %v2076 = vrcp.pop %v2074
        %v2077 = vrcp.pop %v2075
        %v2080 = vrot.slane %v1093, 6
        %v2081 = vsel %vm671, %v1092, %v2080
        %2082 = vrot.lane.b32.xlu0 %v2081, 17
        %v2083 = vpop.permute.xlu0 %2082
        %v2084 = vrot.slane %v2083, 6
        %v2085 = vsel %vm676, %v2084, %v2083
        %2087 = vst.msk [vmem:[#allocation2] sm:$0x3f] %vm683, %v2085
        %v2088 = vld [vmem:[#allocation2] sm:$0xf]
        %v2089 = vld [vmem:[%s1] sm:$0x3]
        %v2091 = vperm.slane %v2089, 0
        %v2092 = vperm.slane %v2089, 1
        %v2093 = vrot.slane %v2092, 6
        %v2094 = vsel %vm671, %v2091, %v2093
        %v2096 = vmul.f32 %v2088, %v2094
        %2098 = vst [vmem:[#allocation1] ss:$4 sm:$0xff] %v2096
        %v2099 = vld.sshfl [vmem:[#allocation1] sm:$0xff pattern:$0x73625140]
        %v2100 = vld.sshfl [vmem:[#allocation1 + $0x8] sm:$0xff pattern:$0x73625140]
        %2103 = vst [vmem:[#allocation3] sm:$0x3] %v2099
        %2104 = vst [vmem:[#allocation3 + $0x8] sm:$0x3] %v2100
        %v2105 = vld [vmem:[#allocation2] sm:$0x3f]
        %v2106 = vld [vmem:[%s703] sm:$0x3]
        %v2108 = vperm.slane %v2106, 0
        %v2109 = vperm.slane %v2106, 1
        %v2110 = vrot.slane %v2109, 6
        %v2111 = vsel %vm671, %v2108, %v2110
        %2112 = vrot.lane.b32.xlu0 %v2111, 1
        %v2113 = vpop.permute.xlu0 %2112
        %v2114 = vrot.slane %v2113, 6
        %v2115 = vsel %vm713, %v2114, %v2113
        %v2117 = vmul.f32 %v2105, %v2115
        %s2119 = scalar_lea.vmem [#allocation1], 1
        %2120 = vst [vmem:[%s2119] ss:$4 sm:$0xff] %v2117
        %v2121 = vld.sshfl [vmem:[#allocation1] sm:$0xff pattern:$0x73625140]
        %v2122 = vld.sshfl [vmem:[#allocation1 + $0x8] sm:$0xff pattern:$0x73625140]
        %v2123 = vld.sshfl [vmem:[#allocation1 + $0x10] sm:$0xff pattern:$0x73625140]
        %2124 = vrot.lane.b32.xlu0 %v2121, 127
        %v2125 = vpop.permute.xlu0 %2124
        %2126 = vrot.lane.b32.xlu0 %v2122, 127
        %v2127 = vpop.permute.xlu0 %2126
        %2128 = vrot.lane.b32.xlu0 %v2123, 127
        %v2129 = vpop.permute.xlu0 %2128
        %v2130 = vsel %vm729, %v2125, %v2127
        %v2131 = vsel %vm729, %v2127, %v2129
        %2134 = vst [vmem:[#allocation3] sm:$0xc] %v2130
        %2135 = vst [vmem:[#allocation3 + $0x8] sm:$0xc] %v2131
        %v2136 = vld [vmem:[#allocation2] sm:$0x3f]
        %v2137 = vld [vmem:[%s737] sm:$0x3]
        %v2139 = vperm.slane %v2137, 0
        %v2140 = vperm.slane %v2137, 1
        %v2141 = vrot.slane %v2140, 6
        %v2142 = vsel %vm671, %v2139, %v2141
        %2143 = vrot.lane.b32.xlu0 %v2142, 2
        %v2144 = vpop.permute.xlu0 %2143
        %v2145 = vrot.slane %v2144, 6
        %v2146 = vsel %vm747, %v2145, %v2144
        %v2148 = vmul.f32 %v2136, %v2146
        %s2150 = scalar_lea.vmem [#allocation1], 2
        %2151 = vst [vmem:[%s2150] ss:$4 sm:$0xff] %v2148
        %v2152 = vld.sshfl [vmem:[#allocation1] sm:$0xff pattern:$0x73625140]
        %v2153 = vld.sshfl [vmem:[#allocation1 + $0x8] sm:$0xff pattern:$0x73625140]
        %v2154 = vld.sshfl [vmem:[#allocation1 + $0x10] sm:$0xff pattern:$0x73625140]
        %2155 = vrot.lane.b32.xlu0 %v2152, 126
        %v2156 = vpop.permute.xlu0 %2155
        %2157 = vrot.lane.b32.xlu0 %v2153, 126
        %v2158 = vpop.permute.xlu0 %2157
        %2159 = vrot.lane.b32.xlu0 %v2154, 126
        %v2160 = vpop.permute.xlu0 %2159
        %v2161 = vsel %vm763, %v2156, %v2158
        %v2162 = vsel %vm763, %v2158, %v2160
        %2165 = vst [vmem:[#allocation3] sm:$0x30] %v2161
        %2166 = vst [vmem:[#allocation3 + $0x8] sm:$0x30] %v2162
        %v2167 = vld [vmem:[#allocation2] sm:$0x3f]
        %v2168 = vld [vmem:[%s771] sm:$0x3]
        %v2170 = vperm.slane %v2168, 0
        %v2171 = vperm.slane %v2168, 1
        %v2172 = vrot.slane %v2171, 6
        %v2173 = vsel %vm671, %v2170, %v2172
        %2174 = vrot.lane.b32.xlu0 %v2173, 16
        %v2175 = vpop.permute.xlu0 %2174
        %v2176 = vrot.slane %v2175, 6
        %v2177 = vsel %vm781, %v2176, %v2175
        %v2179 = vmul.f32 %v2167, %v2177
        %s2181 = scalar_lea.vmem [#allocation1], 3
        %2182 = vst [vmem:[%s2181] ss:$4 sm:$0xff] %v2179
        %v2183 = vld.sshfl [vmem:[#allocation1] sm:$0xff pattern:$0x73625140]
        %v2184 = vld.sshfl [vmem:[#allocation1 + $0x8] sm:$0xff pattern:$0x73625140]
        %v2185 = vld.sshfl [vmem:[#allocation1 + $0x10] sm:$0xff pattern:$0x73625140]
        %2186 = vrot.lane.b32.xlu0 %v2183, 112
        %v2187 = vpop.permute.xlu0 %2186
        %2188 = vrot.lane.b32.xlu0 %v2184, 112
        %v2189 = vpop.permute.xlu0 %2188
        %2190 = vrot.lane.b32.xlu0 %v2185, 112
        %v2191 = vpop.permute.xlu0 %2190
        %v2192 = vsel %vm797, %v2187, %v2189
        %v2193 = vsel %vm797, %v2189, %v2191
        %2196 = vst [vmem:[#allocation3] sm:$0xc0] %v2192
        %2197 = vst [vmem:[#allocation3 + $0x8] sm:$0xc0] %v2193
        %v2198 = vld [vmem:[#allocation2] sm:$0x3f]
        %v2199 = vld [vmem:[%s805] sm:$0x3]
        %v2201 = vperm.slane %v2199, 0
        %v2202 = vperm.slane %v2199, 1
        %v2203 = vrot.slane %v2202, 6
        %v2204 = vsel %vm671, %v2201, %v2203
        %2205 = vrot.lane.b32.xlu0 %v2204, 17
        %v2206 = vpop.permute.xlu0 %2205
        %v2207 = vrot.slane %v2206, 6
        %v2208 = vsel %vm676, %v2207, %v2206
        %v2210 = vmul.f32 %v2198, %v2208
        %2212 = vst [vmem:[#allocation1] ss:$4 sm:$0xff] %v2210
        %v2213 = vld.sshfl [vmem:[#allocation1] sm:$0xff pattern:$0x73625140]
        %v2214 = vld.sshfl [vmem:[#allocation1 + $0x8] sm:$0xff pattern:$0x73625140]
        %v2215 = vld.sshfl [vmem:[#allocation1 + $0x10] sm:$0xff pattern:$0x73625140]
        %2216 = vrot.lane.b32.xlu0 %v2213, 111
        %v2217 = vpop.permute.xlu0 %2216
        %2218 = vrot.lane.b32.xlu0 %v2214, 111
        %v2219 = vpop.permute.xlu0 %2218
        %2220 = vrot.lane.b32.xlu0 %v2215, 111
        %v2221 = vpop.permute.xlu0 %2220
        %v2222 = vsel %vm829, %v2217, %v2219
        %v2223 = vsel %vm829, %v2219, %v2221
        %2226 = vst [vmem:[#allocation3 + $0x10] sm:$0x3] %v2222
        %2227 = vst [vmem:[#allocation3 + $0x18] sm:$0x3] %v2223
        %v2228 = vld [vmem:[#allocation2] sm:$0x3f]
        %v2229 = vld [vmem:[%s837] sm:$0x3]
        %v2231 = vperm.slane %v2229, 0
        %v2232 = vperm.slane %v2229, 1
        %v2233 = vrot.slane %v2232, 6
        %v2234 = vsel %vm671, %v2231, %v2233
        %2235 = vrot.lane.b32.xlu0 %v2234, 18
        %v2236 = vpop.permute.xlu0 %2235
        %v2237 = vrot.slane %v2236, 6
        %v2238 = vsel %vm847, %v2237, %v2236
        %v2240 = vmul.f32 %v2228, %v2238
        %s2242 = scalar_lea.vmem [#allocation1], 1
        %2243 = vst [vmem:[%s2242] ss:$4 sm:$0xff] %v2240
        %v2244 = vld.sshfl [vmem:[#allocation1] sm:$0xff pattern:$0x73625140]
        %v2245 = vld.sshfl [vmem:[#allocation1 + $0x8] sm:$0xff pattern:$0x73625140]
        %v2246 = vld.sshfl [vmem:[#allocation1 + $0x10] sm:$0xff pattern:$0x73625140]
        %2247 = vrot.lane.b32.xlu0 %v2244, 110
        %v2248 = vpop.permute.xlu0 %2247
        %2249 = vrot.lane.b32.xlu0 %v2245, 110
        %v2250 = vpop.permute.xlu0 %2249
        %2251 = vrot.lane.b32.xlu0 %v2246, 110
        %v2252 = vpop.permute.xlu0 %2251
        %v2253 = vsel %vm863, %v2248, %v2250
        %v2254 = vsel %vm863, %v2250, %v2252
        %2257 = vst [vmem:[#allocation3 + $0x10] sm:$0xc] %v2253
        %2258 = vst [vmem:[#allocation3 + $0x18] sm:$0xc] %v2254
        %v2259 = vld [vmem:[#allocation2] sm:$0x3f]
        %v2260 = vld [vmem:[%s871] sm:$0x3]
        %v2262 = vperm.slane %v2260, 0
        %v2263 = vperm.slane %v2260, 1
        %v2264 = vrot.slane %v2263, 6
        %v2265 = vsel %vm671, %v2262, %v2264
        %2266 = vrot.lane.b32.xlu0 %v2265, 32
        %v2267 = vpop.permute.xlu0 %2266
        %v2268 = vrot.slane %v2267, 6
        %v2269 = vsel %vm881, %v2268, %v2267
        %v2271 = vmul.f32 %v2259, %v2269
        %s2273 = scalar_lea.vmem [#allocation1], 2
        %2274 = vst [vmem:[%s2273] ss:$4 sm:$0xff] %v2271
        %v2275 = vld.sshfl [vmem:[#allocation1] sm:$0xff pattern:$0x73625140]
        %v2276 = vld.sshfl [vmem:[#allocation1 + $0x8] sm:$0xff pattern:$0x73625140]
        %v2277 = vld.sshfl [vmem:[#allocation1 + $0x10] sm:$0xff pattern:$0x73625140]
        %2278 = vrot.lane.b32.xlu0 %v2275, 96
        %v2279 = vpop.permute.xlu0 %2278
        %2280 = vrot.lane.b32.xlu0 %v2276, 96
        %v2281 = vpop.permute.xlu0 %2280
        %2282 = vrot.lane.b32.xlu0 %v2277, 96
        %v2283 = vpop.permute.xlu0 %2282
        %v2284 = vsel %vm897, %v2279, %v2281
        %v2285 = vsel %vm897, %v2281, %v2283
        %2288 = vst [vmem:[#allocation3 + $0x10] sm:$0x30] %v2284
        %2289 = vst [vmem:[#allocation3 + $0x18] sm:$0x30] %v2285
        %v2290 = vld [vmem:[#allocation2] sm:$0x3f]
        %v2291 = vld [vmem:[%s905] sm:$0x3]
        %v2293 = vperm.slane %v2291, 0
        %v2294 = vperm.slane %v2291, 1
        %v2295 = vrot.slane %v2294, 6
        %v2296 = vsel %vm671, %v2293, %v2295
        %2297 = vrot.lane.b32.xlu0 %v2296, 33
        %v2298 = vpop.permute.xlu0 %2297
        %v2299 = vrot.slane %v2298, 6
        %v2300 = vsel %vm915, %v2299, %v2298
        %v2302 = vmul.f32 %v2290, %v2300
        %s2304 = scalar_lea.vmem [#allocation1], 3
        %2305 = vst [vmem:[%s2304] ss:$4 sm:$0xff] %v2302
        %v2306 = vld.sshfl [vmem:[#allocation1] sm:$0xff pattern:$0x73625140]
        %v2307 = vld.sshfl [vmem:[#allocation1 + $0x8] sm:$0xff pattern:$0x73625140]
        %v2308 = vld.sshfl [vmem:[#allocation1 + $0x10] sm:$0xff pattern:$0x73625140]
        %2309 = vrot.lane.b32.xlu0 %v2306, 95
        %v2310 = vpop.permute.xlu0 %2309
        %2311 = vrot.lane.b32.xlu0 %v2307, 95
        %v2312 = vpop.permute.xlu0 %2311
        %2313 = vrot.lane.b32.xlu0 %v2308, 95
        %v2314 = vpop.permute.xlu0 %2313
        %v2315 = vsel %vm931, %v2310, %v2312
        %v2316 = vsel %vm931, %v2312, %v2314
        %2319 = vst [vmem:[#allocation3 + $0x10] sm:$0xc0] %v2315
        %2320 = vst [vmem:[#allocation3 + $0x18] sm:$0xc0] %v2316
        %v2321 = vld [vmem:[#allocation2] sm:$0x3f]
        %v2322 = vld [vmem:[%s939] sm:$0x3]
        %v2324 = vperm.slane %v2322, 0
        %v2325 = vperm.slane %v2322, 1
        %v2326 = vrot.slane %v2325, 6
        %v2327 = vsel %vm671, %v2324, %v2326
        %2328 = vrot.lane.b32.xlu0 %v2327, 34
        %v2329 = vpop.permute.xlu0 %2328
        %v2330 = vrot.slane %v2329, 6
        %v2331 = vsel %vm949, %v2330, %v2329
        %v2333 = vmul.f32 %v2321, %v2331
        %2335 = vst [vmem:[#allocation1] ss:$4 sm:$0xff] %v2333
        %v2336 = vld.sshfl [vmem:[#allocation1] sm:$0xff pattern:$0x73625140]
        %v2337 = vld.sshfl [vmem:[#allocation1 + $0x8] sm:$0xff pattern:$0x73625140]
        %v2338 = vld.sshfl [vmem:[#allocation1 + $0x10] sm:$0xff pattern:$0x73625140]
        %2339 = vrot.lane.b32.xlu0 %v2336, 94
        %v2340 = vpop.permute.xlu0 %2339
        %2341 = vrot.lane.b32.xlu0 %v2337, 94
        %v2342 = vpop.permute.xlu0 %2341
        %2343 = vrot.lane.b32.xlu0 %v2338, 94
        %v2344 = vpop.permute.xlu0 %2343
        %v2345 = vsel %vm964, %v2340, %v2342
        %v2346 = vsel %vm964, %v2342, %v2344
        %2349 = vst [vmem:[#allocation3 + $0x20] sm:$0x3] %v2345
        %2350 = vst [vmem:[#allocation3 + $0x28] sm:$0x3] %v2346
        %v2351 = vld [vmem:[%s12] sm:$0x3]
        %v2352 = vld [vmem:[#allocation3] sm:$0xff]
        %v2353 = vld [vmem:[#allocation3 + $0x8] sm:$0xff]
        %v2354 = vld [vmem:[#allocation3 + $0x10] sm:$0xff]
        %v2355 = vld [vmem:[#allocation3 + $0x18] sm:$0xff]
        %v2356 = vld [vmem:[#allocation3 + $0x20] sm:$0x3]
        %v2357 = vld [vmem:[#allocation3 + $0x28] sm:$0x3]
        %v2358 = vld [vmem:[%s13] sm:$0x3]
        %2360 = vset.pattern.permute.xlu0 0
        %2361 = vperm.xlu0 %2360, %v2358
        %v2362 = vpop.permute.xlu0 %2361
        %v2365 = vsel %vm847, %v2351, 0
        %v2368 = vsel %vm671, %v2356, 0
        %v2371 = vsel %vm671, %v2357, 0
        %2373 = vmatpush.msra.mxu0 0.0
        %2374 = vmatpush.msra.mxu0 0.0
        %2375 = vmatpush.msra.mxu0 0.0
        %2376 = vmatpush.msra.mxu0 0.0
        %2377 = vmatpush.msra.mxu0 0.0
        %2378 = vmatpush.msra.mxu0 0.0
        %2379 = vmatpush.msra.mxu0 0.0
        %2380 = vmatpush.msra.mxu0 0.0
        %2381 = vmatpush.msra.mxu0 0.0
        %2382 = vmatpush.msra.mxu0 0.0
        %2383 = vmatpush.msra.mxu0 0.0
        %2384 = vmatpush.msra.mxu0 0.0
        %2385 = vmatpush.msra.mxu0 0.0
        %2386 = vmatpush.msra.mxu0 %v2368
        %2387 = vmatpush.msra.mxu0 %v2354
        %2388 = vmatpush.msra.mxu0 %v2352
        %2389 = vmatmul.f32.gmra.mxu0 %v2365
        %v2390 = vpop.f32.mrf.mxu0
        %v2391 = vadd.f32 %v2362, %v2390
        %2392 = vdwg.mxu0
        %2393 = vmatpush.msra.mxu0 0.0
        %2394 = vmatpush.msra.mxu0 0.0
        %2395 = vmatpush.msra.mxu0 0.0
        %2396 = vmatpush.msra.mxu0 0.0
        %2397 = vmatpush.msra.mxu0 0.0
        %2398 = vmatpush.msra.mxu0 0.0
        %2399 = vmatpush.msra.mxu0 0.0
        %2400 = vmatpush.msra.mxu0 0.0
        %2401 = vmatpush.msra.mxu0 0.0
        %2402 = vmatpush.msra.mxu0 0.0
        %2403 = vmatpush.msra.mxu0 0.0
        %2404 = vmatpush.msra.mxu0 0.0
        %2405 = vmatpush.msra.mxu0 0.0
        %2406 = vmatpush.msra.mxu0 %v2371
        %2407 = vmatpush.msra.mxu0 %v2355
        %2408 = vmatpush.msra.mxu0 %v2353
        %2409 = vmatmul.f32.gmra.mxu0 %v2365
        %v2410 = vpop.f32.mrf.mxu0
        %v2411 = vadd.f32 %v2362, %v2410
        %2412 = vdwg.mxu0
        %v2413 = vmul.f32 %v2391, %v2076
        %v2414 = vmul.f32 %v2411, %v2077
        %v2417 = vrot.slane %v2414, 6
        %v2418 = vsel %vm671, %v2413, %v2417
        %2419 = vrot.lane.b32.xlu0 %v2418, 17
        %v2420 = vpop.permute.xlu0 %2419
        %v2421 = vrot.slane %v2420, 6
        %v2422 = vsel %vm676, %v2421, %v2420
        %2424 = vst.msk [vmem:[#allocation2] sm:$0x3f] %vm683, %v2422
        %v2425 = vld [vmem:[#allocation2] sm:$0xf]
        %v2426 = vld [vmem:[%s1] sm:$0x3]
        %v2428 = vperm.slane %v2426, 0
        %v2429 = vperm.slane %v2426, 1
        %v2430 = vrot.slane %v2429, 6
        %v2431 = vsel %vm671, %v2428, %v2430
        %v2433 = vmul.f32 %v2425, %v2431
        %2435 = vst [vmem:[#allocation1] ss:$4 sm:$0xff] %v2433
        %v2436 = vld.sshfl [vmem:[#allocation1] sm:$0xff pattern:$0x73625140]
        %v2437 = vld.sshfl [vmem:[#allocation1 + $0x8] sm:$0xff pattern:$0x73625140]
        %2440 = vst [vmem:[#allocation3] sm:$0x3] %v2436
        %2441 = vst [vmem:[#allocation3 + $0x8] sm:$0x3] %v2437
        %v2442 = vld [vmem:[#allocation2] sm:$0x3f]
        %v2443 = vld [vmem:[%s703] sm:$0x3]
        %v2445 = vperm.slane %v2443, 0
        %v2446 = vperm.slane %v2443, 1
        %v2447 = vrot.slane %v2446, 6
        %v2448 = vsel %vm671, %v2445, %v2447
        %2449 = vrot.lane.b32.xlu0 %v2448, 1
        %v2450 = vpop.permute.xlu0 %2449
        %v2451 = vrot.slane %v2450, 6
        %v2452 = vsel %vm713, %v2451, %v2450
        %v2454 = vmul.f32 %v2442, %v2452
        %s2456 = scalar_lea.vmem [#allocation1], 1
        %2457 = vst [vmem:[%s2456] ss:$4 sm:$0xff] %v2454
        %v2458 = vld.sshfl [vmem:[#allocation1] sm:$0xff pattern:$0x73625140]
        %v2459 = vld.sshfl [vmem:[#allocation1 + $0x8] sm:$0xff pattern:$0x73625140]
        %v2460 = vld.sshfl [vmem:[#allocation1 + $0x10] sm:$0xff pattern:$0x73625140]
        %2461 = vrot.lane.b32.xlu0 %v2458, 127
        %v2462 = vpop.permute.xlu0 %2461
        %2463 = vrot.lane.b32.xlu0 %v2459, 127
        %v2464 = vpop.permute.xlu0 %2463
        %2465 = vrot.lane.b32.xlu0 %v2460, 127
        %v2466 = vpop.permute.xlu0 %2465
        %v2467 = vsel %vm729, %v2462, %v2464
        %v2468 = vsel %vm729, %v2464, %v2466
        %2471 = vst [vmem:[#allocation3] sm:$0xc] %v2467
        %2472 = vst [vmem:[#allocation3 + $0x8] sm:$0xc] %v2468
        %v2473 = vld [vmem:[#allocation2] sm:$0x3f]
        %v2474 = vld [vmem:[%s737] sm:$0x3]
        %v2476 = vperm.slane %v2474, 0
        %v2477 = vperm.slane %v2474, 1
        %v2478 = vrot.slane %v2477, 6
        %v2479 = vsel %vm671, %v2476, %v2478
        %2480 = vrot.lane.b32.xlu0 %v2479, 2
        %v2481 = vpop.permute.xlu0 %2480
        %v2482 = vrot.slane %v2481, 6
        %v2483 = vsel %vm747, %v2482, %v2481
        %v2485 = vmul.f32 %v2473, %v2483
        %s2487 = scalar_lea.vmem [#allocation1], 2
        %2488 = vst [vmem:[%s2487] ss:$4 sm:$0xff] %v2485
        %v2489 = vld.sshfl [vmem:[#allocation1] sm:$0xff pattern:$0x73625140]
        %v2490 = vld.sshfl [vmem:[#allocation1 + $0x8] sm:$0xff pattern:$0x73625140]
        %v2491 = vld.sshfl [vmem:[#allocation1 + $0x10] sm:$0xff pattern:$0x73625140]
        %2492 = vrot.lane.b32.xlu0 %v2489, 126
        %v2493 = vpop.permute.xlu0 %2492
        %2494 = vrot.lane.b32.xlu0 %v2490, 126
        %v2495 = vpop.permute.xlu0 %2494
        %2496 = vrot.lane.b32.xlu0 %v2491, 126
        %v2497 = vpop.permute.xlu0 %2496
        %v2498 = vsel %vm763, %v2493, %v2495
        %v2499 = vsel %vm763, %v2495, %v2497
        %2502 = vst [vmem:[#allocation3] sm:$0x30] %v2498
        %2503 = vst [vmem:[#allocation3 + $0x8] sm:$0x30] %v2499
        %v2504 = vld [vmem:[#allocation2] sm:$0x3f]
        %v2505 = vld [vmem:[%s771] sm:$0x3]
        %v2507 = vperm.slane %v2505, 0
        %v2508 = vperm.slane %v2505, 1
        %v2509 = vrot.slane %v2508, 6
        %v2510 = vsel %vm671, %v2507, %v2509
        %2511 = vrot.lane.b32.xlu0 %v2510, 16
        %v2512 = vpop.permute.xlu0 %2511
        %v2513 = vrot.slane %v2512, 6
        %v2514 = vsel %vm781, %v2513, %v2512
        %v2516 = vmul.f32 %v2504, %v2514
        %s2518 = scalar_lea.vmem [#allocation1], 3
        %2519 = vst [vmem:[%s2518] ss:$4 sm:$0xff] %v2516
        %v2520 = vld.sshfl [vmem:[#allocation1] sm:$0xff pattern:$0x73625140]
        %v2521 = vld.sshfl [vmem:[#allocation1 + $0x8] sm:$0xff pattern:$0x73625140]
        %v2522 = vld.sshfl [vmem:[#allocation1 + $0x10] sm:$0xff pattern:$0x73625140]
        %2523 = vrot.lane.b32.xlu0 %v2520, 112
        %v2524 = vpop.permute.xlu0 %2523
        %2525 = vrot.lane.b32.xlu0 %v2521, 112
        %v2526 = vpop.permute.xlu0 %2525
        %2527 = vrot.lane.b32.xlu0 %v2522, 112
        %v2528 = vpop.permute.xlu0 %2527
        %v2529 = vsel %vm797, %v2524, %v2526
        %v2530 = vsel %vm797, %v2526, %v2528
        %2533 = vst [vmem:[#allocation3] sm:$0xc0] %v2529
        %2534 = vst [vmem:[#allocation3 + $0x8] sm:$0xc0] %v2530
        %v2535 = vld [vmem:[#allocation2] sm:$0x3f]
        %v2536 = vld [vmem:[%s805] sm:$0x3]
        %v2538 = vperm.slane %v2536, 0
        %v2539 = vperm.slane %v2536, 1
        %v2540 = vrot.slane %v2539, 6
        %v2541 = vsel %vm671, %v2538, %v2540
        %2542 = vrot.lane.b32.xlu0 %v2541, 17
        %v2543 = vpop.permute.xlu0 %2542
        %v2544 = vrot.slane %v2543, 6
        %v2545 = vsel %vm676, %v2544, %v2543
        %v2547 = vmul.f32 %v2535, %v2545
        %2549 = vst [vmem:[#allocation1] ss:$4 sm:$0xff] %v2547
        %v2550 = vld.sshfl [vmem:[#allocation1] sm:$0xff pattern:$0x73625140]
        %v2551 = vld.sshfl [vmem:[#allocation1 + $0x8] sm:$0xff pattern:$0x73625140]
        %v2552 = vld.sshfl [vmem:[#allocation1 + $0x10] sm:$0xff pattern:$0x73625140]
        %2553 = vrot.lane.b32.xlu0 %v2550, 111
        %v2554 = vpop.permute.xlu0 %2553
        %2555 = vrot.lane.b32.xlu0 %v2551, 111
        %v2556 = vpop.permute.xlu0 %2555
        %2557 = vrot.lane.b32.xlu0 %v2552, 111
        %v2558 = vpop.permute.xlu0 %2557
        %v2559 = vsel %vm829, %v2554, %v2556
        %v2560 = vsel %vm829, %v2556, %v2558
        %2563 = vst [vmem:[#allocation3 + $0x10] sm:$0x3] %v2559
        %2564 = vst [vmem:[#allocation3 + $0x18] sm:$0x3] %v2560
        %v2565 = vld [vmem:[#allocation2] sm:$0x3f]
        %v2566 = vld [vmem:[%s837] sm:$0x3]
        %v2568 = vperm.slane %v2566, 0
        %v2569 = vperm.slane %v2566, 1
        %v2570 = vrot.slane %v2569, 6
        %v2571 = vsel %vm671, %v2568, %v2570
        %2572 = vrot.lane.b32.xlu0 %v2571, 18
        %v2573 = vpop.permute.xlu0 %2572
        %v2574 = vrot.slane %v2573, 6
        %v2575 = vsel %vm847, %v2574, %v2573
        %v2577 = vmul.f32 %v2565, %v2575
        %s2579 = scalar_lea.vmem [#allocation1], 1
        %2580 = vst [vmem:[%s2579] ss:$4 sm:$0xff] %v2577
        %v2581 = vld.sshfl [vmem:[#allocation1] sm:$0xff pattern:$0x73625140]
        %v2582 = vld.sshfl [vmem:[#allocation1 + $0x8] sm:$0xff pattern:$0x73625140]
        %v2583 = vld.sshfl [vmem:[#allocation1 + $0x10] sm:$0xff pattern:$0x73625140]
        %2584 = vrot.lane.b32.xlu0 %v2581, 110
        %v2585 = vpop.permute.xlu0 %2584
        %2586 = vrot.lane.b32.xlu0 %v2582, 110
        %v2587 = vpop.permute.xlu0 %2586
        %2588 = vrot.lane.b32.xlu0 %v2583, 110
        %v2589 = vpop.permute.xlu0 %2588
        %v2590 = vsel %vm863, %v2585, %v2587
        %v2591 = vsel %vm863, %v2587, %v2589
        %2594 = vst [vmem:[#allocation3 + $0x10] sm:$0xc] %v2590
        %2595 = vst [vmem:[#allocation3 + $0x18] sm:$0xc] %v2591
        %v2596 = vld [vmem:[#allocation2] sm:$0x3f]
        %v2597 = vld [vmem:[%s871] sm:$0x3]
        %v2599 = vperm.slane %v2597, 0
        %v2600 = vperm.slane %v2597, 1
        %v2601 = vrot.slane %v2600, 6
        %v2602 = vsel %vm671, %v2599, %v2601
        %2603 = vrot.lane.b32.xlu0 %v2602, 32
        %v2604 = vpop.permute.xlu0 %2603
        %v2605 = vrot.slane %v2604, 6
        %v2606 = vsel %vm881, %v2605, %v2604
        %v2608 = vmul.f32 %v2596, %v2606
        %s2610 = scalar_lea.vmem [#allocation1], 2
        %2611 = vst [vmem:[%s2610] ss:$4 sm:$0xff] %v2608
        %v2612 = vld.sshfl [vmem:[#allocation1] sm:$0xff pattern:$0x73625140]
        %v2613 = vld.sshfl [vmem:[#allocation1 + $0x8] sm:$0xff pattern:$0x73625140]
        %v2614 = vld.sshfl [vmem:[#allocation1 + $0x10] sm:$0xff pattern:$0x73625140]
        %2615 = vrot.lane.b32.xlu0 %v2612, 96
        %v2616 = vpop.permute.xlu0 %2615
        %2617 = vrot.lane.b32.xlu0 %v2613, 96
        %v2618 = vpop.permute.xlu0 %2617
        %2619 = vrot.lane.b32.xlu0 %v2614, 96
        %v2620 = vpop.permute.xlu0 %2619
        %v2621 = vsel %vm897, %v2616, %v2618
        %v2622 = vsel %vm897, %v2618, %v2620
        %2625 = vst [vmem:[#allocation3 + $0x10] sm:$0x30] %v2621
        %2626 = vst [vmem:[#allocation3 + $0x18] sm:$0x30] %v2622
        %v2627 = vld [vmem:[#allocation2] sm:$0x3f]
        %v2628 = vld [vmem:[%s905] sm:$0x3]
        %v2630 = vperm.slane %v2628, 0
        %v2631 = vperm.slane %v2628, 1
        %v2632 = vrot.slane %v2631, 6
        %v2633 = vsel %vm671, %v2630, %v2632
        %2634 = vrot.lane.b32.xlu0 %v2633, 33
        %v2635 = vpop.permute.xlu0 %2634
        %v2636 = vrot.slane %v2635, 6
        %v2637 = vsel %vm915, %v2636, %v2635
        %v2639 = vmul.f32 %v2627, %v2637
        %s2641 = scalar_lea.vmem [#allocation1], 3
        %2642 = vst [vmem:[%s2641] ss:$4 sm:$0xff] %v2639
        %v2643 = vld.sshfl [vmem:[#allocation1] sm:$0xff pattern:$0x73625140]
        %v2644 = vld.sshfl [vmem:[#allocation1 + $0x8] sm:$0xff pattern:$0x73625140]
        %v2645 = vld.sshfl [vmem:[#allocation1 + $0x10] sm:$0xff pattern:$0x73625140]
        %2646 = vrot.lane.b32.xlu0 %v2643, 95
        %v2647 = vpop.permute.xlu0 %2646
        %2648 = vrot.lane.b32.xlu0 %v2644, 95
        %v2649 = vpop.permute.xlu0 %2648
        %2650 = vrot.lane.b32.xlu0 %v2645, 95
        %v2651 = vpop.permute.xlu0 %2650
        %v2652 = vsel %vm931, %v2647, %v2649
        %v2653 = vsel %vm931, %v2649, %v2651
        %2656 = vst [vmem:[#allocation3 + $0x10] sm:$0xc0] %v2652
        %2657 = vst [vmem:[#allocation3 + $0x18] sm:$0xc0] %v2653
        %v2658 = vld [vmem:[#allocation2] sm:$0x3f]
        %v2659 = vld [vmem:[%s939] sm:$0x3]
        %v2661 = vperm.slane %v2659, 0
        %v2662 = vperm.slane %v2659, 1
        %v2663 = vrot.slane %v2662, 6
        %v2664 = vsel %vm671, %v2661, %v2663
        %2665 = vrot.lane.b32.xlu0 %v2664, 34
        %v2666 = vpop.permute.xlu0 %2665
        %v2667 = vrot.slane %v2666, 6
        %v2668 = vsel %vm949, %v2667, %v2666
        %v2670 = vmul.f32 %v2658, %v2668
        %2672 = vst [vmem:[#allocation1] ss:$4 sm:$0xff] %v2670
        %v2673 = vld.sshfl [vmem:[#allocation1] sm:$0xff pattern:$0x73625140]
        %v2674 = vld.sshfl [vmem:[#allocation1 + $0x8] sm:$0xff pattern:$0x73625140]
        %v2675 = vld.sshfl [vmem:[#allocation1 + $0x10] sm:$0xff pattern:$0x73625140]
        %2676 = vrot.lane.b32.xlu0 %v2673, 94
        %v2677 = vpop.permute.xlu0 %2676
        %2678 = vrot.lane.b32.xlu0 %v2674, 94
        %v2679 = vpop.permute.xlu0 %2678
        %2680 = vrot.lane.b32.xlu0 %v2675, 94
        %v2681 = vpop.permute.xlu0 %2680
        %v2682 = vsel %vm964, %v2677, %v2679
        %v2683 = vsel %vm964, %v2679, %v2681
        %2686 = vst [vmem:[#allocation3 + $0x20] sm:$0x3] %v2682
        %2687 = vst [vmem:[#allocation3 + $0x28] sm:$0x3] %v2683
        %v2688 = vld [vmem:[%s14] sm:$0x3]
        %v2689 = vld [vmem:[#allocation3] sm:$0xff]
        %v2690 = vld [vmem:[#allocation3 + $0x8] sm:$0xff]
        %v2691 = vld [vmem:[#allocation3 + $0x10] sm:$0xff]
        %v2692 = vld [vmem:[#allocation3 + $0x18] sm:$0xff]
        %v2693 = vld [vmem:[#allocation3 + $0x20] sm:$0x3]
        %v2694 = vld [vmem:[#allocation3 + $0x28] sm:$0x3]
        %v2695 = vld [vmem:[%s15] sm:$0x3]
        %2697 = vset.pattern.permute.xlu0 0
        %2698 = vperm.xlu0 %2697, %v2695
        %v2699 = vpop.permute.xlu0 %2698
        %v2702 = vsel %vm847, %v2688, 0
        %v2705 = vsel %vm671, %v2693, 0
        %v2708 = vsel %vm671, %v2694, 0
        %2710 = vmatpush.msra.mxu0 0.0
        %2711 = vmatpush.msra.mxu0 0.0
        %2712 = vmatpush.msra.mxu0 0.0
        %2713 = vmatpush.msra.mxu0 0.0
        %2714 = vmatpush.msra.mxu0 0.0
        %2715 = vmatpush.msra.mxu0 0.0
        %2716 = vmatpush.msra.mxu0 0.0
        %2717 = vmatpush.msra.mxu0 0.0
        %2718 = vmatpush.msra.mxu0 0.0
        %2719 = vmatpush.msra.mxu0 0.0
        %2720 = vmatpush.msra.mxu0 0.0
        %2721 = vmatpush.msra.mxu0 0.0
        %2722 = vmatpush.msra.mxu0 0.0
        %2723 = vmatpush.msra.mxu0 %v2705
        %2724 = vmatpush.msra.mxu0 %v2691
        %2725 = vmatpush.msra.mxu0 %v2689
        %2726 = vmatmul.f32.gmra.mxu0 %v2702
        %v2727 = vpop.f32.mrf.mxu0
        %v2728 = vadd.f32 %v2699, %v2727
        %2729 = vdwg.mxu0
        %2730 = vmatpush.msra.mxu0 0.0
        %2731 = vmatpush.msra.mxu0 0.0
        %2732 = vmatpush.msra.mxu0 0.0
        %2733 = vmatpush.msra.mxu0 0.0
        %2734 = vmatpush.msra.mxu0 0.0
        %2735 = vmatpush.msra.mxu0 0.0
        %2736 = vmatpush.msra.mxu0 0.0
        %2737 = vmatpush.msra.mxu0 0.0
        %2738 = vmatpush.msra.mxu0 0.0
        %2739 = vmatpush.msra.mxu0 0.0
        %2740 = vmatpush.msra.mxu0 0.0
        %2741 = vmatpush.msra.mxu0 0.0
        %2742 = vmatpush.msra.mxu0 0.0
        %2743 = vmatpush.msra.mxu0 %v2708
        %2744 = vmatpush.msra.mxu0 %v2692
        %2745 = vmatpush.msra.mxu0 %v2690
        %2746 = vmatmul.f32.gmra.mxu0 %v2702
        %v2747 = vpop.f32.mrf.mxu0
        %v2748 = vadd.f32 %v2699, %v2747
        %2749 = vdwg.mxu0
        %v2750 = vmax.f32 %v2728, 0.0
        %v2751 = vmax.f32 %v2748, 0.0
        %v2752 = vld [vmem:[%s16] sm:$0xf]
        %v2753 = vld [vmem:[%s17] sm:$0xf]
        %v2755 = vsel %vm747, %v2753, 0
        %v2758 = vsel %vm671, %v2750, 0
        %v2761 = vsel %vm671, %v2751, 0
        %2763 = vmatpush.msra.mxu0 0.0
        %2764 = vmatpush.msra.mxu0 0.0
        %2765 = vmatpush.msra.mxu0 0.0
        %2766 = vmatpush.msra.mxu0 0.0
        %2767 = vmatpush.msra.mxu0 0.0
        %2768 = vmatpush.msra.mxu0 0.0
        %2769 = vmatpush.msra.mxu0 0.0
        %2770 = vmatpush.msra.mxu0 0.0
        %2771 = vmatpush.msra.mxu0 0.0
        %2772 = vmatpush.msra.mxu0 0.0
        %2773 = vmatpush.msra.mxu0 0.0
        %2774 = vmatpush.msra.mxu0 0.0
        %2775 = vmatpush.msra.mxu0 0.0
        %2776 = vmatpush.msra.mxu0 0.0
        %2777 = vmatpush.msra.mxu0 0.0
        %2778 = vmatpush.msra.mxu0 %v2758
        %2779 = vmatmul.f32.gmra.mxu0 %v2755
        %v2780 = vpop.f32.mrf.mxu0
        %v2781 = vadd.f32 0.0, %v2780
        %2782 = vdwg.mxu0
        %2783 = vmatpush.msra.mxu0 0.0
        %2784 = vmatpush.msra.mxu0 0.0
        %2785 = vmatpush.msra.mxu0 0.0
        %2786 = vmatpush.msra.mxu0 0.0
        %2787 = vmatpush.msra.mxu0 0.0
        %2788 = vmatpush.msra.mxu0 0.0
        %2789 = vmatpush.msra.mxu0 0.0
        %2790 = vmatpush.msra.mxu0 0.0
        %2791 = vmatpush.msra.mxu0 0.0
        %2792 = vmatpush.msra.mxu0 0.0
        %2793 = vmatpush.msra.mxu0 0.0
        %2794 = vmatpush.msra.mxu0 0.0
        %2795 = vmatpush.msra.mxu0 0.0
        %2796 = vmatpush.msra.mxu0 0.0
        %2797 = vmatpush.msra.mxu0 0.0
        %2798 = vmatpush.msra.mxu0 %v2761
        %2799 = vmatmul.f32.gmra.mxu0 %v2755
        %v2800 = vpop.f32.mrf.mxu0
        %v2801 = vadd.f32 0.0, %v2800
        %2802 = vdwg.mxu0
        %v2804 = vsel %vm747, %v2752, 0
        %v2807 = vsel %vm671, %v1033, 0
        %v2810 = vsel %vm671, %v1034, 0
        %2812 = vmatpush.msra.mxu0 0.0
        %2813 = vmatpush.msra.mxu0 0.0
        %2814 = vmatpush.msra.mxu0 0.0
        %2815 = vmatpush.msra.mxu0 0.0
        %2816 = vmatpush.msra.mxu0 0.0
        %2817 = vmatpush.msra.mxu0 0.0
        %2818 = vmatpush.msra.mxu0 0.0
        %2819 = vmatpush.msra.mxu0 0.0
        %2820 = vmatpush.msra.mxu0 0.0
        %2821 = vmatpush.msra.mxu0 0.0
        %2822 = vmatpush.msra.mxu0 0.0
        %2823 = vmatpush.msra.mxu0 0.0
        %2824 = vmatpush.msra.mxu0 0.0
        %2825 = vmatpush.msra.mxu0 0.0
        %2826 = vmatpush.msra.mxu0 0.0
        %2827 = vmatpush.msra.mxu0 %v2807
        %2828 = vmatmul.f32.gmra.mxu0 %v2804
        %v2829 = vpop.f32.mrf.mxu0
        %v2830 = vadd.f32 %v2781, %v2829
        %2831 = vdwg.mxu0
        %2832 = vmatpush.msra.mxu0 0.0
        %2833 = vmatpush.msra.mxu0 0.0
        %2834 = vmatpush.msra.mxu0 0.0
        %2835 = vmatpush.msra.mxu0 0.0
        %2836 = vmatpush.msra.mxu0 0.0
        %2837 = vmatpush.msra.mxu0 0.0
        %2838 = vmatpush.msra.mxu0 0.0
        %2839 = vmatpush.msra.mxu0 0.0
        %2840 = vmatpush.msra.mxu0 0.0
        %2841 = vmatpush.msra.mxu0 0.0
        %2842 = vmatpush.msra.mxu0 0.0
        %2843 = vmatpush.msra.mxu0 0.0
        %2844 = vmatpush.msra.mxu0 0.0
        %2845 = vmatpush.msra.mxu0 0.0
        %2846 = vmatpush.msra.mxu0 0.0
        %2847 = vmatpush.msra.mxu0 %v2810
        %2848 = vmatmul.f32.gmra.mxu0 %v2804
        %v2849 = vpop.f32.mrf.mxu0
        %v2850 = vadd.f32 %v2801, %v2849
        %2851 = vdwg.mxu0
        %v2852 = vld [vmem:[%s18] sm:$0xf]
        %2854 = vset.pattern.permute.xlu0 0
        %2855 = vperm.xlu0 %2854, %v2852
        %v2856 = vpop.permute.xlu0 %2855
        %v2858 = vadd.f32 %v2830, %v2856
        %v2859 = vadd.f32 %v2850, %v2856
        %2860 = vst [vmem:[#allocation1] ss:$2 sm:$0xff] %v605
        %v2861 = vld.sshfl [vmem:[#allocation1] sm:$0xff pattern:$0x75316420]
        %v2862 = vld.sshfl [vmem:[#allocation1 + $0x8] sm:$0xff pattern:$0x75316420]
        %v2865 = vadd.f32 %v2858, %v2861
        %v2866 = vadd.f32 %v2859, %v2862
        %v2867 = vmax.f32 %v2865, 0.0
        %v2868 = vmax.f32 %v2866, 0.0
        %v2871 = vrot.slane %v2868, 4
        %v2872 = vsel %vm621, %v2867, %v2871
        %2874 = vst [vmem:[%s595] sm:$0xff] %v2872
        %s2875 = sand.u32 %s445, 1
        %s2876 = scalar_lea.sflag [#allocation5], %s2875
        %s2877 = sand.u32 %s445, 1
        %s2878 = smul.addr %s2877, 8
        %s2879 = scalar_lea.vmem [#allocation4], %s2878
        // Predicated region
        $region97: #{tpu_custom_call.1} parent=95 // pred_check
          %p2880 = pneg %p455
        $region98: #{tpu_custom_call.1} parent=95 // pred_check_branch
          %2882 = sbr.rel (%p2880) target = $region100
        $region99: #{tpu_custom_call.1} parent=95 // pred_region
          %2884 = vsyncadd %s2876, 0
          %s2885 = smul.addr %s33, 2
          %s2886 = smul.addr %s2885, 4
          %s2887 = scalar_lea.hbm %s19, %s2886
          %s2889 = sshll.u32 %s2879, 4
          %s2890 = int_to_ptr.vmem [resolvable:$true] %s2889
          %s2891 = sshll.u32 %s2887, 4
          %s2892 = int_to_ptr.hbm [resolvable:$true] %s2891
          %2894 = dma.vmem_to_hbm [thread:$0]  %s2890, 128, %s2892, %s2876
        $region100: #{tpu_custom_call.1} parent=95 // pred_fallthru
          _
      $region96: #{tpu_custom_call.1} parent=5 // pred_fallthru
        _
      %p2895 = scmp.le.s32.totalorder 2, %s28
      // Predicated region
      $region101: #{tpu_custom_call.1} parent=5 // pred_check
        %p2896 = pneg %p2895
      $region102: #{tpu_custom_call.1} parent=5 // pred_check_branch
        %2898 = sbr.rel (%p2896) target = $region104
      $region103: #{tpu_custom_call.1} parent=5 // pred_region
        %s2899 = ssub.s32 %s28, 2
        // Predicated region
        $region105: #{tpu_custom_call.1} parent=103 // pred_check
          %p2900 = pneg %p461
        $region106: #{tpu_custom_call.1} parent=103 // pred_check_branch
          %2902 = sbr.rel (%p2900) target = $region108
        $region107: #{tpu_custom_call.1} parent=103 // pred_region
          %s2903 = sand.u32 %s446, 1
          %s2904 = scalar_lea.sflag [#allocation5], %s2903
          %s2905 = sand.u32 %s446, 1
          %s2906 = smul.addr %s2905, 8
          %s2907 = scalar_lea.vmem [#allocation4], %s2906
          %2909 = dma.done %s2904, 128
        $region108: #{tpu_custom_call.1} parent=103 // pred_fallthru
          _
      $region104: #{tpu_custom_call.1} parent=5 // pred_fallthru
        _
    $region6: #{tpu_custom_call.1} parent=1 // loop_footer
      %s32 = sadd.s32 1, %s28
    $region7: #{tpu_custom_call.1} parent=1 // loop_footer_branch
      %27 = sbr.rel target = $region3
    $region8: #{tpu_custom_call.1} parent=1 // loop_exit
      _
    %2910 = vsyncpa [#allocation5], 1
    %s2911 = scalar_lea.sflag [#allocation5], 1
    %2912 = vsyncpa %s2911, 1

</llo_original>
